<compile_context>
chip_gen: v5e
topology: v5e:2x2
jax: 0.10.0
libtpu: 0.0.40
codegen_flags: <defaults>
</compile_context>

<pallas_src>
import math
from functools import partial

import jax
import jax.numpy as jnp
from jax.experimental import pallas as pl
from jax.experimental.pallas import tpu as pltpu

EPS = 1e-5  # LayerNorm eps


# ----------------------------- in-kernel helpers -----------------------------

def _layernorm_cm(x, gamma, beta):
    """LayerNorm over the channel (sublane) axis of a (C, N) tile; gamma/beta: (C, 1)."""
    mean = jnp.mean(x, axis=0, keepdims=True)
    var = jnp.mean(jnp.square(x - mean), axis=0, keepdims=True)
    return (x - mean) * jax.lax.rsqrt(var + EPS) * gamma + beta


# ------------------------------- the kernel ----------------------------------

def _decoder_layer_kernel(num_heads,
                          q_ref, qpos_ref, kpe_ref, v_ref,
                          sa_w_ref, sa_b_ref, sa_wo_ref, sa_bo_ref,
                          ca_w_ref, ca_b_ref, ca_wo_ref, ca_bo_ref,
                          w1_ref, b1_ref, w2_ref, b2_ref,
                          ln_g_ref, ln_b_ref,
                          out_ref,
                          tgt_s, qh_s, m_s, l_s, acc_s):
    """One PETRDecoderLayer for one batch element, channel-major (C, N) tiles.

    grid = (batch ["parallel"], Nk-tile ["arbitrary"]).
    t == 0      : self-attention + LN1, cross-attn Q projection, accumulator init.
    every t     : online-softmax update with one (C, tk) tile of K_pe / V.
    t == last   : finalize cross-attention, LN2, FFN (+residual), LN3, write output.
    """
    C, Nq = q_ref.shape
    tk = kpe_ref.shape[1]
    H = num_heads
    hd = C // H
    bf16 = jnp.bfloat16

    t = pl.program_id(1)
    nt = pl.num_programs(1)

    # ---------------------- t == 0 : self-attention + init ----------------------
    @pl.when(t == 0)
    def _init():
        q = q_ref[...]            # (C, Nq) f32
        qpos = qpos_ref[...]      # (C, Nq) f32

        # --- self attention: query = key = q + query_pos, value = q ---
        qpe = q + qpos
        qpe_b = qpe.astype(bf16)
        # fused Q+K projection (single (2C,C) x (C,Nq) matmul); scale already folded
        # into the Q rows of sa_w / sa_b at parameter-prep time.
        qk = jnp.dot(sa_w_ref[0:2 * C, :], qpe_b,
                     preferred_element_type=jnp.float32) + sa_b_ref[0:2 * C, :]
        v_p = jnp.dot(sa_w_ref[2 * C:3 * C, :], q.astype(bf16),
                      preferred_element_type=jnp.float32) + sa_b_ref[2 * C:3 * C, :]

        # head split along the channel (sublane) axis -> batched heads.
        qh = jnp.transpose(qk[0:C, :].reshape(H, hd, Nq), (0, 2, 1)).astype(bf16)  # (H,Nq,hd)
        kh = qk[C:2 * C, :].reshape(H, hd, Nq).astype(bf16)                        # (H,hd,Nq)
        vh = v_p.reshape(H, hd, Nq).astype(bf16)                                   # (H,hd,Nq)

        s = jnp.einsum('hqd,hdk->hqk', qh, kh,
                       preferred_element_type=jnp.float32)                         # (H,Nq,Nq)
        s = s - jnp.max(s, axis=-1, keepdims=True)
        p = jnp.exp(s)
        p = p * pl.reciprocal(jnp.sum(p, axis=-1, keepdims=True), approx=True)
        o = jnp.einsum('hqk,hdk->hqd', p.astype(bf16), vh,
                       preferred_element_type=jnp.float32)                         # (H,Nq,hd)
        attn = jnp.transpose(o, (0, 2, 1)).reshape(C, Nq)                          # (C,Nq)
        sa_out = jnp.dot(sa_wo_ref[...], attn.astype(bf16),
                         preferred_element_type=jnp.float32) + sa_bo_ref[...]

        tgt = _layernorm_cm(q + sa_out, ln_g_ref[:, 0:1], ln_b_ref[:, 0:1])
        tgt_s[...] = tgt

        # --- cross attention: Q projection (scale folded) + online-softmax init ---
        qpe_c = (tgt + qpos).astype(bf16)
        q_c = jnp.dot(ca_w_ref[0:C, :], qpe_c,
                      preferred_element_type=jnp.float32) + ca_b_ref[0:C, :]       # (C,Nq)
        qh_s[...] = jnp.transpose(q_c.reshape(H, hd, Nq), (0, 2, 1)).astype(bf16)  # (H,Nq,hd)

        m_s[...] = jnp.full_like(m_s, -jnp.inf)
        l_s[...] = jnp.zeros_like(l_s)
        acc_s[...] = jnp.zeros_like(acc_s)

    # ------------------ every t : one K/V tile, online softmax ------------------
    kpe_t = kpe_ref[...]    # (C, tk) bf16   (k + key_pos, hoisted in wrapper)
    v_t = v_ref[...]        # (C, tk) bf16

    k_p = jnp.dot(ca_w_ref[C:2 * C, :], kpe_t,
                  preferred_element_type=jnp.float32) + ca_b_ref[C:2 * C, :]       # (C,tk)
    v_p = jnp.dot(ca_w_ref[2 * C:3 * C, :], v_t,
                  preferred_element_type=jnp.float32) + ca_b_ref[2 * C:3 * C, :]   # (C,tk)
    kh = k_p.reshape(H, hd, tk).astype(bf16)                                       # (H,hd,tk)
    vh = v_p.reshape(H, hd, tk).astype(bf16)                                       # (H,hd,tk)

    s = jnp.einsum('hqd,hdk->hqk', qh_s[...], kh,
                   preferred_element_type=jnp.float32)                             # (H,Nq,tk)
    m_prev = m_s[...]
    m_new = jnp.maximum(m_prev, jnp.max(s, axis=-1, keepdims=True))
    alpha = jnp.exp(m_prev - m_new)
    p = jnp.exp(s - m_new)
    l_s[...] = alpha * l_s[...] + jnp.sum(p, axis=-1, keepdims=True)
    acc_s[...] = alpha * acc_s[...] + jnp.einsum('hqk,hdk->hqd', p.astype(bf16), vh,
                                                 preferred_element_type=jnp.float32)
    m_s[...] = m_new

    # ---------------- t == last : finalize, FFN, write output -------------------
    @pl.when(t == nt - 1)
    def _finalize():
        inv_l = pl.reciprocal(l_s[...], approx=True)                               # (H,Nq,1)
        attn = jnp.transpose(acc_s[...] * inv_l, (0, 2, 1)).reshape(C, Nq)         # (C,Nq)
        ca_out = jnp.dot(ca_wo_ref[...], attn.astype(bf16),
                         preferred_element_type=jnp.float32) + ca_bo_ref[...]

        tgt = _layernorm_cm(tgt_s[...] + ca_out, ln_g_ref[:, 1:2], ln_b_ref[:, 1:2])

        # FFN: Linear -> ReLU -> Linear, residual, LN (dropout = identity).
        hmid = jnp.maximum(
            jnp.dot(w1_ref[...], tgt.astype(bf16),
                    preferred_element_type=jnp.float32) + b1_ref[...], 0.0)        # (F,Nq)
        ffn = jnp.dot(w2_ref[...], hmid.astype(bf16),
                      preferred_element_type=jnp.float32) + b2_ref[...]            # (C,Nq)
        tgt = _layernorm_cm(tgt + ffn, ln_g_ref[:, 2:3], ln_b_ref[:, 2:3])

        out_ref[...] = tgt.astype(out_ref.dtype)


# ------------------------------ wrapper / glue --------------------------------

def _pick_kv_tile(Nk):
    for cand in (512, 256, 128):
        if Nk % cand == 0:
            return cand
    return Nk  # small / unaligned Nk: single tile


def _make_layer_call(B, Nq, Nk, C, F, num_heads, tk):
    nkt = Nk // tk
    hd = C // num_heads

    def qblock():
        return pl.BlockSpec((None, C, Nq), lambda b, t: (b, 0, 0))

    def kblock():
        return pl.BlockSpec((None, C, tk), lambda b, t: (b, 0, t))

    def full(shape):
        return pl.BlockSpec(shape, lambda b, t, _nd=len(shape): (0,) * _nd)

    in_specs = [
        qblock(),                        # query       (B, C, Nq) f32
        qblock(),                        # query_pos   (B, C, Nq) f32
        kblock(),                        # kpe = k+key_pos  (B, C, Nk) bf16
        kblock(),                        # value            (B, C, Nk) bf16
        full((3 * C, C)), full((3 * C, 1)), full((C, C)), full((C, 1)),   # self-attn
        full((3 * C, C)), full((3 * C, 1)), full((C, C)), full((C, 1)),   # cross-attn
        full((F, C)), full((F, 1)), full((C, F)), full((C, 1)),           # FFN
        full((C, 3)), full((C, 3)),                                        # LN gamma/beta
    ]
    # NOTE: weight BlockSpecs have constant block indices, so Pallas fetches them once
    # per pallas_call (no re-DMA per grid step).
    scratch_shapes = [
        pltpu.VMEM((C, Nq), jnp.float32),                 # tgt after self-attn + LN1
        pltpu.VMEM((num_heads, Nq, hd), jnp.bfloat16),    # cross-attn Q heads
        pltpu.VMEM((num_heads, Nq, 1), jnp.float32),      # running max
        pltpu.VMEM((num_heads, Nq, 1), jnp.float32),      # running denom
        pltpu.VMEM((num_heads, Nq, hd), jnp.float32),     # output accumulator
    ]
    return pl.pallas_call(
        partial(_decoder_layer_kernel, num_heads),
        out_shape=jax.ShapeDtypeStruct((B, C, Nq), jnp.float32),
        grid=(B, nkt),
        in_specs=in_specs,
        out_specs=pl.BlockSpec((None, C, Nq), lambda b, t: (b, 0, 0)),
        scratch_shapes=scratch_shapes,
        compiler_params=pltpu.CompilerParams(
            # batch axis is independent -> shard across TensorCores on v7x;
            # Nk-tile axis carries the online-softmax accumulator -> arbitrary.
            dimension_semantics=("parallel", "arbitrary"),
            vmem_limit_bytes=48 * 1024 * 1024,
        ),
    )


def init_params(key, num_layer, embed_dims, feedforward_channels):
    """Random parameters in native PyTorch layouts ((out, in) weights)."""
    C, F = embed_dims, feedforward_channels
    params = []
    for _ in range(num_layer):
        key, *ks = jax.random.split(key, 15)
        s = 0.05
        layer = {
            "sa_in_w": s * jax.random.normal(ks[0], (3 * C, C), jnp.float32),
            "sa_in_b": s * jax.random.normal(ks[1], (3 * C,), jnp.float32),
            "sa_out_w": s * jax.random.normal(ks[2], (C, C), jnp.float32),
            "sa_out_b": s * jax.random.normal(ks[3], (C,), jnp.float32),
            "ca_in_w": s * jax.random.normal(ks[4], (3 * C, C), jnp.float32),
            "ca_in_b": s * jax.random.normal(ks[5], (3 * C,), jnp.float32),
            "ca_out_w": s * jax.random.normal(ks[6], (C, C), jnp.float32),
            "ca_out_b": s * jax.random.normal(ks[7], (C,), jnp.float32),
            "ffn_w1": s * jax.random.normal(ks[8], (F, C), jnp.float32),
            "ffn_b1": s * jax.random.normal(ks[9], (F,), jnp.float32),
            "ffn_w2": s * jax.random.normal(ks[10], (C, F), jnp.float32),
            "ffn_b2": s * jax.random.normal(ks[11], (C,), jnp.float32),
            "ln_g": 1.0 + 0.01 * jax.random.normal(ks[12], (3, C), jnp.float32),
            "ln_b": 0.01 * jax.random.normal(ks[13], (3, C), jnp.float32),
        }
        params.append(layer)
    return params


def _prepare_layer(p, num_heads):
    """Fold 1/sqrt(hd) into Q projections, cast big weights to bf16, reshape biases."""
    C = p["sa_out_w"].shape[0]
    hd = C // num_heads
    scale = 1.0 / math.sqrt(hd)
    bf = jnp.bfloat16

    def fold(w_in, b_in):
        w = w_in.at[0:C, :].multiply(scale)
        b = b_in.at[0:C].multiply(scale)
        return w, b

    sa_w, sa_b = fold(p["sa_in_w"], p["sa_in_b"])
    ca_w, ca_b = fold(p["ca_in_w"], p["ca_in_b"])
    col = lambda x: x.reshape(-1, 1).astype(jnp.float32)
    return (
        sa_w.astype(bf), col(sa_b), p["sa_out_w"].astype(bf), col(p["sa_out_b"]),
        ca_w.astype(bf), col(ca_b), p["ca_out_w"].astype(bf), col(p["ca_out_b"]),
        p["ffn_w1"].astype(bf), col(p["ffn_b1"]),
        p["ffn_w2"].astype(bf), col(p["ffn_b2"]),
        p["ln_g"].T.astype(jnp.float32), p["ln_b"].T.astype(jnp.float32),   # (C, 3)
    )


def petr_decoder(query, key, value, query_pos, key_pos, params, num_heads):
    """PETRDecoder.forward: returns list of per-layer outputs in NCHW [B, C, Nq, 1]."""
    # NCHW [B, C, N, 1] -> channel-major [B, C, N]: squeeze only, no transposes.
    q = query[..., 0].astype(jnp.float32)
    qp = query_pos[..., 0].astype(jnp.float32)
    kpe = (key[..., 0] + key_pos[..., 0]).astype(jnp.bfloat16)  # layer-invariant, hoisted
    v = value[..., 0].astype(jnp.bfloat16)

    B, C, Nq = q.shape
    Nk = kpe.shape[-1]
    F = params[0]["ffn_w1"].shape[0]
    assert C % num_heads == 0
    tk = _pick_kv_tile(Nk)

    layer_call = _make_layer_call(B, Nq, Nk, C, F, num_heads, tk)
    prepared = [_prepare_layer(p, num_heads) for p in params]

    outs = []
    x = q
    for lp in prepared:
        x = layer_call(x, qp, kpe, v, *lp)
        outs.append(x[..., None])   # back to [B, C, Nq, 1] — expand_dims only
    return outs


def petr_transformer(feats, query_embed, pos_embed, params, num_heads):
    """PETRTransformer.forward: target = zeros_like(query_embed); run the decoder."""
    # TODO(synk): tgt_quant / dropout / FloatFunctional are eval-mode identities.
    target = jnp.zeros_like(query_embed)
    return petr_decoder(query=target, key=feats, value=feats,
                        query_pos=query_embed, key_pos=pos_embed,
                        params=params, num_heads=num_heads)


# ----------------------------------- main -------------------------------------

if __name__ == "__main__":
    # Small-but-consistent shapes: batch=2, embed_dims=64, heads=4 (head_dim=16),
    # feedforward=128, num_queries=32, num_keys=256 (2 x 128-wide K/V tiles), 2 layers.
    B, C, Nq, Nk = 2, 64, 32, 256
    NUM_HEADS, FFN_CH, NUM_LAYER = 4, 128, 2

    root = jax.random.PRNGKey(0)
    k_feat, k_query, k_pos, k_par = jax.random.split(root, 4)

    # PyTorch NCHW layout: [B, C, N, 1]
    feats = jax.random.normal(k_feat, (B, C, Nk, 1), jnp.float32)
    query_embed = jax.random.normal(k_query, (B, C, Nq, 1), jnp.float32)
    pos_embed = jax.random.normal(k_pos, (B, C, Nk, 1), jnp.float32)

    params = init_params(k_par, NUM_LAYER, C, FFN_CH)

    outs = petr_transformer(feats, query_embed, pos_embed, params, NUM_HEADS)
    for o in outs:
        jax.block_until_ready(o)
    assert len(outs) == NUM_LAYER and outs[0].shape == (B, C, Nq, 1)
    assert all(bool(jnp.all(jnp.isfinite(o))) for o in outs)
    print("KERNEL_OK")
</pallas_src>

<mosaic_0001>
module attributes {stable_mosaic.version = 11 : i64} {
  func.func @_decoder_layer_kernel(%arg0: i32, %arg1: i32, %arg2: memref<1x64x32xf32, #tpu.memory_space<vmem>>, %arg3: memref<1x64x32xf32, #tpu.memory_space<vmem>>, %arg4: memref<1x64x256xbf16, #tpu.memory_space<vmem>>, %arg5: memref<1x64x256xbf16, #tpu.memory_space<vmem>>, %arg6: memref<192x64xbf16, #tpu.memory_space<vmem>>, %arg7: memref<192x1xf32, #tpu.memory_space<vmem>>, %arg8: memref<64x64xbf16, #tpu.memory_space<vmem>>, %arg9: memref<64x1xf32, #tpu.memory_space<vmem>>, %arg10: memref<192x64xbf16, #tpu.memory_space<vmem>>, %arg11: memref<192x1xf32, #tpu.memory_space<vmem>>, %arg12: memref<64x64xbf16, #tpu.memory_space<vmem>>, %arg13: memref<64x1xf32, #tpu.memory_space<vmem>>, %arg14: memref<128x64xbf16, #tpu.memory_space<vmem>>, %arg15: memref<128x1xf32, #tpu.memory_space<vmem>>, %arg16: memref<64x128xbf16, #tpu.memory_space<vmem>>, %arg17: memref<64x1xf32, #tpu.memory_space<vmem>>, %arg18: memref<64x3xf32, #tpu.memory_space<vmem>>, %arg19: memref<64x3xf32, #tpu.memory_space<vmem>>, %arg20: memref<1x64x32xf32, #tpu.memory_space<vmem>>, %arg21: memref<64x32xf32, #tpu.memory_space<vmem>>, %arg22: memref<4x32x16xbf16, #tpu.memory_space<vmem>>, %arg23: memref<4x32x1xf32, #tpu.memory_space<vmem>>, %arg24: memref<4x32x1xf32, #tpu.memory_space<vmem>>, %arg25: memref<4x32x16xf32, #tpu.memory_space<vmem>>) attributes {dimension_semantics = [#tpu.dimension_semantics<parallel>, #tpu.dimension_semantics<arbitrary>], iteration_bounds = array<i64: 2, 1>, scalar_prefetch = 0 : i64, scratch_operands = 5 : i64, tpu.core_type = #tpu.core_type<tc>, window_params = [{transform_indices = @transform_0, window_bounds = array<i64: 1, 64, 32>}, {transform_indices = @transform_1, window_bounds = array<i64: 1, 64, 32>}, {transform_indices = @transform_2, window_bounds = array<i64: 1, 64, 256>}, {transform_indices = @transform_3, window_bounds = array<i64: 1, 64, 256>}, {pipeline_mode = #tpu.pipeline_mode<synchronous>, transform_indices = @transform_4, window_bounds = array<i64: 192, 64>}, {pipeline_mode = #tpu.pipeline_mode<synchronous>, transform_indices = @transform_5, window_bounds = array<i64: 192, 1>}, {pipeline_mode = #tpu.pipeline_mode<synchronous>, transform_indices = @transform_6, window_bounds = array<i64: 64, 64>}, {pipeline_mode = #tpu.pipeline_mode<synchronous>, transform_indices = @transform_7, window_bounds = array<i64: 64, 1>}, {pipeline_mode = #tpu.pipeline_mode<synchronous>, transform_indices = @transform_8, window_bounds = array<i64: 192, 64>}, {pipeline_mode = #tpu.pipeline_mode<synchronous>, transform_indices = @transform_9, window_bounds = array<i64: 192, 1>}, {pipeline_mode = #tpu.pipeline_mode<synchronous>, transform_indices = @transform_10, window_bounds = array<i64: 64, 64>}, {pipeline_mode = #tpu.pipeline_mode<synchronous>, transform_indices = @transform_11, window_bounds = array<i64: 64, 1>}, {pipeline_mode = #tpu.pipeline_mode<synchronous>, transform_indices = @transform_12, window_bounds = array<i64: 128, 64>}, {pipeline_mode = #tpu.pipeline_mode<synchronous>, transform_indices = @transform_13, window_bounds = array<i64: 128, 1>}, {pipeline_mode = #tpu.pipeline_mode<synchronous>, transform_indices = @transform_14, window_bounds = array<i64: 64, 128>}, {pipeline_mode = #tpu.pipeline_mode<synchronous>, transform_indices = @transform_15, window_bounds = array<i64: 64, 1>}, {pipeline_mode = #tpu.pipeline_mode<synchronous>, transform_indices = @transform_16, window_bounds = array<i64: 64, 3>}, {pipeline_mode = #tpu.pipeline_mode<synchronous>, transform_indices = @transform_17, window_bounds = array<i64: 64, 3>}, {transform_indices = @transform_18, window_bounds = array<i64: 1, 64, 32>}]} {
    %c0_i32 = arith.constant 0 : i32
    %0 = arith.cmpi eq, %arg1, %c0_i32 : i32
    %1 = arith.extui %0 : i1 to i32
    %c0_i32_0 = arith.constant 0 : i32
    %2 = arith.cmpi ne, %1, %c0_i32_0 : i32
    scf.if %2 {
      %c0_40 = arith.constant 0 : index
      %c0_41 = arith.constant 0 : index
      %c0_42 = arith.constant 0 : index
      %49 = vector.load %arg2[%c0_40, %c0_41, %c0_42] : memref<1x64x32xf32, #tpu.memory_space<vmem>>, vector<1x64x32xf32>
      %50 = vector.shape_cast %49 : vector<1x64x32xf32> to vector<64x32xf32>
      %c0_43 = arith.constant 0 : index
      %c0_44 = arith.constant 0 : index
      %c0_45 = arith.constant 0 : index
      %51 = vector.load %arg3[%c0_43, %c0_44, %c0_45] : memref<1x64x32xf32, #tpu.memory_space<vmem>>, vector<1x64x32xf32>
      %52 = vector.shape_cast %51 : vector<1x64x32xf32> to vector<64x32xf32>
      %53 = arith.addf %50, %52 : vector<64x32xf32>
      %54 = arith.truncf %53 : vector<64x32xf32> to vector<64x32xbf16>
      %c0_46 = arith.constant 0 : index
      %c0_47 = arith.constant 0 : index
      %55 = vector.load %arg6[%c0_46, %c0_47] : memref<192x64xbf16, #tpu.memory_space<vmem>>, vector<128x64xbf16>
      %cst_48 = arith.constant dense<0.000000e+00> : vector<128x32xf32>
      %56 = tpu.matmul %55, %54, %cst_48 {dimension_numbers = #tpu.dot_dimension_numbers<[1], [0], [0], [1], [0, 0, 1, 1], [], []>} : vector<128x64xbf16>, vector<64x32xbf16>, vector<128x32xf32> -> vector<128x32xf32>
      %c0_49 = arith.constant 0 : index
      %c0_50 = arith.constant 0 : index
      %57 = vector.load %arg7[%c0_49, %c0_50] : memref<192x1xf32, #tpu.memory_space<vmem>>, vector<128x1xf32>
      %58 = vector.broadcast %57 : vector<128x1xf32> to vector<128x32xf32>
      %59 = arith.addf %56, %58 : vector<128x32xf32>
      %c128_51 = arith.constant 128 : index
      %c0_52 = arith.constant 0 : index
      %60 = vector.load %arg6[%c128_51, %c0_52] : memref<192x64xbf16, #tpu.memory_space<vmem>>, vector<64x64xbf16>
      %61 = arith.truncf %50 : vector<64x32xf32> to vector<64x32xbf16>
      %cst_53 = arith.constant dense<0.000000e+00> : vector<64x32xf32>
      %62 = tpu.matmul %60, %61, %cst_53 {dimension_numbers = #tpu.dot_dimension_numbers<[1], [0], [0], [1], [0, 0, 1, 1], [], []>} : vector<64x64xbf16>, vector<64x32xbf16>, vector<64x32xf32> -> vector<64x32xf32>
      %c128_54 = arith.constant 128 : index
      %c0_55 = arith.constant 0 : index
      %63 = vector.load %arg7[%c128_54, %c0_55] : memref<192x1xf32, #tpu.memory_space<vmem>>, vector<64x1xf32>
      %64 = vector.broadcast %63 : vector<64x1xf32> to vector<64x32xf32>
      %65 = arith.addf %62, %64 : vector<64x32xf32>
      %66 = vector.extract_strided_slice %59 {offsets = [0, 0], sizes = [64, 32], strides = [1, 1]} : vector<128x32xf32> to vector<64x32xf32>
      %67 = vector.shape_cast %66 : vector<64x32xf32> to vector<4x16x32xf32>
      %68 = tpu.transpose %67, [0, 2, 1] : vector<4x16x32xf32> -> vector<4x32x16xf32>
      %69 = arith.truncf %68 : vector<4x32x16xf32> to vector<4x32x16xbf16>
      %70 = vector.extract_strided_slice %59 {offsets = [64, 0], sizes = [64, 32], strides = [1, 1]} : vector<128x32xf32> to vector<64x32xf32>
      %71 = vector.shape_cast %70 : vector<64x32xf32> to vector<4x16x32xf32>
      %72 = arith.truncf %71 : vector<4x16x32xf32> to vector<4x16x32xbf16>
      %73 = vector.shape_cast %65 : vector<64x32xf32> to vector<4x16x32xf32>
      %74 = arith.truncf %73 : vector<4x16x32xf32> to vector<4x16x32xbf16>
      "tpu.trace_start"() <{level = 10 : i32, message = "hqd,hdk->hqk"}> : () -> ()
      %cst_56 = arith.constant dense<0.000000e+00> : vector<4x32x32xf32>
      %75 = tpu.matmul %69, %72, %cst_56 {dimension_numbers = #tpu.dot_dimension_numbers<[2], [1], [1], [2], [0, 0, 0, 1, 1, 2], [0], [0]>} : vector<4x32x16xbf16>, vector<4x16x32xbf16>, vector<4x32x32xf32> -> vector<4x32x32xf32>
      "tpu.trace_stop"() : () -> ()
      %cst_57 = arith.constant dense<0xFF800000> : vector<4x32xf32>
      %76 = vector.multi_reduction <maximumf>, %75, %cst_57 [2] : vector<4x32x32xf32> to vector<4x32xf32>
      %77 = vector.shape_cast %76 : vector<4x32xf32> to vector<4x32x1xf32>
      %78 = vector.broadcast %77 : vector<4x32x1xf32> to vector<4x32x32xf32>
      %79 = arith.subf %75, %78 : vector<4x32x32xf32>
      %80 = math.exp %79 : vector<4x32x32xf32>
      %cst_58 = arith.constant dense<0.000000e+00> : vector<4x32xf32>
      %81 = vector.multi_reduction <add>, %80, %cst_58 [2] : vector<4x32x32xf32> to vector<4x32xf32>
      %82 = vector.shape_cast %81 : vector<4x32xf32> to vector<4x32x1xf32>
      %83 = tpu.reciprocal %82 {approx = true} : vector<4x32x1xf32> -> vector<4x32x1xf32>
      %84 = vector.broadcast %83 : vector<4x32x1xf32> to vector<4x32x32xf32>
      %85 = arith.mulf %80, %84 : vector<4x32x32xf32>
      %86 = arith.truncf %85 : vector<4x32x32xf32> to vector<4x32x32xbf16>
      "tpu.trace_start"() <{level = 10 : i32, message = "hqk,hdk->hqd"}> : () -> ()
      %cst_59 = arith.constant dense<0.000000e+00> : vector<4x32x16xf32>
      %87 = tpu.matmul %86, %74, %cst_59 {dimension_numbers = #tpu.dot_dimension_numbers<[2], [2], [1], [1], [0, 0, 0, 1, 1, 1], [0], [0]>} : vector<4x32x32xbf16>, vector<4x16x32xbf16>, vector<4x32x16xf32> -> vector<4x32x16xf32>
      "tpu.trace_stop"() : () -> ()
      %88 = tpu.transpose %87, [0, 2, 1] : vector<4x32x16xf32> -> vector<4x16x32xf32>
      %89 = vector.shape_cast %88 : vector<4x16x32xf32> to vector<64x32xf32>
      %c0_60 = arith.constant 0 : index
      %c0_61 = arith.constant 0 : index
      %90 = vector.load %arg8[%c0_60, %c0_61] : memref<64x64xbf16, #tpu.memory_space<vmem>>, vector<64x64xbf16>
      %91 = arith.truncf %89 : vector<64x32xf32> to vector<64x32xbf16>
      %cst_62 = arith.constant dense<0.000000e+00> : vector<64x32xf32>
      %92 = tpu.matmul %90, %91, %cst_62 {dimension_numbers = #tpu.dot_dimension_numbers<[1], [0], [0], [1], [0, 0, 1, 1], [], []>} : vector<64x64xbf16>, vector<64x32xbf16>, vector<64x32xf32> -> vector<64x32xf32>
      %c0_63 = arith.constant 0 : index
      %c0_64 = arith.constant 0 : index
      %93 = vector.load %arg9[%c0_63, %c0_64] : memref<64x1xf32, #tpu.memory_space<vmem>>, vector<64x1xf32>
      %94 = vector.broadcast %93 : vector<64x1xf32> to vector<64x32xf32>
      %95 = arith.addf %92, %94 : vector<64x32xf32>
      %96 = arith.addf %50, %95 : vector<64x32xf32>
      %c0_65 = arith.constant 0 : index
      %c0_66 = arith.constant 0 : index
      %97 = vector.load %arg18[%c0_65, %c0_66] : memref<64x3xf32, #tpu.memory_space<vmem>>, vector<64x1xf32>
      %c0_67 = arith.constant 0 : index
      %c0_68 = arith.constant 0 : index
      %98 = vector.load %arg19[%c0_67, %c0_68] : memref<64x3xf32, #tpu.memory_space<vmem>>, vector<64x1xf32>
      %cst_69 = arith.constant dense<0.000000e+00> : vector<32xf32>
      %99 = vector.multi_reduction <add>, %96, %cst_69 [0] : vector<64x32xf32> to vector<32xf32>
      %100 = vector.shape_cast %99 : vector<32xf32> to vector<1x32xf32>
      %cst_70 = arith.constant 6.400000e+01 : f32
      %101 = vector.broadcast %cst_70 : f32 to vector<1x32xf32>
      %102 = arith.divf %100, %101 : vector<1x32xf32>
      %103 = vector.broadcast %102 : vector<1x32xf32> to vector<64x32xf32>
      %104 = arith.subf %96, %103 : vector<64x32xf32>
      %105 = arith.mulf %104, %104 : vector<64x32xf32>
      %cst_71 = arith.constant dense<0.000000e+00> : vector<32xf32>
      %106 = vector.multi_reduction <add>, %105, %cst_71 [0] : vector<64x32xf32> to vector<32xf32>
      %107 = vector.shape_cast %106 : vector<32xf32> to vector<1x32xf32>
      %cst_72 = arith.constant 6.400000e+01 : f32
      %108 = vector.broadcast %cst_72 : f32 to vector<1x32xf32>
      %109 = arith.divf %107, %108 : vector<1x32xf32>
      %110 = vector.broadcast %102 : vector<1x32xf32> to vector<64x32xf32>
      %111 = arith.subf %96, %110 : vector<64x32xf32>
      %cst_73 = arith.constant 9.99999974E-6 : f32
      %112 = vector.broadcast %cst_73 : f32 to vector<1x32xf32>
      %113 = arith.addf %109, %112 : vector<1x32xf32>
      %114 = math.rsqrt %113 : vector<1x32xf32>
      %115 = vector.broadcast %114 : vector<1x32xf32> to vector<64x32xf32>
      %116 = arith.mulf %111, %115 : vector<64x32xf32>
      %117 = vector.broadcast %97 : vector<64x1xf32> to vector<64x32xf32>
      %118 = arith.mulf %116, %117 : vector<64x32xf32>
      %119 = vector.broadcast %98 : vector<64x1xf32> to vector<64x32xf32>
      %120 = arith.addf %118, %119 : vector<64x32xf32>
      %c0_74 = arith.constant 0 : index
      %c0_75 = arith.constant 0 : index
      %121 = vector.load %arg21[%c0_74, %c0_75] : memref<64x32xf32, #tpu.memory_space<vmem>>, vector<64x32xf32>
      tpu.vector_store %arg21[%c0_74, %c0_75], %120 {strides = array<i32>} : memref<64x32xf32, #tpu.memory_space<vmem>>, vector<64x32xf32>,
      %122 = arith.addf %120, %52 : vector<64x32xf32>
      %123 = arith.truncf %122 : vector<64x32xf32> to vector<64x32xbf16>
      %c0_76 = arith.constant 0 : index
      %c0_77 = arith.constant 0 : index
      %124 = vector.load %arg10[%c0_76, %c0_77] : memref<192x64xbf16, #tpu.memory_space<vmem>>, vector<64x64xbf16>
      %cst_78 = arith.constant dense<0.000000e+00> : vector<64x32xf32>
      %125 = tpu.matmul %124, %123, %cst_78 {dimension_numbers = #tpu.dot_dimension_numbers<[1], [0], [0], [1], [0, 0, 1, 1], [], []>} : vector<64x64xbf16>, vector<64x32xbf16>, vector<64x32xf32> -> vector<64x32xf32>
      %c0_79 = arith.constant 0 : index
      %c0_80 = arith.constant 0 : index
      %126 = vector.load %arg11[%c0_79, %c0_80] : memref<192x1xf32, #tpu.memory_space<vmem>>, vector<64x1xf32>
      %127 = vector.broadcast %126 : vector<64x1xf32> to vector<64x32xf32>
      %128 = arith.addf %125, %127 : vector<64x32xf32>
      %129 = vector.shape_cast %128 : vector<64x32xf32> to vector<4x16x32xf32>
      %130 = tpu.transpose %129, [0, 2, 1] : vector<4x16x32xf32> -> vector<4x32x16xf32>
      %131 = arith.truncf %130 : vector<4x32x16xf32> to vector<4x32x16xbf16>
      %c0_81 = arith.constant 0 : index
      %c0_82 = arith.constant 0 : index
      %c0_83 = arith.constant 0 : index
      %132 = vector.load %arg22[%c0_81, %c0_82, %c0_83] : memref<4x32x16xbf16, #tpu.memory_space<vmem>>, vector<4x32x16xbf16>
      tpu.vector_store %arg22[%c0_81, %c0_82, %c0_83], %131 {strides = array<i32>} : memref<4x32x16xbf16, #tpu.memory_space<vmem>>, vector<4x32x16xbf16>,
      %cst_84 = arith.constant 0xFF800000 : f32
      %133 = vector.broadcast %cst_84 : f32 to vector<4x32x1xf32>
      %c0_85 = arith.constant 0 : index
      %c0_86 = arith.constant 0 : index
      %c0_87 = arith.constant 0 : index
      %134 = vector.load %arg23[%c0_85, %c0_86, %c0_87] : memref<4x32x1xf32, #tpu.memory_space<vmem>>, vector<4x32x1xf32>
      tpu.vector_store %arg23[%c0_85, %c0_86, %c0_87], %133 {strides = array<i32>} : memref<4x32x1xf32, #tpu.memory_space<vmem>>, vector<4x32x1xf32>,
      %cst_88 = arith.constant 0.000000e+00 : f32
      %135 = vector.broadcast %cst_88 : f32 to vector<4x32x1xf32>
      %c0_89 = arith.constant 0 : index
      %c0_90 = arith.constant 0 : index
      %c0_91 = arith.constant 0 : index
      %136 = vector.load %arg24[%c0_89, %c0_90, %c0_91] : memref<4x32x1xf32, #tpu.memory_space<vmem>>, vector<4x32x1xf32>
      tpu.vector_store %arg24[%c0_89, %c0_90, %c0_91], %135 {strides = array<i32>} : memref<4x32x1xf32, #tpu.memory_space<vmem>>, vector<4x32x1xf32>,
      %cst_92 = arith.constant 0.000000e+00 : f32
      %137 = vector.broadcast %cst_92 : f32 to vector<4x32x16xf32>
      %c0_93 = arith.constant 0 : index
      %c0_94 = arith.constant 0 : index
      %c0_95 = arith.constant 0 : index
      %138 = vector.load %arg25[%c0_93, %c0_94, %c0_95] : memref<4x32x16xf32, #tpu.memory_space<vmem>>, vector<4x32x16xf32>
      tpu.vector_store %arg25[%c0_93, %c0_94, %c0_95], %137 {strides = array<i32>} : memref<4x32x16xf32, #tpu.memory_space<vmem>>, vector<4x32x16xf32>,
    } else {
    }
    %c0 = arith.constant 0 : index
    %c0_1 = arith.constant 0 : index
    %c0_2 = arith.constant 0 : index
    %3 = vector.load %arg4[%c0, %c0_1, %c0_2] : memref<1x64x256xbf16, #tpu.memory_space<vmem>>, vector<1x64x256xbf16>
    %4 = vector.shape_cast %3 : vector<1x64x256xbf16> to vector<64x256xbf16>
    %c0_3 = arith.constant 0 : index
    %c0_4 = arith.constant 0 : index
    %c0_5 = arith.constant 0 : index
    %5 = vector.load %arg5[%c0_3, %c0_4, %c0_5] : memref<1x64x256xbf16, #tpu.memory_space<vmem>>, vector<1x64x256xbf16>
    %6 = vector.shape_cast %5 : vector<1x64x256xbf16> to vector<64x256xbf16>
    %c64 = arith.constant 64 : index
    %c0_6 = arith.constant 0 : index
    %7 = vector.load %arg10[%c64, %c0_6] : memref<192x64xbf16, #tpu.memory_space<vmem>>, vector<64x64xbf16>
    %cst = arith.constant dense<0.000000e+00> : vector<64x256xf32>
    %8 = tpu.matmul %7, %4, %cst {dimension_numbers = #tpu.dot_dimension_numbers<[1], [0], [0], [1], [0, 0, 1, 1], [], []>} : vector<64x64xbf16>, vector<64x256xbf16>, vector<64x256xf32> -> vector<64x256xf32>
    %c64_7 = arith.constant 64 : index
    %c0_8 = arith.constant 0 : index
    %9 = vector.load %arg11[%c64_7, %c0_8] : memref<192x1xf32, #tpu.memory_space<vmem>>, vector<64x1xf32>
    %10 = vector.broadcast %9 : vector<64x1xf32> to vector<64x256xf32>
    %11 = arith.addf %8, %10 : vector<64x256xf32>
    %c128 = arith.constant 128 : index
    %c0_9 = arith.constant 0 : index
    %12 = vector.load %arg10[%c128, %c0_9] : memref<192x64xbf16, #tpu.memory_space<vmem>>, vector<64x64xbf16>
    %cst_10 = arith.constant dense<0.000000e+00> : vector<64x256xf32>
    %13 = tpu.matmul %12, %6, %cst_10 {dimension_numbers = #tpu.dot_dimension_numbers<[1], [0], [0], [1], [0, 0, 1, 1], [], []>} : vector<64x64xbf16>, vector<64x256xbf16>, vector<64x256xf32> -> vector<64x256xf32>
    %c128_11 = arith.constant 128 : index
    %c0_12 = arith.constant 0 : index
    %14 = vector.load %arg11[%c128_11, %c0_12] : memref<192x1xf32, #tpu.memory_space<vmem>>, vector<64x1xf32>
    %15 = vector.broadcast %14 : vector<64x1xf32> to vector<64x256xf32>
    %16 = arith.addf %13, %15 : vector<64x256xf32>
    %17 = vector.shape_cast %11 : vector<64x256xf32> to vector<4x16x256xf32>
    %18 = arith.truncf %17 : vector<4x16x256xf32> to vector<4x16x256xbf16>
    %19 = vector.shape_cast %16 : vector<64x256xf32> to vector<4x16x256xf32>
    %20 = arith.truncf %19 : vector<4x16x256xf32> to vector<4x16x256xbf16>
    %c0_13 = arith.constant 0 : index
    %c0_14 = arith.constant 0 : index
    %c0_15 = arith.constant 0 : index
    %21 = vector.load %arg22[%c0_13, %c0_14, %c0_15] : memref<4x32x16xbf16, #tpu.memory_space<vmem>>, vector<4x32x16xbf16>
    "tpu.trace_start"() <{level = 10 : i32, message = "hqd,hdk->hqk"}> : () -> ()
    %cst_16 = arith.constant dense<0.000000e+00> : vector<4x32x256xf32>
    %22 = tpu.matmul %21, %18, %cst_16 {dimension_numbers = #tpu.dot_dimension_numbers<[2], [1], [1], [2], [0, 0, 0, 1, 1, 2], [0], [0]>} : vector<4x32x16xbf16>, vector<4x16x256xbf16>, vector<4x32x256xf32> -> vector<4x32x256xf32>
    "tpu.trace_stop"() : () -> ()
    %c0_17 = arith.constant 0 : index
    %c0_18 = arith.constant 0 : index
    %c0_19 = arith.constant 0 : index
    %23 = vector.load %arg23[%c0_17, %c0_18, %c0_19] : memref<4x32x1xf32, #tpu.memory_space<vmem>>, vector<4x32x1xf32>
    %cst_20 = arith.constant dense<0xFF800000> : vector<4x32xf32>
    %24 = vector.multi_reduction <maximumf>, %22, %cst_20 [2] : vector<4x32x256xf32> to vector<4x32xf32>
    %25 = vector.shape_cast %24 : vector<4x32xf32> to vector<4x32x1xf32>
    %26 = arith.maximumf %23, %25 : vector<4x32x1xf32>
    %27 = arith.subf %23, %26 : vector<4x32x1xf32>
    %28 = math.exp %27 : vector<4x32x1xf32>
    %29 = vector.broadcast %26 : vector<4x32x1xf32> to vector<4x32x256xf32>
    %30 = arith.subf %22, %29 : vector<4x32x256xf32>
    %31 = math.exp %30 : vector<4x32x256xf32>
    %c0_21 = arith.constant 0 : index
    %c0_22 = arith.constant 0 : index
    %c0_23 = arith.constant 0 : index
    %32 = vector.load %arg24[%c0_21, %c0_22, %c0_23] : memref<4x32x1xf32, #tpu.memory_space<vmem>>, vector<4x32x1xf32>
    %33 = arith.mulf %28, %32 : vector<4x32x1xf32>
    %cst_24 = arith.constant dense<0.000000e+00> : vector<4x32xf32>
    %34 = vector.multi_reduction <add>, %31, %cst_24 [2] : vector<4x32x256xf32> to vector<4x32xf32>
    %35 = vector.shape_cast %34 : vector<4x32xf32> to vector<4x32x1xf32>
    %36 = arith.addf %33, %35 : vector<4x32x1xf32>
    %c0_25 = arith.constant 0 : index
    %c0_26 = arith.constant 0 : index
    %c0_27 = arith.constant 0 : index
    %37 = vector.load %arg24[%c0_25, %c0_26, %c0_27] : memref<4x32x1xf32, #tpu.memory_space<vmem>>, vector<4x32x1xf32>
    tpu.vector_store %arg24[%c0_25, %c0_26, %c0_27], %36 {strides = array<i32>} : memref<4x32x1xf32, #tpu.memory_space<vmem>>, vector<4x32x1xf32>,
    %c0_28 = arith.constant 0 : index
    %c0_29 = arith.constant 0 : index
    %c0_30 = arith.constant 0 : index
    %38 = vector.load %arg25[%c0_28, %c0_29, %c0_30] : memref<4x32x16xf32, #tpu.memory_space<vmem>>, vector<4x32x16xf32>
    %39 = vector.broadcast %28 : vector<4x32x1xf32> to vector<4x32x16xf32>
    %40 = arith.mulf %39, %38 : vector<4x32x16xf32>
    %41 = arith.truncf %31 : vector<4x32x256xf32> to vector<4x32x256xbf16>
    "tpu.trace_start"() <{level = 10 : i32, message = "hqk,hdk->hqd"}> : () -> ()
    %cst_31 = arith.constant dense<0.000000e+00> : vector<4x32x16xf32>
    %42 = tpu.matmul %41, %20, %cst_31 {dimension_numbers = #tpu.dot_dimension_numbers<[2], [2], [1], [1], [0, 0, 0, 1, 1, 1], [0], [0]>} : vector<4x32x256xbf16>, vector<4x16x256xbf16>, vector<4x32x16xf32> -> vector<4x32x16xf32>
    "tpu.trace_stop"() : () -> ()
    %43 = arith.addf %40, %42 : vector<4x32x16xf32>
    %c0_32 = arith.constant 0 : index
    %c0_33 = arith.constant 0 : index
    %c0_34 = arith.constant 0 : index
    %44 = vector.load %arg25[%c0_32, %c0_33, %c0_34] : memref<4x32x16xf32, #tpu.memory_space<vmem>>, vector<4x32x16xf32>
    tpu.vector_store %arg25[%c0_32, %c0_33, %c0_34], %43 {strides = array<i32>} : memref<4x32x16xf32, #tpu.memory_space<vmem>>, vector<4x32x16xf32>,
    %c0_35 = arith.constant 0 : index
    %c0_36 = arith.constant 0 : index
    %c0_37 = arith.constant 0 : index
    %45 = vector.load %arg23[%c0_35, %c0_36, %c0_37] : memref<4x32x1xf32, #tpu.memory_space<vmem>>, vector<4x32x1xf32>
    tpu.vector_store %arg23[%c0_35, %c0_36, %c0_37], %26 {strides = array<i32>} : memref<4x32x1xf32, #tpu.memory_space<vmem>>, vector<4x32x1xf32>,
    %c0_i32_38 = arith.constant 0 : i32
    %46 = arith.cmpi eq, %arg1, %c0_i32_38 : i32
    %47 = arith.extui %46 : i1 to i32
    %c0_i32_39 = arith.constant 0 : i32
    %48 = arith.cmpi ne, %47, %c0_i32_39 : i32
    scf.if %48 {
      %c0_40 = arith.constant 0 : index
      %c0_41 = arith.constant 0 : index
      %c0_42 = arith.constant 0 : index
      %49 = vector.load %arg24[%c0_40, %c0_41, %c0_42] : memref<4x32x1xf32, #tpu.memory_space<vmem>>, vector<4x32x1xf32>
      %50 = tpu.reciprocal %49 {approx = true} : vector<4x32x1xf32> -> vector<4x32x1xf32>
      %c0_43 = arith.constant 0 : index
      %c0_44 = arith.constant 0 : index
      %c0_45 = arith.constant 0 : index
      %51 = vector.load %arg25[%c0_43, %c0_44, %c0_45] : memref<4x32x16xf32, #tpu.memory_space<vmem>>, vector<4x32x16xf32>
      %52 = vector.broadcast %50 : vector<4x32x1xf32> to vector<4x32x16xf32>
      %53 = arith.mulf %51, %52 : vector<4x32x16xf32>
      %54 = tpu.transpose %53, [0, 2, 1] : vector<4x32x16xf32> -> vector<4x16x32xf32>
      %55 = vector.shape_cast %54 : vector<4x16x32xf32> to vector<64x32xf32>
      %c0_46 = arith.constant 0 : index
      %c0_47 = arith.constant 0 : index
      %56 = vector.load %arg12[%c0_46, %c0_47] : memref<64x64xbf16, #tpu.memory_space<vmem>>, vector<64x64xbf16>
      %57 = arith.truncf %55 : vector<64x32xf32> to vector<64x32xbf16>
      %cst_48 = arith.constant dense<0.000000e+00> : vector<64x32xf32>
      %58 = tpu.matmul %56, %57, %cst_48 {dimension_numbers = #tpu.dot_dimension_numbers<[1], [0], [0], [1], [0, 0, 1, 1], [], []>} : vector<64x64xbf16>, vector<64x32xbf16>, vector<64x32xf32> -> vector<64x32xf32>
      %c0_49 = arith.constant 0 : index
      %c0_50 = arith.constant 0 : index
      %59 = vector.load %arg13[%c0_49, %c0_50] : memref<64x1xf32, #tpu.memory_space<vmem>>, vector<64x1xf32>
      %60 = vector.broadcast %59 : vector<64x1xf32> to vector<64x32xf32>
      %61 = arith.addf %58, %60 : vector<64x32xf32>
      %c0_51 = arith.constant 0 : index
      %c0_52 = arith.constant 0 : index
      %62 = vector.load %arg21[%c0_51, %c0_52] : memref<64x32xf32, #tpu.memory_space<vmem>>, vector<64x32xf32>
      %63 = arith.addf %62, %61 : vector<64x32xf32>
      %c0_53 = arith.constant 0 : index
      %c1 = arith.constant 1 : index
      %64 = vector.load %arg18[%c0_53, %c1] : memref<64x3xf32, #tpu.memory_space<vmem>>, vector<64x1xf32>
      %c0_54 = arith.constant 0 : index
      %c1_55 = arith.constant 1 : index
      %65 = vector.load %arg19[%c0_54, %c1_55] : memref<64x3xf32, #tpu.memory_space<vmem>>, vector<64x1xf32>
      %cst_56 = arith.constant dense<0.000000e+00> : vector<32xf32>
      %66 = vector.multi_reduction <add>, %63, %cst_56 [0] : vector<64x32xf32> to vector<32xf32>
      %67 = vector.shape_cast %66 : vector<32xf32> to vector<1x32xf32>
      %cst_57 = arith.constant 6.400000e+01 : f32
      %68 = vector.broadcast %cst_57 : f32 to vector<1x32xf32>
      %69 = arith.divf %67, %68 : vector<1x32xf32>
      %70 = vector.broadcast %69 : vector<1x32xf32> to vector<64x32xf32>
      %71 = arith.subf %63, %70 : vector<64x32xf32>
      %72 = arith.mulf %71, %71 : vector<64x32xf32>
      %cst_58 = arith.constant dense<0.000000e+00> : vector<32xf32>
      %73 = vector.multi_reduction <add>, %72, %cst_58 [0] : vector<64x32xf32> to vector<32xf32>
      %74 = vector.shape_cast %73 : vector<32xf32> to vector<1x32xf32>
      %cst_59 = arith.constant 6.400000e+01 : f32
      %75 = vector.broadcast %cst_59 : f32 to vector<1x32xf32>
      %76 = arith.divf %74, %75 : vector<1x32xf32>
      %77 = vector.broadcast %69 : vector<1x32xf32> to vector<64x32xf32>
      %78 = arith.subf %63, %77 : vector<64x32xf32>
      %cst_60 = arith.constant 9.99999974E-6 : f32
      %79 = vector.broadcast %cst_60 : f32 to vector<1x32xf32>
      %80 = arith.addf %76, %79 : vector<1x32xf32>
      %81 = math.rsqrt %80 : vector<1x32xf32>
      %82 = vector.broadcast %81 : vector<1x32xf32> to vector<64x32xf32>
      %83 = arith.mulf %78, %82 : vector<64x32xf32>
      %84 = vector.broadcast %64 : vector<64x1xf32> to vector<64x32xf32>
      %85 = arith.mulf %83, %84 : vector<64x32xf32>
      %86 = vector.broadcast %65 : vector<64x1xf32> to vector<64x32xf32>
      %87 = arith.addf %85, %86 : vector<64x32xf32>
      %c0_61 = arith.constant 0 : index
      %c0_62 = arith.constant 0 : index
      %88 = vector.load %arg14[%c0_61, %c0_62] : memref<128x64xbf16, #tpu.memory_space<vmem>>, vector<128x64xbf16>
      %89 = arith.truncf %87 : vector<64x32xf32> to vector<64x32xbf16>
      %cst_63 = arith.constant dense<0.000000e+00> : vector<128x32xf32>
      %90 = tpu.matmul %88, %89, %cst_63 {dimension_numbers = #tpu.dot_dimension_numbers<[1], [0], [0], [1], [0, 0, 1, 1], [], []>} : vector<128x64xbf16>, vector<64x32xbf16>, vector<128x32xf32> -> vector<128x32xf32>
      %c0_64 = arith.constant 0 : index
      %c0_65 = arith.constant 0 : index
      %91 = vector.load %arg15[%c0_64, %c0_65] : memref<128x1xf32, #tpu.memory_space<vmem>>, vector<128x1xf32>
      %92 = vector.broadcast %91 : vector<128x1xf32> to vector<128x32xf32>
      %93 = arith.addf %90, %92 : vector<128x32xf32>
      %cst_66 = arith.constant 0.000000e+00 : f32
      %94 = vector.broadcast %cst_66 : f32 to vector<128x32xf32>
      %95 = arith.maximumf %93, %94 : vector<128x32xf32>
      %c0_67 = arith.constant 0 : index
      %c0_68 = arith.constant 0 : index
      %96 = vector.load %arg16[%c0_67, %c0_68] : memref<64x128xbf16, #tpu.memory_space<vmem>>, vector<64x128xbf16>
      %97 = arith.truncf %95 : vector<128x32xf32> to vector<128x32xbf16>
      %cst_69 = arith.constant dense<0.000000e+00> : vector<64x32xf32>
      %98 = tpu.matmul %96, %97, %cst_69 {dimension_numbers = #tpu.dot_dimension_numbers<[1], [0], [0], [1], [0, 0, 1, 1], [], []>} : vector<64x128xbf16>, vector<128x32xbf16>, vector<64x32xf32> -> vector<64x32xf32>
      %c0_70 = arith.constant 0 : index
      %c0_71 = arith.constant 0 : index
      %99 = vector.load %arg17[%c0_70, %c0_71] : memref<64x1xf32, #tpu.memory_space<vmem>>, vector<64x1xf32>
      %100 = vector.broadcast %99 : vector<64x1xf32> to vector<64x32xf32>
      %101 = arith.addf %98, %100 : vector<64x32xf32>
      %102 = arith.addf %87, %101 : vector<64x32xf32>
      %c0_72 = arith.constant 0 : index
      %c2 = arith.constant 2 : index
      %103 = vector.load %arg18[%c0_72, %c2] : memref<64x3xf32, #tpu.memory_space<vmem>>, vector<64x1xf32>
      %c0_73 = arith.constant 0 : index
      %c2_74 = arith.constant 2 : index
      %104 = vector.load %arg19[%c0_73, %c2_74] : memref<64x3xf32, #tpu.memory_space<vmem>>, vector<64x1xf32>
      %cst_75 = arith.constant dense<0.000000e+00> : vector<32xf32>
      %105 = vector.multi_reduction <add>, %102, %cst_75 [0] : vector<64x32xf32> to vector<32xf32>
      %106 = vector.shape_cast %105 : vector<32xf32> to vector<1x32xf32>
      %cst_76 = arith.constant 6.400000e+01 : f32
      %107 = vector.broadcast %cst_76 : f32 to vector<1x32xf32>
      %108 = arith.divf %106, %107 : vector<1x32xf32>
      %109 = vector.broadcast %108 : vector<1x32xf32> to vector<64x32xf32>
      %110 = arith.subf %102, %109 : vector<64x32xf32>
      %111 = arith.mulf %110, %110 : vector<64x32xf32>
      %cst_77 = arith.constant dense<0.000000e+00> : vector<32xf32>
      %112 = vector.multi_reduction <add>, %111, %cst_77 [0] : vector<64x32xf32> to vector<32xf32>
      %113 = vector.shape_cast %112 : vector<32xf32> to vector<1x32xf32>
      %cst_78 = arith.constant 6.400000e+01 : f32
      %114 = vector.broadcast %cst_78 : f32 to vector<1x32xf32>
      %115 = arith.divf %113, %114 : vector<1x32xf32>
      %116 = vector.broadcast %108 : vector<1x32xf32> to vector<64x32xf32>
      %117 = arith.subf %102, %116 : vector<64x32xf32>
      %cst_79 = arith.constant 9.99999974E-6 : f32
      %118 = vector.broadcast %cst_79 : f32 to vector<1x32xf32>
      %119 = arith.addf %115, %118 : vector<1x32xf32>
      %120 = math.rsqrt %119 : vector<1x32xf32>
      %121 = vector.broadcast %120 : vector<1x32xf32> to vector<64x32xf32>
      %122 = arith.mulf %117, %121 : vector<64x32xf32>
      %123 = vector.broadcast %103 : vector<64x1xf32> to vector<64x32xf32>
      %124 = arith.mulf %122, %123 : vector<64x32xf32>
      %125 = vector.broadcast %104 : vector<64x1xf32> to vector<64x32xf32>
      %126 = arith.addf %124, %125 : vector<64x32xf32>
      %c0_80 = arith.constant 0 : index
      %c0_81 = arith.constant 0 : index
      %c0_82 = arith.constant 0 : index
      %127 = vector.load %arg20[%c0_80, %c0_81, %c0_82] : memref<1x64x32xf32, #tpu.memory_space<vmem>>, vector<1x64x32xf32>
      %128 = vector.shape_cast %127 : vector<1x64x32xf32> to vector<64x32xf32>
      %129 = vector.shape_cast %126 : vector<64x32xf32> to vector<1x64x32xf32>
      tpu.vector_store %arg20[%c0_80, %c0_81, %c0_82], %129 {strides = array<i32>} : memref<1x64x32xf32, #tpu.memory_space<vmem>>, vector<1x64x32xf32>,
    } else {
    }
    return
  }
  func.func @transform_0(%arg0: i32, %arg1: i32) -> (i32, i32, i32) {
    %c0_i32 = arith.constant 0 : i32
    %c0_i32_0 = arith.constant 0 : i32
    %c0_i32_1 = arith.constant 0 : i32
    return %arg0, %c0_i32, %c0_i32_0 : i32, i32, i32
  }
  func.func @transform_1(%arg0: i32, %arg1: i32) -> (i32, i32, i32) {
    %c0_i32 = arith.constant 0 : i32
    %c0_i32_0 = arith.constant 0 : i32
    %c0_i32_1 = arith.constant 0 : i32
    return %arg0, %c0_i32, %c0_i32_0 : i32, i32, i32
  }
  func.func @transform_2(%arg0: i32, %arg1: i32) -> (i32, i32, i32) {
    %c0_i32 = arith.constant 0 : i32
    %c0_i32_0 = arith.constant 0 : i32
    return %arg0, %c0_i32, %arg1 : i32, i32, i32
  }
  func.func @transform_3(%arg0: i32, %arg1: i32) -> (i32, i32, i32) {
    %c0_i32 = arith.constant 0 : i32
    %c0_i32_0 = arith.constant 0 : i32
    return %arg0, %c0_i32, %arg1 : i32, i32, i32
  }
  func.func @transform_4(%arg0: i32, %arg1: i32) -> (i32, i32) {
    %c0_i32 = arith.constant 0 : i32
    %c0_i32_0 = arith.constant 0 : i32
    %c0_i32_1 = arith.constant 0 : i32
    return %c0_i32, %c0_i32_0 : i32, i32
  }
  func.func @transform_5(%arg0: i32, %arg1: i32) -> (i32, i32) {
    %c0_i32 = arith.constant 0 : i32
    %c0_i32_0 = arith.constant 0 : i32
    %c0_i32_1 = arith.constant 0 : i32
    return %c0_i32, %c0_i32_0 : i32, i32
  }
  func.func @transform_6(%arg0: i32, %arg1: i32) -> (i32, i32) {
    %c0_i32 = arith.constant 0 : i32
    %c0_i32_0 = arith.constant 0 : i32
    %c0_i32_1 = arith.constant 0 : i32
    return %c0_i32, %c0_i32_0 : i32, i32
  }
  func.func @transform_7(%arg0: i32, %arg1: i32) -> (i32, i32) {
    %c0_i32 = arith.constant 0 : i32
    %c0_i32_0 = arith.constant 0 : i32
    %c0_i32_1 = arith.constant 0 : i32
    return %c0_i32, %c0_i32_0 : i32, i32
  }
  func.func @transform_8(%arg0: i32, %arg1: i32) -> (i32, i32) {
    %c0_i32 = arith.constant 0 : i32
    %c0_i32_0 = arith.constant 0 : i32
    %c0_i32_1 = arith.constant 0 : i32
    return %c0_i32, %c0_i32_0 : i32, i32
  }
  func.func @transform_9(%arg0: i32, %arg1: i32) -> (i32, i32) {
    %c0_i32 = arith.constant 0 : i32
    %c0_i32_0 = arith.constant 0 : i32
    %c0_i32_1 = arith.constant 0 : i32
    return %c0_i32, %c0_i32_0 : i32, i32
  }
  func.func @transform_10(%arg0: i32, %arg1: i32) -> (i32, i32) {
    %c0_i32 = arith.constant 0 : i32
    %c0_i32_0 = arith.constant 0 : i32
    %c0_i32_1 = arith.constant 0 : i32
    return %c0_i32, %c0_i32_0 : i32, i32
  }
  func.func @transform_11(%arg0: i32, %arg1: i32) -> (i32, i32) {
    %c0_i32 = arith.constant 0 : i32
    %c0_i32_0 = arith.constant 0 : i32
    %c0_i32_1 = arith.constant 0 : i32
    return %c0_i32, %c0_i32_0 : i32, i32
  }
  func.func @transform_12(%arg0: i32, %arg1: i32) -> (i32, i32) {
    %c0_i32 = arith.constant 0 : i32
    %c0_i32_0 = arith.constant 0 : i32
    %c0_i32_1 = arith.constant 0 : i32
    return %c0_i32, %c0_i32_0 : i32, i32
  }
  func.func @transform_13(%arg0: i32, %arg1: i32) -> (i32, i32) {
    %c0_i32 = arith.constant 0 : i32
    %c0_i32_0 = arith.constant 0 : i32
    %c0_i32_1 = arith.constant 0 : i32
    return %c0_i32, %c0_i32_0 : i32, i32
  }
  func.func @transform_14(%arg0: i32, %arg1: i32) -> (i32, i32) {
    %c0_i32 = arith.constant 0 : i32
    %c0_i32_0 = arith.constant 0 : i32
    %c0_i32_1 = arith.constant 0 : i32
    return %c0_i32, %c0_i32_0 : i32, i32
  }
  func.func @transform_15(%arg0: i32, %arg1: i32) -> (i32, i32) {
    %c0_i32 = arith.constant 0 : i32
    %c0_i32_0 = arith.constant 0 : i32
    %c0_i32_1 = arith.constant 0 : i32
    return %c0_i32, %c0_i32_0 : i32, i32
  }
  func.func @transform_16(%arg0: i32, %arg1: i32) -> (i32, i32) {
    %c0_i32 = arith.constant 0 : i32
    %c0_i32_0 = arith.constant 0 : i32
    %c0_i32_1 = arith.constant 0 : i32
    return %c0_i32, %c0_i32_0 : i32, i32
  }
  func.func @transform_17(%arg0: i32, %arg1: i32) -> (i32, i32) {
    %c0_i32 = arith.constant 0 : i32
    %c0_i32_0 = arith.constant 0 : i32
    %c0_i32_1 = arith.constant 0 : i32
    return %c0_i32, %c0_i32_0 : i32, i32
  }
  func.func @transform_18(%arg0: i32, %arg1: i32) -> (i32, i32, i32) {
    %c0_i32 = arith.constant 0 : i32
    %c0_i32_0 = arith.constant 0 : i32
    %c0_i32_1 = arith.constant 0 : i32
    return %arg0, %c0_i32, %c0_i32_0 : i32, i32, i32
  }
}

</mosaic_0001>

<llo_original>
// kernel: tpu_custom_call.1
$region0: #{tpu_custom_call.1}
  #allocation0 [shape = 'u32[]', space=smem, size = 0x4, offset = 0x4, fixed_abs, tag = 'smem constant byte address 0x4 - core index']
  #allocation1 [shape = 'u32[72,128]{1,0:T(1,128)}', space=vmem, size = 0x9000, scoped, tag = 'internal scratch']
  #allocation2 [shape = 'f32[64,32]{1,0:T(8,128)}', space=vmem, size = 0x8000, scoped, tag = 'scratch operand']
  #allocation3 [shape = 'bf16[4,32,16]{2,1,0:T(8,128)(2,1)}', space=vmem, size = 0x8000, scoped, tag = 'scratch operand']
  #allocation4 [shape = 'f32[4,32,1]{2,1,0:T(8,128)}', space=vmem, size = 0x10000, scoped, tag = 'scratch operand']
  #allocation5 [shape = 'f32[4,32,1]{2,1,0:T(8,128)}', space=vmem, size = 0x10000, scoped, tag = 'scratch operand']
  #allocation6 [shape = 'f32[4,32,16]{2,1,0:T(8,128)}', space=vmem, size = 0x10000, scoped, tag = 'scratch operand']
  %s0 = inlined_call_operand.vmem [shape: f32[2,64,32], index: 0, kind: input, shape index: {}]
  %s1 = inlined_call_operand.vmem [shape: f32[2,64,32], index: 1, kind: input, shape index: {}]
  %s2 = inlined_call_operand.vmem [shape: bf16[2,64,256], index: 2, kind: input, shape index: {}]
  %s3 = inlined_call_operand.vmem [shape: bf16[2,64,256], index: 3, kind: input, shape index: {}]
  %s4 = inlined_call_operand.vmem [shape: bf16[192,64], index: 4, kind: input, shape index: {}]
  %s5 = inlined_call_operand.vmem [shape: f32[192,1], index: 5, kind: input, shape index: {}]
  %s6 = inlined_call_operand.vmem [shape: bf16[64,64], index: 6, kind: input, shape index: {}]
  %s7 = inlined_call_operand.vmem [shape: f32[64,1], index: 7, kind: input, shape index: {}]
  %s8 = inlined_call_operand.vmem [shape: bf16[192,64], index: 8, kind: input, shape index: {}]
  %s9 = inlined_call_operand.vmem [shape: f32[192,1], index: 9, kind: input, shape index: {}]
  %s10 = inlined_call_operand.vmem [shape: bf16[64,64], index: 10, kind: input, shape index: {}]
  %s11 = inlined_call_operand.vmem [shape: f32[64,1], index: 11, kind: input, shape index: {}]
  %s12 = inlined_call_operand.vmem [shape: bf16[128,64], index: 12, kind: input, shape index: {}]
  %s13 = inlined_call_operand.vmem [shape: f32[128,1], index: 13, kind: input, shape index: {}]
  %s14 = inlined_call_operand.vmem [shape: bf16[64,128], index: 14, kind: input, shape index: {}]
  %s15 = inlined_call_operand.vmem [shape: f32[64,1], index: 15, kind: input, shape index: {}]
  %s16 = inlined_call_operand.vmem [shape: f32[64,3], index: 16, kind: input, shape index: {}]
  %s17 = inlined_call_operand.vmem [shape: f32[64,3], index: 17, kind: input, shape index: {}]
  %s18 = inlined_call_operand.vmem [shape: f32[2,64,32], index: 18, kind: output, shape index: {}]
  %s19 = sld [smem:[#allocation0]]
  $region113: #{tpu_custom_call.1} parent=0
    _
  %s21 = ssub.s32 1, %s19
  %s22 = scalar_select 0, %s21, %s19
  loop: start=0, step=1, limit=4
  $region2: #{tpu_custom_call.1} parent=0 // loop_pre_header
    _
  $region3: #{tpu_custom_call.1} parent=0 // loop_header
    %s24 = sphi 0, %s28
    %p25 = scmp.ge.s32.totalorder %s24, 4
    %s31 = sphi 0, %s43
    %s32 = sphi 0, %s39
    %s33 = sphi 0, %s31
    %s34 = sphi 0, %s32
    %s35 = sphi 0, %s33
    %s36 = sphi 0, %s34
    %s46 = sphi 0, %s48
    %s49 = sphi 0, %s46
    %s50 = sphi 0, %s49
    %s66 = sphi 0, %s50
    %s72 = sphi 0, %s74
    %s75 = sphi 0, %s72
    %s76 = sphi 0, %s75
    %s92 = sphi 0, %s76
    %s100 = sphi 0, %s102
    %s103 = sphi 0, %s100
    %s104 = sphi 0, %s103
    %s120 = sphi 0, %s104
    %s128 = sphi 0, %s130
    %s131 = sphi 0, %s128
    %s132 = sphi 0, %s131
    %s148 = sphi 0, %s132
    %s152 = sphi 0, %s152
    %s154 = sphi 0, %s152
    %s155 = sphi 0, %s154
    %s169 = sphi 0, %s155
    %s173 = sphi 0, %s173
    %s175 = sphi 0, %s173
    %s176 = sphi 0, %s175
    %s190 = sphi 0, %s176
    %s194 = sphi 0, %s194
    %s196 = sphi 0, %s194
    %s197 = sphi 0, %s196
    %s211 = sphi 0, %s197
    %s215 = sphi 0, %s215
    %s217 = sphi 0, %s215
    %s218 = sphi 0, %s217
    %s232 = sphi 0, %s218
    %s236 = sphi 0, %s236
    %s238 = sphi 0, %s236
    %s239 = sphi 0, %s238
    %s253 = sphi 0, %s239
    %s257 = sphi 0, %s257
    %s259 = sphi 0, %s257
    %s260 = sphi 0, %s259
    %s274 = sphi 0, %s260
    %s278 = sphi 0, %s278
    %s280 = sphi 0, %s278
    %s281 = sphi 0, %s280
    %s295 = sphi 0, %s281
    %s299 = sphi 0, %s299
    %s301 = sphi 0, %s299
    %s302 = sphi 0, %s301
    %s316 = sphi 0, %s302
    %s320 = sphi 0, %s320
    %s322 = sphi 0, %s320
    %s323 = sphi 0, %s322
    %s337 = sphi 0, %s323
    %s341 = sphi 0, %s341
    %s343 = sphi 0, %s341
    %s344 = sphi 0, %s343
    %s358 = sphi 0, %s344
    %s362 = sphi 0, %s362
    %s364 = sphi 0, %s362
    %s365 = sphi 0, %s364
    %s379 = sphi 0, %s365
    %s383 = sphi 0, %s383
    %s385 = sphi 0, %s383
    %s386 = sphi 0, %s385
    %s400 = sphi 0, %s386
    %s404 = sphi 0, %s404
    %s406 = sphi 0, %s404
    %s407 = sphi 0, %s406
    %s421 = sphi 0, %s407
    %s425 = sphi 0, %s425
    %s427 = sphi 0, %s425
    %s428 = sphi 0, %s427
    %s442 = sphi 0, %s428
    %s448 = sphi 0, %s450
    %s451 = sphi 0, %s448
    %s452 = sphi 0, %s451
    %s468 = sphi 0, %s452
  $region4: #{tpu_custom_call.1} parent=0 // loop_header_branch
    %27 = sbr.rel (%p25) target = $region8
  $region5: #{tpu_custom_call.1} parent=0 // loop_body
    %s29 = ssub.s32 %s24, 1
    %s30 = ssub.s32 %s24, 2
    %s37 = sadd.s32 1, %s32
    %p38 = scmp.ge.s32.totalorder %s37, 1
    %s39 = scalar_select %p38, 0, %s37
    %s40 = sadd.s32 1, %s31
    %s41 = scalar_select %p38, %s40, %s31
    %p42 = scmp.ge.s32.totalorder %s41, 2
    %s43 = scalar_select %p42, 0, %s41
    %s44 = ssub.s32 %s31, %s43
    %p45 = scmp.eq.s32.totalorder %s44, 0
    %s47 = sadd.s32 %s46, 1
    %s48 = scalar_select %p45, %s46, %s47
    %p51 = pneg %p45
    %p52 = scmp.eq.s32.totalorder %s24, 1
    %p53 = por %p51, %p52
    %p54 = scmp.ne.s32.totalorder %s46, %s49
    %p55 = scmp.eq.s32.totalorder %s24, 0
    %p56 = por %p54, %p55
    %p57 = scmp.ne.s32.totalorder %s46, %s49
    %p58 = scmp.eq.s32.totalorder %s29, 1
    %p59 = por %p57, %p58
    %p60 = scmp.ne.s32.totalorder %s49, %s50
    %p61 = scmp.eq.s32.totalorder %s29, 0
    %p62 = por %p60, %p61
    %p63 = scmp.ne.s32.totalorder %s49, %s50
    %p64 = scmp.eq.s32.totalorder %s30, 1
    %p65 = por %p63, %p64
    %p67 = scmp.ne.s32.totalorder %s50, %s66
    %p68 = scmp.eq.s32.totalorder %s30, 0
    %p69 = por %p67, %p68
    %s70 = ssub.s32 %s31, %s43
    %p71 = scmp.eq.s32.totalorder %s70, 0
    %s73 = sadd.s32 %s72, 1
    %s74 = scalar_select %p71, %s72, %s73
    %p77 = pneg %p71
    %p78 = scmp.eq.s32.totalorder %s24, 1
    %p79 = por %p77, %p78
    %p80 = scmp.ne.s32.totalorder %s72, %s75
    %p81 = scmp.eq.s32.totalorder %s24, 0
    %p82 = por %p80, %p81
    %p83 = scmp.ne.s32.totalorder %s72, %s75
    %p84 = scmp.eq.s32.totalorder %s29, 1
    %p85 = por %p83, %p84
    %p86 = scmp.ne.s32.totalorder %s75, %s76
    %p87 = scmp.eq.s32.totalorder %s29, 0
    %p88 = por %p86, %p87
    %p89 = scmp.ne.s32.totalorder %s75, %s76
    %p90 = scmp.eq.s32.totalorder %s30, 1
    %p91 = por %p89, %p90
    %p93 = scmp.ne.s32.totalorder %s76, %s92
    %p94 = scmp.eq.s32.totalorder %s30, 0
    %p95 = por %p93, %p94
    %s96 = ssub.s32 %s31, %s43
    %s97 = ssub.s32 %s32, %s39
    %s98 = sor.u32 %s96, %s97
    %p99 = scmp.eq.s32.totalorder %s98, 0
    %s101 = sadd.s32 %s100, 1
    %s102 = scalar_select %p99, %s100, %s101
    %p105 = pneg %p99
    %p106 = scmp.eq.s32.totalorder %s24, 1
    %p107 = por %p105, %p106
    %p108 = scmp.ne.s32.totalorder %s100, %s103
    %p109 = scmp.eq.s32.totalorder %s24, 0
    %p110 = por %p108, %p109
    %p111 = scmp.ne.s32.totalorder %s100, %s103
    %p112 = scmp.eq.s32.totalorder %s29, 1
    %p113 = por %p111, %p112
    %p114 = scmp.ne.s32.totalorder %s103, %s104
    %p115 = scmp.eq.s32.totalorder %s29, 0
    %p116 = por %p114, %p115
    %p117 = scmp.ne.s32.totalorder %s103, %s104
    %p118 = scmp.eq.s32.totalorder %s30, 1
    %p119 = por %p117, %p118
    %p121 = scmp.ne.s32.totalorder %s104, %s120
    %p122 = scmp.eq.s32.totalorder %s30, 0
    %p123 = por %p121, %p122
    %s124 = ssub.s32 %s31, %s43
    %s125 = ssub.s32 %s32, %s39
    %s126 = sor.u32 %s124, %s125
    %p127 = scmp.eq.s32.totalorder %s126, 0
    %s129 = sadd.s32 %s128, 1
    %s130 = scalar_select %p127, %s128, %s129
    %p133 = pneg %p127
    %p134 = scmp.eq.s32.totalorder %s24, 1
    %p135 = por %p133, %p134
    %p136 = scmp.ne.s32.totalorder %s128, %s131
    %p137 = scmp.eq.s32.totalorder %s24, 0
    %p138 = por %p136, %p137
    %p139 = scmp.ne.s32.totalorder %s128, %s131
    %p140 = scmp.eq.s32.totalorder %s29, 1
    %p141 = por %p139, %p140
    %p142 = scmp.ne.s32.totalorder %s131, %s132
    %p143 = scmp.eq.s32.totalorder %s29, 0
    %p144 = por %p142, %p143
    %p145 = scmp.ne.s32.totalorder %s131, %s132
    %p146 = scmp.eq.s32.totalorder %s30, 1
    %p147 = por %p145, %p146
    %p149 = scmp.ne.s32.totalorder %s132, %s148
    %p150 = scmp.eq.s32.totalorder %s30, 0
    %p151 = por %p149, %p150
    %s153 = sadd.s32 %s152, 1
    %p156 = scmp.eq.s32.totalorder %s24, 1
    %p157 = scmp.ne.s32.totalorder %s152, %s154
    %p158 = scmp.eq.s32.totalorder %s24, 0
    %p159 = por %p157, %p158
    %p160 = scmp.ne.s32.totalorder %s152, %s154
    %p161 = scmp.eq.s32.totalorder %s29, 1
    %p162 = por %p160, %p161
    %p163 = scmp.ne.s32.totalorder %s154, %s155
    %p164 = scmp.eq.s32.totalorder %s29, 0
    %p165 = por %p163, %p164
    %p166 = scmp.ne.s32.totalorder %s154, %s155
    %p167 = scmp.eq.s32.totalorder %s30, 1
    %p168 = por %p166, %p167
    %p170 = scmp.ne.s32.totalorder %s155, %s169
    %p171 = scmp.eq.s32.totalorder %s30, 0
    %p172 = por %p170, %p171
    %s174 = sadd.s32 %s173, 1
    %p177 = scmp.eq.s32.totalorder %s24, 1
    %p178 = scmp.ne.s32.totalorder %s173, %s175
    %p179 = scmp.eq.s32.totalorder %s24, 0
    %p180 = por %p178, %p179
    %p181 = scmp.ne.s32.totalorder %s173, %s175
    %p182 = scmp.eq.s32.totalorder %s29, 1
    %p183 = por %p181, %p182
    %p184 = scmp.ne.s32.totalorder %s175, %s176
    %p185 = scmp.eq.s32.totalorder %s29, 0
    %p186 = por %p184, %p185
    %p187 = scmp.ne.s32.totalorder %s175, %s176
    %p188 = scmp.eq.s32.totalorder %s30, 1
    %p189 = por %p187, %p188
    %p191 = scmp.ne.s32.totalorder %s176, %s190
    %p192 = scmp.eq.s32.totalorder %s30, 0
    %p193 = por %p191, %p192
    %s195 = sadd.s32 %s194, 1
    %p198 = scmp.eq.s32.totalorder %s24, 1
    %p199 = scmp.ne.s32.totalorder %s194, %s196
    %p200 = scmp.eq.s32.totalorder %s24, 0
    %p201 = por %p199, %p200
    %p202 = scmp.ne.s32.totalorder %s194, %s196
    %p203 = scmp.eq.s32.totalorder %s29, 1
    %p204 = por %p202, %p203
    %p205 = scmp.ne.s32.totalorder %s196, %s197
    %p206 = scmp.eq.s32.totalorder %s29, 0
    %p207 = por %p205, %p206
    %p208 = scmp.ne.s32.totalorder %s196, %s197
    %p209 = scmp.eq.s32.totalorder %s30, 1
    %p210 = por %p208, %p209
    %p212 = scmp.ne.s32.totalorder %s197, %s211
    %p213 = scmp.eq.s32.totalorder %s30, 0
    %p214 = por %p212, %p213
    %s216 = sadd.s32 %s215, 1
    %p219 = scmp.eq.s32.totalorder %s24, 1
    %p220 = scmp.ne.s32.totalorder %s215, %s217
    %p221 = scmp.eq.s32.totalorder %s24, 0
    %p222 = por %p220, %p221
    %p223 = scmp.ne.s32.totalorder %s215, %s217
    %p224 = scmp.eq.s32.totalorder %s29, 1
    %p225 = por %p223, %p224
    %p226 = scmp.ne.s32.totalorder %s217, %s218
    %p227 = scmp.eq.s32.totalorder %s29, 0
    %p228 = por %p226, %p227
    %p229 = scmp.ne.s32.totalorder %s217, %s218
    %p230 = scmp.eq.s32.totalorder %s30, 1
    %p231 = por %p229, %p230
    %p233 = scmp.ne.s32.totalorder %s218, %s232
    %p234 = scmp.eq.s32.totalorder %s30, 0
    %p235 = por %p233, %p234
    %s237 = sadd.s32 %s236, 1
    %p240 = scmp.eq.s32.totalorder %s24, 1
    %p241 = scmp.ne.s32.totalorder %s236, %s238
    %p242 = scmp.eq.s32.totalorder %s24, 0
    %p243 = por %p241, %p242
    %p244 = scmp.ne.s32.totalorder %s236, %s238
    %p245 = scmp.eq.s32.totalorder %s29, 1
    %p246 = por %p244, %p245
    %p247 = scmp.ne.s32.totalorder %s238, %s239
    %p248 = scmp.eq.s32.totalorder %s29, 0
    %p249 = por %p247, %p248
    %p250 = scmp.ne.s32.totalorder %s238, %s239
    %p251 = scmp.eq.s32.totalorder %s30, 1
    %p252 = por %p250, %p251
    %p254 = scmp.ne.s32.totalorder %s239, %s253
    %p255 = scmp.eq.s32.totalorder %s30, 0
    %p256 = por %p254, %p255
    %s258 = sadd.s32 %s257, 1
    %p261 = scmp.eq.s32.totalorder %s24, 1
    %p262 = scmp.ne.s32.totalorder %s257, %s259
    %p263 = scmp.eq.s32.totalorder %s24, 0
    %p264 = por %p262, %p263
    %p265 = scmp.ne.s32.totalorder %s257, %s259
    %p266 = scmp.eq.s32.totalorder %s29, 1
    %p267 = por %p265, %p266
    %p268 = scmp.ne.s32.totalorder %s259, %s260
    %p269 = scmp.eq.s32.totalorder %s29, 0
    %p270 = por %p268, %p269
    %p271 = scmp.ne.s32.totalorder %s259, %s260
    %p272 = scmp.eq.s32.totalorder %s30, 1
    %p273 = por %p271, %p272
    %p275 = scmp.ne.s32.totalorder %s260, %s274
    %p276 = scmp.eq.s32.totalorder %s30, 0
    %p277 = por %p275, %p276
    %s279 = sadd.s32 %s278, 1
    %p282 = scmp.eq.s32.totalorder %s24, 1
    %p283 = scmp.ne.s32.totalorder %s278, %s280
    %p284 = scmp.eq.s32.totalorder %s24, 0
    %p285 = por %p283, %p284
    %p286 = scmp.ne.s32.totalorder %s278, %s280
    %p287 = scmp.eq.s32.totalorder %s29, 1
    %p288 = por %p286, %p287
    %p289 = scmp.ne.s32.totalorder %s280, %s281
    %p290 = scmp.eq.s32.totalorder %s29, 0
    %p291 = por %p289, %p290
    %p292 = scmp.ne.s32.totalorder %s280, %s281
    %p293 = scmp.eq.s32.totalorder %s30, 1
    %p294 = por %p292, %p293
    %p296 = scmp.ne.s32.totalorder %s281, %s295
    %p297 = scmp.eq.s32.totalorder %s30, 0
    %p298 = por %p296, %p297
    %s300 = sadd.s32 %s299, 1
    %p303 = scmp.eq.s32.totalorder %s24, 1
    %p304 = scmp.ne.s32.totalorder %s299, %s301
    %p305 = scmp.eq.s32.totalorder %s24, 0
    %p306 = por %p304, %p305
    %p307 = scmp.ne.s32.totalorder %s299, %s301
    %p308 = scmp.eq.s32.totalorder %s29, 1
    %p309 = por %p307, %p308
    %p310 = scmp.ne.s32.totalorder %s301, %s302
    %p311 = scmp.eq.s32.totalorder %s29, 0
    %p312 = por %p310, %p311
    %p313 = scmp.ne.s32.totalorder %s301, %s302
    %p314 = scmp.eq.s32.totalorder %s30, 1
    %p315 = por %p313, %p314
    %p317 = scmp.ne.s32.totalorder %s302, %s316
    %p318 = scmp.eq.s32.totalorder %s30, 0
    %p319 = por %p317, %p318
    %s321 = sadd.s32 %s320, 1
    %p324 = scmp.eq.s32.totalorder %s24, 1
    %p325 = scmp.ne.s32.totalorder %s320, %s322
    %p326 = scmp.eq.s32.totalorder %s24, 0
    %p327 = por %p325, %p326
    %p328 = scmp.ne.s32.totalorder %s320, %s322
    %p329 = scmp.eq.s32.totalorder %s29, 1
    %p330 = por %p328, %p329
    %p331 = scmp.ne.s32.totalorder %s322, %s323
    %p332 = scmp.eq.s32.totalorder %s29, 0
    %p333 = por %p331, %p332
    %p334 = scmp.ne.s32.totalorder %s322, %s323
    %p335 = scmp.eq.s32.totalorder %s30, 1
    %p336 = por %p334, %p335
    %p338 = scmp.ne.s32.totalorder %s323, %s337
    %p339 = scmp.eq.s32.totalorder %s30, 0
    %p340 = por %p338, %p339
    %s342 = sadd.s32 %s341, 1
    %p345 = scmp.eq.s32.totalorder %s24, 1
    %p346 = scmp.ne.s32.totalorder %s341, %s343
    %p347 = scmp.eq.s32.totalorder %s24, 0
    %p348 = por %p346, %p347
    %p349 = scmp.ne.s32.totalorder %s341, %s343
    %p350 = scmp.eq.s32.totalorder %s29, 1
    %p351 = por %p349, %p350
    %p352 = scmp.ne.s32.totalorder %s343, %s344
    %p353 = scmp.eq.s32.totalorder %s29, 0
    %p354 = por %p352, %p353
    %p355 = scmp.ne.s32.totalorder %s343, %s344
    %p356 = scmp.eq.s32.totalorder %s30, 1
    %p357 = por %p355, %p356
    %p359 = scmp.ne.s32.totalorder %s344, %s358
    %p360 = scmp.eq.s32.totalorder %s30, 0
    %p361 = por %p359, %p360
    %s363 = sadd.s32 %s362, 1
    %p366 = scmp.eq.s32.totalorder %s24, 1
    %p367 = scmp.ne.s32.totalorder %s362, %s364
    %p368 = scmp.eq.s32.totalorder %s24, 0
    %p369 = por %p367, %p368
    %p370 = scmp.ne.s32.totalorder %s362, %s364
    %p371 = scmp.eq.s32.totalorder %s29, 1
    %p372 = por %p370, %p371
    %p373 = scmp.ne.s32.totalorder %s364, %s365
    %p374 = scmp.eq.s32.totalorder %s29, 0
    %p375 = por %p373, %p374
    %p376 = scmp.ne.s32.totalorder %s364, %s365
    %p377 = scmp.eq.s32.totalorder %s30, 1
    %p378 = por %p376, %p377
    %p380 = scmp.ne.s32.totalorder %s365, %s379
    %p381 = scmp.eq.s32.totalorder %s30, 0
    %p382 = por %p380, %p381
    %s384 = sadd.s32 %s383, 1
    %p387 = scmp.eq.s32.totalorder %s24, 1
    %p388 = scmp.ne.s32.totalorder %s383, %s385
    %p389 = scmp.eq.s32.totalorder %s24, 0
    %p390 = por %p388, %p389
    %p391 = scmp.ne.s32.totalorder %s383, %s385
    %p392 = scmp.eq.s32.totalorder %s29, 1
    %p393 = por %p391, %p392
    %p394 = scmp.ne.s32.totalorder %s385, %s386
    %p395 = scmp.eq.s32.totalorder %s29, 0
    %p396 = por %p394, %p395
    %p397 = scmp.ne.s32.totalorder %s385, %s386
    %p398 = scmp.eq.s32.totalorder %s30, 1
    %p399 = por %p397, %p398
    %p401 = scmp.ne.s32.totalorder %s386, %s400
    %p402 = scmp.eq.s32.totalorder %s30, 0
    %p403 = por %p401, %p402
    %s405 = sadd.s32 %s404, 1
    %p408 = scmp.eq.s32.totalorder %s24, 1
    %p409 = scmp.ne.s32.totalorder %s404, %s406
    %p410 = scmp.eq.s32.totalorder %s24, 0
    %p411 = por %p409, %p410
    %p412 = scmp.ne.s32.totalorder %s404, %s406
    %p413 = scmp.eq.s32.totalorder %s29, 1
    %p414 = por %p412, %p413
    %p415 = scmp.ne.s32.totalorder %s406, %s407
    %p416 = scmp.eq.s32.totalorder %s29, 0
    %p417 = por %p415, %p416
    %p418 = scmp.ne.s32.totalorder %s406, %s407
    %p419 = scmp.eq.s32.totalorder %s30, 1
    %p420 = por %p418, %p419
    %p422 = scmp.ne.s32.totalorder %s407, %s421
    %p423 = scmp.eq.s32.totalorder %s30, 0
    %p424 = por %p422, %p423
    %s426 = sadd.s32 %s425, 1
    %p429 = scmp.eq.s32.totalorder %s24, 1
    %p430 = scmp.ne.s32.totalorder %s425, %s427
    %p431 = scmp.eq.s32.totalorder %s24, 0
    %p432 = por %p430, %p431
    %p433 = scmp.ne.s32.totalorder %s425, %s427
    %p434 = scmp.eq.s32.totalorder %s29, 1
    %p435 = por %p433, %p434
    %p436 = scmp.ne.s32.totalorder %s427, %s428
    %p437 = scmp.eq.s32.totalorder %s29, 0
    %p438 = por %p436, %p437
    %p439 = scmp.ne.s32.totalorder %s427, %s428
    %p440 = scmp.eq.s32.totalorder %s30, 1
    %p441 = por %p439, %p440
    %p443 = scmp.ne.s32.totalorder %s428, %s442
    %p444 = scmp.eq.s32.totalorder %s30, 0
    %p445 = por %p443, %p444
    %s446 = ssub.s32 %s31, %s43
    %p447 = scmp.eq.s32.totalorder %s446, 0
    %s449 = sadd.s32 %s448, 1
    %s450 = scalar_select %p447, %s448, %s449
    %p453 = pneg %p447
    %p454 = scmp.eq.s32.totalorder %s24, 1
    %p455 = por %p453, %p454
    %p456 = scmp.ne.s32.totalorder %s448, %s451
    %p457 = scmp.eq.s32.totalorder %s24, 0
    %p458 = por %p456, %p457
    %p459 = scmp.ne.s32.totalorder %s448, %s451
    %p460 = scmp.eq.s32.totalorder %s29, 1
    %p461 = por %p459, %p460
    %p462 = scmp.ne.s32.totalorder %s451, %s452
    %p463 = scmp.eq.s32.totalorder %s29, 0
    %p464 = por %p462, %p463
    %p465 = scmp.ne.s32.totalorder %s451, %s452
    %p466 = scmp.eq.s32.totalorder %s30, 1
    %p467 = por %p465, %p466
    %p469 = scmp.ne.s32.totalorder %s452, %s468
    %p470 = scmp.eq.s32.totalorder %s30, 0
    %p471 = por %p469, %p470
    %p472 = scmp.le.s32.totalorder 1, %s24
    %p473 = scmp.lt.s32.totalorder %s24, 3
    %p474 = pnand %p472, %p473
    %p475 = pneg %p474
    // Predicated region
    $region9: #{tpu_custom_call.1} parent=5 // pred_check
      _
    $region10: #{tpu_custom_call.1} parent=5 // pred_check_branch
      %477 = sbr.rel (%p474) target = $region12
    $region11: #{tpu_custom_call.1} parent=5 // pred_region
      %s478 = ssub.s32 %s24, 1
      // Predicated region
      $region13: #{tpu_custom_call.1} parent=11 // pred_check
        %p479 = pneg %p165
      $region14: #{tpu_custom_call.1} parent=11 // pred_check_branch
        %481 = sbr.rel (%p479) target = $region16
      $region15: #{tpu_custom_call.1} parent=11 // pred_region
        _
      $region16: #{tpu_custom_call.1} parent=11 // pred_fallthru
        _
      // Predicated region
      $region17: #{tpu_custom_call.1} parent=11 // pred_check
        %p482 = pneg %p186
      $region18: #{tpu_custom_call.1} parent=11 // pred_check_branch
        %484 = sbr.rel (%p482) target = $region20
      $region19: #{tpu_custom_call.1} parent=11 // pred_region
        _
      $region20: #{tpu_custom_call.1} parent=11 // pred_fallthru
        _
      // Predicated region
      $region21: #{tpu_custom_call.1} parent=11 // pred_check
        %p485 = pneg %p207
      $region22: #{tpu_custom_call.1} parent=11 // pred_check_branch
        %487 = sbr.rel (%p485) target = $region24
      $region23: #{tpu_custom_call.1} parent=11 // pred_region
        _
      $region24: #{tpu_custom_call.1} parent=11 // pred_fallthru
        _
      // Predicated region
      $region25: #{tpu_custom_call.1} parent=11 // pred_check
        %p488 = pneg %p228
      $region26: #{tpu_custom_call.1} parent=11 // pred_check_branch
        %490 = sbr.rel (%p488) target = $region28
      $region27: #{tpu_custom_call.1} parent=11 // pred_region
        _
      $region28: #{tpu_custom_call.1} parent=11 // pred_fallthru
        _
      // Predicated region
      $region29: #{tpu_custom_call.1} parent=11 // pred_check
        %p491 = pneg %p249
      $region30: #{tpu_custom_call.1} parent=11 // pred_check_branch
        %493 = sbr.rel (%p491) target = $region32
      $region31: #{tpu_custom_call.1} parent=11 // pred_region
        _
      $region32: #{tpu_custom_call.1} parent=11 // pred_fallthru
        _
      // Predicated region
      $region33: #{tpu_custom_call.1} parent=11 // pred_check
        %p494 = pneg %p270
      $region34: #{tpu_custom_call.1} parent=11 // pred_check_branch
        %496 = sbr.rel (%p494) target = $region36
      $region35: #{tpu_custom_call.1} parent=11 // pred_region
        _
      $region36: #{tpu_custom_call.1} parent=11 // pred_fallthru
        _
      // Predicated region
      $region37: #{tpu_custom_call.1} parent=11 // pred_check
        %p497 = pneg %p291
      $region38: #{tpu_custom_call.1} parent=11 // pred_check_branch
        %499 = sbr.rel (%p497) target = $region40
      $region39: #{tpu_custom_call.1} parent=11 // pred_region
        _
      $region40: #{tpu_custom_call.1} parent=11 // pred_fallthru
        _
      // Predicated region
      $region41: #{tpu_custom_call.1} parent=11 // pred_check
        %p500 = pneg %p312
      $region42: #{tpu_custom_call.1} parent=11 // pred_check_branch
        %502 = sbr.rel (%p500) target = $region44
      $region43: #{tpu_custom_call.1} parent=11 // pred_region
        _
      $region44: #{tpu_custom_call.1} parent=11 // pred_fallthru
        _
      // Predicated region
      $region45: #{tpu_custom_call.1} parent=11 // pred_check
        %p503 = pneg %p333
      $region46: #{tpu_custom_call.1} parent=11 // pred_check_branch
        %505 = sbr.rel (%p503) target = $region48
      $region47: #{tpu_custom_call.1} parent=11 // pred_region
        _
      $region48: #{tpu_custom_call.1} parent=11 // pred_fallthru
        _
      // Predicated region
      $region49: #{tpu_custom_call.1} parent=11 // pred_check
        %p506 = pneg %p354
      $region50: #{tpu_custom_call.1} parent=11 // pred_check_branch
        %508 = sbr.rel (%p506) target = $region52
      $region51: #{tpu_custom_call.1} parent=11 // pred_region
        _
      $region52: #{tpu_custom_call.1} parent=11 // pred_fallthru
        _
      // Predicated region
      $region53: #{tpu_custom_call.1} parent=11 // pred_check
        %p509 = pneg %p375
      $region54: #{tpu_custom_call.1} parent=11 // pred_check_branch
        %511 = sbr.rel (%p509) target = $region56
      $region55: #{tpu_custom_call.1} parent=11 // pred_region
        _
      $region56: #{tpu_custom_call.1} parent=11 // pred_fallthru
        _
      // Predicated region
      $region57: #{tpu_custom_call.1} parent=11 // pred_check
        %p512 = pneg %p396
      $region58: #{tpu_custom_call.1} parent=11 // pred_check_branch
        %514 = sbr.rel (%p512) target = $region60
      $region59: #{tpu_custom_call.1} parent=11 // pred_region
        _
      $region60: #{tpu_custom_call.1} parent=11 // pred_fallthru
        _
      // Predicated region
      $region61: #{tpu_custom_call.1} parent=11 // pred_check
        %p515 = pneg %p417
      $region62: #{tpu_custom_call.1} parent=11 // pred_check_branch
        %517 = sbr.rel (%p515) target = $region64
      $region63: #{tpu_custom_call.1} parent=11 // pred_region
        _
      $region64: #{tpu_custom_call.1} parent=11 // pred_fallthru
        _
      // Predicated region
      $region65: #{tpu_custom_call.1} parent=11 // pred_check
        %p518 = pneg %p438
      $region66: #{tpu_custom_call.1} parent=11 // pred_check_branch
        %520 = sbr.rel (%p518) target = $region68
      $region67: #{tpu_custom_call.1} parent=11 // pred_region
        _
      $region68: #{tpu_custom_call.1} parent=11 // pred_fallthru
        _
    $region12: #{tpu_custom_call.1} parent=5 // pred_fallthru
      _
    %p521 = scmp.lt.s32.totalorder %s24, 2
    // Predicated region
    $region69: #{tpu_custom_call.1} parent=5 // pred_check
      %p522 = pneg %p521
    $region70: #{tpu_custom_call.1} parent=5 // pred_check_branch
      %524 = sbr.rel (%p522) target = $region72
    $region71: #{tpu_custom_call.1} parent=5 // pred_region
      // Predicated region
      $region73: #{tpu_custom_call.1} parent=71 // pred_check
        %p525 = pneg %p56
      $region74: #{tpu_custom_call.1} parent=71 // pred_check_branch
        %527 = sbr.rel (%p525) target = $region76
      $region75: #{tpu_custom_call.1} parent=71 // pred_region
        %p528 = scmp.lt.s32.totalorder %s31, 1
        %s529 = scalar_select %p528, %s31, 1
        %s530 = smul.addr %s529, 8
        %s531 = smul.addr %s530, 8
        %s532 = scalar_lea.vmem %s0, %s531
      $region76: #{tpu_custom_call.1} parent=71 // pred_fallthru
        _
      // Predicated region
      $region77: #{tpu_custom_call.1} parent=71 // pred_check
        %p533 = pneg %p82
      $region78: #{tpu_custom_call.1} parent=71 // pred_check_branch
        %535 = sbr.rel (%p533) target = $region80
      $region79: #{tpu_custom_call.1} parent=71 // pred_region
        %p536 = scmp.lt.s32.totalorder %s31, 1
        %s537 = scalar_select %p536, %s31, 1
        %s538 = smul.addr %s537, 8
        %s539 = smul.addr %s538, 8
        %s540 = scalar_lea.vmem %s1, %s539
      $region80: #{tpu_custom_call.1} parent=71 // pred_fallthru
        _
      // Predicated region
      $region81: #{tpu_custom_call.1} parent=71 // pred_check
        %p541 = pneg %p110
      $region82: #{tpu_custom_call.1} parent=71 // pred_check_branch
        %543 = sbr.rel (%p541) target = $region84
      $region83: #{tpu_custom_call.1} parent=71 // pred_region
        %s544 = smul.u32 2, %s32
        %p545 = scmp.lt.s32.totalorder %s31, 1
        %s546 = scalar_select %p545, %s31, 1
        %p547 = scmp.lt.s32.totalorder %s544, 1
        %s548 = scalar_select %p547, %s544, 1
        %s549 = smul.addr %s546, 16
        %s550 = sadd.s32 %s548, %s549
        %s551 = smul.addr %s550, 4
        %s552 = scalar_lea.vmem %s2, %s551
        %s553 = smul.u32 2, %s32
      $region84: #{tpu_custom_call.1} parent=71 // pred_fallthru
        _
      // Predicated region
      $region85: #{tpu_custom_call.1} parent=71 // pred_check
        %p554 = pneg %p138
      $region86: #{tpu_custom_call.1} parent=71 // pred_check_branch
        %556 = sbr.rel (%p554) target = $region88
      $region87: #{tpu_custom_call.1} parent=71 // pred_region
        %s557 = smul.u32 2, %s32
        %p558 = scmp.lt.s32.totalorder %s31, 1
        %s559 = scalar_select %p558, %s31, 1
        %p560 = scmp.lt.s32.totalorder %s557, 1
        %s561 = scalar_select %p560, %s557, 1
        %s562 = smul.addr %s559, 16
        %s563 = sadd.s32 %s561, %s562
        %s564 = smul.addr %s563, 4
        %s565 = scalar_lea.vmem %s3, %s564
        %s566 = smul.u32 2, %s32
      $region88: #{tpu_custom_call.1} parent=71 // pred_fallthru
        _
    $region72: #{tpu_custom_call.1} parent=5 // pred_fallthru
      _
    %p567 = scmp.le.s32.totalorder 1, %s24
    %p568 = scmp.lt.s32.totalorder %s24, 3
    %p569 = pnand %p567, %p568
    %p570 = pneg %p569
    // Predicated region
    $region89: #{tpu_custom_call.1} parent=5 // pred_check
      _
    $region90: #{tpu_custom_call.1} parent=5 // pred_check_branch
      %572 = sbr.rel (%p569) target = $region92
    $region91: #{tpu_custom_call.1} parent=5 // pred_region
      %s573 = ssub.s32 %s24, 1
      %p574 = scmp.lt.s32.totalorder %s33, 1
      %s575 = scalar_select %p574, %s33, 1
      %s576 = smul.addr %s575, 8
      %s577 = smul.addr %s576, 8
      %s578 = scalar_lea.vmem %s0, %s577
      %p579 = pneg %p62
      %p580 = pneg %p59
      %p581 = scmp.lt.s32.totalorder %s33, 1
      %s582 = scalar_select %p581, %s33, 1
      %s583 = smul.addr %s582, 8
      %s584 = smul.addr %s583, 8
      %s585 = scalar_lea.vmem %s1, %s584
      %p586 = pneg %p88
      %p587 = pneg %p85
      %s588 = smul.u32 2, %s34
      %p589 = scmp.lt.s32.totalorder %s33, 1
      %s590 = scalar_select %p589, %s33, 1
      %p591 = scmp.lt.s32.totalorder %s588, 1
      %s592 = scalar_select %p591, %s588, 1
      %s593 = smul.addr %s590, 16
      %s594 = sadd.s32 %s592, %s593
      %s595 = smul.addr %s594, 4
      %s596 = scalar_lea.vmem %s2, %s595
      %p597 = pneg %p116
      %p598 = pneg %p113
      %s599 = smul.u32 2, %s34
      %p600 = scmp.lt.s32.totalorder %s33, 1
      %s601 = scalar_select %p600, %s33, 1
      %p602 = scmp.lt.s32.totalorder %s599, 1
      %s603 = scalar_select %p602, %s599, 1
      %s604 = smul.addr %s601, 16
      %s605 = sadd.s32 %s603, %s604
      %s606 = smul.addr %s605, 4
      %s607 = scalar_lea.vmem %s3, %s606
      %p608 = pneg %p144
      %p609 = pneg %p141
      %p610 = pneg %p165
      %p611 = pneg %p162
      %p612 = pneg %p186
      %p613 = pneg %p183
      %p614 = pneg %p207
      %p615 = pneg %p204
      %p616 = pneg %p228
      %p617 = pneg %p225
      %p618 = pneg %p249
      %p619 = pneg %p246
      %p620 = pneg %p270
      %p621 = pneg %p267
      %p622 = pneg %p291
      %p623 = pneg %p288
      %p624 = pneg %p312
      %p625 = pneg %p309
      %p626 = pneg %p333
      %p627 = pneg %p330
      %p628 = pneg %p354
      %p629 = pneg %p351
      %p630 = pneg %p375
      %p631 = pneg %p372
      %p632 = pneg %p396
      %p633 = pneg %p393
      %p634 = pneg %p417
      %p635 = pneg %p414
      %p636 = pneg %p438
      %p637 = pneg %p435
      %p638 = pneg %p464
      %p639 = pneg %p461
      %p640 = scmp.lt.s32.totalorder %s33, 1
      %s641 = scalar_select %p640, %s33, 1
      %s642 = smul.addr %s641, 8
      %s643 = smul.addr %s642, 8
      %s644 = scalar_lea.vmem %s18, %s643
      %p645 = scmp.lt.s32.totalorder %s33, 1
      %s646 = scalar_select %p645, %s33, 1
      %s647 = smul.addr %s646, 8
      %s648 = smul.addr %s647, 8
      %s649 = scalar_lea.vmem %s0, %s648
      %p650 = scmp.lt.s32.totalorder %s33, 1
      %s651 = scalar_select %p650, %s33, 1
      %s652 = smul.addr %s651, 8
      %s653 = smul.addr %s652, 8
      %s654 = scalar_lea.vmem %s1, %s653
      %s655 = smul.u32 2, %s34
      %p656 = scmp.lt.s32.totalorder %s33, 1
      %s657 = scalar_select %p656, %s33, 1
      %p658 = scmp.lt.s32.totalorder %s655, 1
      %s659 = scalar_select %p658, %s655, 1
      %s660 = smul.addr %s657, 16
      %s661 = sadd.s32 %s659, %s660
      %s662 = smul.addr %s661, 4
      %s663 = scalar_lea.vmem %s2, %s662
      %s664 = smul.u32 2, %s34
      %s665 = smul.u32 2, %s34
      %p666 = scmp.lt.s32.totalorder %s33, 1
      %s667 = scalar_select %p666, %s33, 1
      %p668 = scmp.lt.s32.totalorder %s665, 1
      %s669 = scalar_select %p668, %s665, 1
      %s670 = smul.addr %s667, 16
      %s671 = sadd.s32 %s669, %s670
      %s672 = smul.addr %s671, 4
      %s673 = scalar_lea.vmem %s3, %s672
      %s674 = smul.u32 2, %s34
      %p675 = scmp.lt.s32.totalorder %s33, 1
      %s676 = scalar_select %p675, %s33, 1
      %s677 = smul.addr %s676, 8
      %s678 = smul.addr %s677, 8
      %s679 = scalar_lea.vmem %s18, %s678
      %p681 = scmp.eq.s32.totalorder %s34, 0
      // Predicated region
      $region93: #{tpu_custom_call.1} parent=91 // pred_check
        %p682 = pneg %p681
      $region94: #{tpu_custom_call.1} parent=91 // pred_check_branch
        %684 = sbr.rel (%p682) target = $region96
      $region95: #{tpu_custom_call.1} parent=91 // pred_region
        %v685 = vld [vmem:[%s649] sm:$0xff]
        %v686 = vld [vmem:[%s649 + $0x8] sm:$0xff]
        %v687 = vld [vmem:[%s649 + $0x10] sm:$0xff]
        %v688 = vld [vmem:[%s649 + $0x18] sm:$0xff]
        %v689 = vld [vmem:[%s649 + $0x20] sm:$0xff]
        %v690 = vld [vmem:[%s649 + $0x28] sm:$0xff]
        %v691 = vld [vmem:[%s649 + $0x30] sm:$0xff]
        %v692 = vld [vmem:[%s649 + $0x38] sm:$0xff]
        %v693 = vld [vmem:[%s654] sm:$0xff]
        %v694 = vld [vmem:[%s654 + $0x8] sm:$0xff]
        %v695 = vld [vmem:[%s654 + $0x10] sm:$0xff]
        %v696 = vld [vmem:[%s654 + $0x18] sm:$0xff]
        %v697 = vld [vmem:[%s654 + $0x20] sm:$0xff]
        %v698 = vld [vmem:[%s654 + $0x28] sm:$0xff]
        %v699 = vld [vmem:[%s654 + $0x30] sm:$0xff]
        %v700 = vld [vmem:[%s654 + $0x38] sm:$0xff]
        %v701 = vadd.f32 %v685, %v693
        %v702 = vadd.f32 %v686, %v694
        %v703 = vadd.f32 %v687, %v695
        %v704 = vadd.f32 %v688, %v696
        %v705 = vadd.f32 %v689, %v697
        %v706 = vadd.f32 %v690, %v698
        %v707 = vadd.f32 %v691, %v699
        %v708 = vadd.f32 %v692, %v700
        %v709 = vpack.c.bf16 %v702, %v701
        %v710 = vpack.c.bf16 %v704, %v703
        %v711 = vpack.c.bf16 %v706, %v705
        %v712 = vpack.c.bf16 %v708, %v707
        %v713 = vld [vmem:[%s4] sm:$0xf]
        %v714 = vld [vmem:[%s4 + $0x4] sm:$0xf]
        %v715 = vld [vmem:[%s4 + $0x8] sm:$0xf]
        %v716 = vld [vmem:[%s4 + $0xc] sm:$0xf]
        %v717 = vld [vmem:[%s4 + $0x10] sm:$0xf]
        %v718 = vld [vmem:[%s4 + $0x14] sm:$0xf]
        %v719 = vld [vmem:[%s4 + $0x18] sm:$0xf]
        %v720 = vld [vmem:[%s4 + $0x1c] sm:$0xf]
        %v721 = vld [vmem:[%s4 + $0x20] sm:$0xf]
        %v722 = vld [vmem:[%s4 + $0x24] sm:$0xf]
        %v723 = vld [vmem:[%s4 + $0x28] sm:$0xf]
        %v724 = vld [vmem:[%s4 + $0x2c] sm:$0xf]
        %v725 = vld [vmem:[%s4 + $0x30] sm:$0xf]
        %v726 = vld [vmem:[%s4 + $0x34] sm:$0xf]
        %v727 = vld [vmem:[%s4 + $0x38] sm:$0xf]
        %v728 = vld [vmem:[%s4 + $0x3c] sm:$0xf]
        %v729 = vld [vmem:[%s5] sm:$0xff]
        %v730 = vld [vmem:[%s5 + $0x8] sm:$0xff]
        %v731 = vld [vmem:[%s5 + $0x10] sm:$0xff]
        %v732 = vld [vmem:[%s5 + $0x18] sm:$0xff]
        %v733 = vld [vmem:[%s5 + $0x20] sm:$0xff]
        %v734 = vld [vmem:[%s5 + $0x28] sm:$0xff]
        %v735 = vld [vmem:[%s5 + $0x30] sm:$0xff]
        %v736 = vld [vmem:[%s5 + $0x38] sm:$0xff]
        %v737 = vld [vmem:[%s5 + $0x40] sm:$0xff]
        %v738 = vld [vmem:[%s5 + $0x48] sm:$0xff]
        %v739 = vld [vmem:[%s5 + $0x50] sm:$0xff]
        %v740 = vld [vmem:[%s5 + $0x58] sm:$0xff]
        %v741 = vld [vmem:[%s5 + $0x60] sm:$0xff]
        %v742 = vld [vmem:[%s5 + $0x68] sm:$0xff]
        %v743 = vld [vmem:[%s5 + $0x70] sm:$0xff]
        %v744 = vld [vmem:[%s5 + $0x78] sm:$0xff]
        %746 = vset.pattern.permute.xlu0 0
        %747 = vperm.xlu0 %746, %v729
        %v748 = vpop.permute.xlu0 %747
        %751 = vset.pattern.permute.xlu0 0
        %752 = vperm.xlu0 %751, %v730
        %v753 = vpop.permute.xlu0 %752
        %756 = vset.pattern.permute.xlu0 0
        %757 = vperm.xlu0 %756, %v731
        %v758 = vpop.permute.xlu0 %757
        %761 = vset.pattern.permute.xlu0 0
        %762 = vperm.xlu0 %761, %v732
        %v763 = vpop.permute.xlu0 %762
        %766 = vset.pattern.permute.xlu0 0
        %767 = vperm.xlu0 %766, %v733
        %v768 = vpop.permute.xlu0 %767
        %771 = vset.pattern.permute.xlu0 0
        %772 = vperm.xlu0 %771, %v734
        %v773 = vpop.permute.xlu0 %772
        %776 = vset.pattern.permute.xlu0 0
        %777 = vperm.xlu0 %776, %v735
        %v778 = vpop.permute.xlu0 %777
        %781 = vset.pattern.permute.xlu0 0
        %782 = vperm.xlu0 %781, %v736
        %v783 = vpop.permute.xlu0 %782
        %786 = vset.pattern.permute.xlu0 0
        %787 = vperm.xlu0 %786, %v737
        %v788 = vpop.permute.xlu0 %787
        %791 = vset.pattern.permute.xlu0 0
        %792 = vperm.xlu0 %791, %v738
        %v793 = vpop.permute.xlu0 %792
        %796 = vset.pattern.permute.xlu0 0
        %797 = vperm.xlu0 %796, %v739
        %v798 = vpop.permute.xlu0 %797
        %801 = vset.pattern.permute.xlu0 0
        %802 = vperm.xlu0 %801, %v740
        %v803 = vpop.permute.xlu0 %802
        %806 = vset.pattern.permute.xlu0 0
        %807 = vperm.xlu0 %806, %v741
        %v808 = vpop.permute.xlu0 %807
        %811 = vset.pattern.permute.xlu0 0
        %812 = vperm.xlu0 %811, %v742
        %v813 = vpop.permute.xlu0 %812
        %816 = vset.pattern.permute.xlu0 0
        %817 = vperm.xlu0 %816, %v743
        %v818 = vpop.permute.xlu0 %817
        %821 = vset.pattern.permute.xlu0 0
        %822 = vperm.xlu0 %821, %v744
        %v823 = vpop.permute.xlu0 %822
        %v841 = vunpack.c.l.b16 %v713
        %v842 = vunpack.c.l.b16 %v714
        %v843 = vunpack.c.l.b16 %v715
        %v844 = vunpack.c.l.b16 %v716
        %v845 = vunpack.c.l.b16 %v717
        %v846 = vunpack.c.l.b16 %v718
        %v847 = vunpack.c.l.b16 %v719
        %v848 = vunpack.c.l.b16 %v720
        %v849 = vunpack.c.l.b16 %v721
        %v850 = vunpack.c.l.b16 %v722
        %v851 = vunpack.c.l.b16 %v723
        %v852 = vunpack.c.l.b16 %v724
        %v853 = vunpack.c.l.b16 %v725
        %v854 = vunpack.c.l.b16 %v726
        %v855 = vunpack.c.l.b16 %v727
        %v856 = vunpack.c.l.b16 %v728
        %v857 = vpack.c.b16 %v842, %v841
        %v858 = vpack.c.b16 %v844, %v843
        %v859 = vpack.c.b16 %v846, %v845
        %v860 = vpack.c.b16 %v848, %v847
        %v861 = vpack.c.b16 %v850, %v849
        %v862 = vpack.c.b16 %v852, %v851
        %v863 = vpack.c.b16 %v854, %v853
        %v864 = vpack.c.b16 %v856, %v855
        %vm865 = vcmask 523264
        %v867 = vsel %vm865, %v857, 0
        %v870 = vsel %vm865, %v858, 0
        %v873 = vsel %vm865, %v859, 0
        %v876 = vsel %vm865, %v860, 0
        %v879 = vsel %vm865, %v861, 0
        %v882 = vsel %vm865, %v862, 0
        %v885 = vsel %vm865, %v863, 0
        %v888 = vsel %vm865, %v864, 0
        %890 = vmatpush.bf16.msra.mxu0 0
        %891 = vmatpush.bf16.msra.mxu0 0
        %892 = vmatpush.bf16.msra.mxu0 0
        %893 = vmatpush.bf16.msra.mxu0 0
        %894 = vmatpush.bf16.msra.mxu0 %v712
        %895 = vmatpush.bf16.msra.mxu0 %v711
        %896 = vmatpush.bf16.msra.mxu0 %v710
        %897 = vmatpush.bf16.msra.mxu0 %v709
        %898 = vmatmul.bf16.gmra.mxu0 %v867
        %v899 = vpop.f32.mrf.mxu0
        %v900 = vadd.f32 %v748, %v899
        %v901 = vpop.f32.mrf.mxu0
        %v902 = vadd.f32 %v753, %v901
        %903 = vmatmul.bf16.gmra.mxu0 %v870
        %v904 = vpop.f32.mrf.mxu0
        %v905 = vadd.f32 %v758, %v904
        %v906 = vpop.f32.mrf.mxu0
        %v907 = vadd.f32 %v763, %v906
        %908 = vmatmul.bf16.gmra.mxu0 %v873
        %v909 = vpop.f32.mrf.mxu0
        %v910 = vadd.f32 %v768, %v909
        %v911 = vpop.f32.mrf.mxu0
        %v912 = vadd.f32 %v773, %v911
        %913 = vmatmul.bf16.gmra.mxu0 %v876
        %v914 = vpop.f32.mrf.mxu0
        %v915 = vadd.f32 %v778, %v914
        %v916 = vpop.f32.mrf.mxu0
        %v917 = vadd.f32 %v783, %v916
        %918 = vmatmul.bf16.gmra.mxu0 %v879
        %v919 = vpop.f32.mrf.mxu0
        %v920 = vadd.f32 %v788, %v919
        %v921 = vpop.f32.mrf.mxu0
        %v922 = vadd.f32 %v793, %v921
        %923 = vmatmul.bf16.gmra.mxu0 %v882
        %v924 = vpop.f32.mrf.mxu0
        %v925 = vadd.f32 %v798, %v924
        %v926 = vpop.f32.mrf.mxu0
        %v927 = vadd.f32 %v803, %v926
        %928 = vmatmul.bf16.gmra.mxu0 %v885
        %v929 = vpop.f32.mrf.mxu0
        %v930 = vadd.f32 %v808, %v929
        %v931 = vpop.f32.mrf.mxu0
        %v932 = vadd.f32 %v813, %v931
        %933 = vmatmul.bf16.gmra.mxu0 %v888
        %v934 = vpop.f32.mrf.mxu0
        %v935 = vadd.f32 %v818, %v934
        %v936 = vpop.f32.mrf.mxu0
        %v937 = vadd.f32 %v823, %v936
        %938 = vdwg.mxu0
        %v939 = vld [vmem:[%s4 + $0x40] sm:$0xf]
        %v940 = vld [vmem:[%s4 + $0x44] sm:$0xf]
        %v941 = vld [vmem:[%s4 + $0x48] sm:$0xf]
        %v942 = vld [vmem:[%s4 + $0x4c] sm:$0xf]
        %v943 = vld [vmem:[%s4 + $0x50] sm:$0xf]
        %v944 = vld [vmem:[%s4 + $0x54] sm:$0xf]
        %v945 = vld [vmem:[%s4 + $0x58] sm:$0xf]
        %v946 = vld [vmem:[%s4 + $0x5c] sm:$0xf]
        %v947 = vpack.c.bf16 %v686, %v685
        %v948 = vpack.c.bf16 %v688, %v687
        %v949 = vpack.c.bf16 %v690, %v689
        %v950 = vpack.c.bf16 %v692, %v691
        %v951 = vld [vmem:[%s5 + $0x80] sm:$0xff]
        %v952 = vld [vmem:[%s5 + $0x88] sm:$0xff]
        %v953 = vld [vmem:[%s5 + $0x90] sm:$0xff]
        %v954 = vld [vmem:[%s5 + $0x98] sm:$0xff]
        %v955 = vld [vmem:[%s5 + $0xa0] sm:$0xff]
        %v956 = vld [vmem:[%s5 + $0xa8] sm:$0xff]
        %v957 = vld [vmem:[%s5 + $0xb0] sm:$0xff]
        %v958 = vld [vmem:[%s5 + $0xb8] sm:$0xff]
        %960 = vset.pattern.permute.xlu0 0
        %961 = vperm.xlu0 %960, %v951
        %v962 = vpop.permute.xlu0 %961
        %965 = vset.pattern.permute.xlu0 0
        %966 = vperm.xlu0 %965, %v952
        %v967 = vpop.permute.xlu0 %966
        %970 = vset.pattern.permute.xlu0 0
        %971 = vperm.xlu0 %970, %v953
        %v972 = vpop.permute.xlu0 %971
        %975 = vset.pattern.permute.xlu0 0
        %976 = vperm.xlu0 %975, %v954
        %v977 = vpop.permute.xlu0 %976
        %980 = vset.pattern.permute.xlu0 0
        %981 = vperm.xlu0 %980, %v955
        %v982 = vpop.permute.xlu0 %981
        %985 = vset.pattern.permute.xlu0 0
        %986 = vperm.xlu0 %985, %v956
        %v987 = vpop.permute.xlu0 %986
        %990 = vset.pattern.permute.xlu0 0
        %991 = vperm.xlu0 %990, %v957
        %v992 = vpop.permute.xlu0 %991
        %995 = vset.pattern.permute.xlu0 0
        %996 = vperm.xlu0 %995, %v958
        %v997 = vpop.permute.xlu0 %996
        %v1007 = vunpack.c.l.b16 %v939
        %v1008 = vunpack.c.l.b16 %v940
        %v1009 = vunpack.c.l.b16 %v941
        %v1010 = vunpack.c.l.b16 %v942
        %v1011 = vunpack.c.l.b16 %v943
        %v1012 = vunpack.c.l.b16 %v944
        %v1013 = vunpack.c.l.b16 %v945
        %v1014 = vunpack.c.l.b16 %v946
        %v1015 = vpack.c.b16 %v1008, %v1007
        %v1016 = vpack.c.b16 %v1010, %v1009
        %v1017 = vpack.c.b16 %v1012, %v1011
        %v1018 = vpack.c.b16 %v1014, %v1013
        %v1020 = vsel %vm865, %v1015, 0
        %v1023 = vsel %vm865, %v1016, 0
        %v1026 = vsel %vm865, %v1017, 0
        %v1029 = vsel %vm865, %v1018, 0
        %1031 = vmatpush.bf16.msra.mxu0 0
        %1032 = vmatpush.bf16.msra.mxu0 0
        %1033 = vmatpush.bf16.msra.mxu0 0
        %1034 = vmatpush.bf16.msra.mxu0 0
        %1035 = vmatpush.bf16.msra.mxu0 %v950
        %1036 = vmatpush.bf16.msra.mxu0 %v949
        %1037 = vmatpush.bf16.msra.mxu0 %v948
        %1038 = vmatpush.bf16.msra.mxu0 %v947
        %1039 = vmatmul.bf16.gmra.mxu0 %v1020
        %v1040 = vpop.f32.mrf.mxu0
        %v1041 = vadd.f32 %v962, %v1040
        %v1042 = vpop.f32.mrf.mxu0
        %v1043 = vadd.f32 %v967, %v1042
        %1044 = vmatmul.bf16.gmra.mxu0 %v1023
        %v1045 = vpop.f32.mrf.mxu0
        %v1046 = vadd.f32 %v972, %v1045
        %v1047 = vpop.f32.mrf.mxu0
        %v1048 = vadd.f32 %v977, %v1047
        %1049 = vmatmul.bf16.gmra.mxu0 %v1026
        %v1050 = vpop.f32.mrf.mxu0
        %v1051 = vadd.f32 %v982, %v1050
        %v1052 = vpop.f32.mrf.mxu0
        %v1053 = vadd.f32 %v987, %v1052
        %1054 = vmatmul.bf16.gmra.mxu0 %v1029
        %v1055 = vpop.f32.mrf.mxu0
        %v1056 = vadd.f32 %v992, %v1055
        %v1057 = vpop.f32.mrf.mxu0
        %v1058 = vadd.f32 %v997, %v1057
        %1059 = vdwg.mxu0
        %1060 = vxpose.xlu0.b32.start [1/16] %v900, 128
        %1061 = vxpose.xlu0.b32.cont [2/16] %v902, 128
        %1062 = vxpose.xlu0.b32.cont [3/16] 0.0, 128
        %1063 = vxpose.xlu0.b32.cont [4/16] 0.0, 128
        %1064 = vxpose.xlu0.b32.cont [5/16] 0.0, 128
        %1065 = vxpose.xlu0.b32.cont [6/16] 0.0, 128
        %1066 = vxpose.xlu0.b32.cont [7/16] 0.0, 128
        %1067 = vxpose.xlu0.b32.cont [8/16] 0.0, 128
        %1068 = vxpose.xlu0.b32.cont [9/16] 0.0, 128
        %1069 = vxpose.xlu0.b32.cont [10/16] 0.0, 128
        %1070 = vxpose.xlu0.b32.cont [11/16] 0.0, 128
        %1071 = vxpose.xlu0.b32.cont [12/16] 0.0, 128
        %1072 = vxpose.xlu0.b32.cont [13/16] 0.0, 128
        %1073 = vxpose.xlu0.b32.cont [14/16] 0.0, 128
        %1074 = vxpose.xlu0.b32.cont [15/16] 0.0, 128
        %1075 = vxpose.xlu0.b32.end [16/16] 0.0, 128
        %v1076 = vpop.trf.xlu0
        %v1077 = vpop.trf.xlu0
        %v1078 = vpop.trf.xlu0
        %v1079 = vpop.trf.xlu0
        %v1080 = vpop.trf.xlu0
        %v1081 = vpop.trf.xlu0
        %v1082 = vpop.trf.xlu0
        %v1083 = vpop.trf.xlu0
        %v1084 = vpop.trf.xlu0
        %v1085 = vpop.trf.xlu0
        %v1086 = vpop.trf.xlu0
        %v1087 = vpop.trf.xlu0
        %v1088 = vpop.trf.xlu0
        %v1089 = vpop.trf.xlu0
        %v1090 = vpop.trf.xlu0
        %v1091 = vpop.trf.xlu0
        %1092 = vxpose.xlu0.b32.start [1/16] %v905, 128
        %1093 = vxpose.xlu0.b32.cont [2/16] %v907, 128
        %1094 = vxpose.xlu0.b32.cont [3/16] 0.0, 128
        %1095 = vxpose.xlu0.b32.cont [4/16] 0.0, 128
        %1096 = vxpose.xlu0.b32.cont [5/16] 0.0, 128
        %1097 = vxpose.xlu0.b32.cont [6/16] 0.0, 128
        %1098 = vxpose.xlu0.b32.cont [7/16] 0.0, 128
        %1099 = vxpose.xlu0.b32.cont [8/16] 0.0, 128
        %1100 = vxpose.xlu0.b32.cont [9/16] 0.0, 128
        %1101 = vxpose.xlu0.b32.cont [10/16] 0.0, 128
        %1102 = vxpose.xlu0.b32.cont [11/16] 0.0, 128
        %1103 = vxpose.xlu0.b32.cont [12/16] 0.0, 128
        %1104 = vxpose.xlu0.b32.cont [13/16] 0.0, 128
        %1105 = vxpose.xlu0.b32.cont [14/16] 0.0, 128
        %1106 = vxpose.xlu0.b32.cont [15/16] 0.0, 128
        %1107 = vxpose.xlu0.b32.end [16/16] 0.0, 128
        %v1108 = vpop.trf.xlu0
        %v1109 = vpop.trf.xlu0
        %v1110 = vpop.trf.xlu0
        %v1111 = vpop.trf.xlu0
        %v1112 = vpop.trf.xlu0
        %v1113 = vpop.trf.xlu0
        %v1114 = vpop.trf.xlu0
        %v1115 = vpop.trf.xlu0
        %v1116 = vpop.trf.xlu0
        %v1117 = vpop.trf.xlu0
        %v1118 = vpop.trf.xlu0
        %v1119 = vpop.trf.xlu0
        %v1120 = vpop.trf.xlu0
        %v1121 = vpop.trf.xlu0
        %v1122 = vpop.trf.xlu0
        %v1123 = vpop.trf.xlu0
        %1124 = vxpose.xlu0.b32.start [1/16] %v910, 128
        %1125 = vxpose.xlu0.b32.cont [2/16] %v912, 128
        %1126 = vxpose.xlu0.b32.cont [3/16] 0.0, 128
        %1127 = vxpose.xlu0.b32.cont [4/16] 0.0, 128
        %1128 = vxpose.xlu0.b32.cont [5/16] 0.0, 128
        %1129 = vxpose.xlu0.b32.cont [6/16] 0.0, 128
        %1130 = vxpose.xlu0.b32.cont [7/16] 0.0, 128
        %1131 = vxpose.xlu0.b32.cont [8/16] 0.0, 128
        %1132 = vxpose.xlu0.b32.cont [9/16] 0.0, 128
        %1133 = vxpose.xlu0.b32.cont [10/16] 0.0, 128
        %1134 = vxpose.xlu0.b32.cont [11/16] 0.0, 128
        %1135 = vxpose.xlu0.b32.cont [12/16] 0.0, 128
        %1136 = vxpose.xlu0.b32.cont [13/16] 0.0, 128
        %1137 = vxpose.xlu0.b32.cont [14/16] 0.0, 128
        %1138 = vxpose.xlu0.b32.cont [15/16] 0.0, 128
        %1139 = vxpose.xlu0.b32.end [16/16] 0.0, 128
        %v1140 = vpop.trf.xlu0
        %v1141 = vpop.trf.xlu0
        %v1142 = vpop.trf.xlu0
        %v1143 = vpop.trf.xlu0
        %v1144 = vpop.trf.xlu0
        %v1145 = vpop.trf.xlu0
        %v1146 = vpop.trf.xlu0
        %v1147 = vpop.trf.xlu0
        %v1148 = vpop.trf.xlu0
        %v1149 = vpop.trf.xlu0
        %v1150 = vpop.trf.xlu0
        %v1151 = vpop.trf.xlu0
        %v1152 = vpop.trf.xlu0
        %v1153 = vpop.trf.xlu0
        %v1154 = vpop.trf.xlu0
        %v1155 = vpop.trf.xlu0
        %1156 = vxpose.xlu0.b32.start [1/16] %v915, 128
        %1157 = vxpose.xlu0.b32.cont [2/16] %v917, 128
        %1158 = vxpose.xlu0.b32.cont [3/16] 0.0, 128
        %1159 = vxpose.xlu0.b32.cont [4/16] 0.0, 128
        %1160 = vxpose.xlu0.b32.cont [5/16] 0.0, 128
        %1161 = vxpose.xlu0.b32.cont [6/16] 0.0, 128
        %1162 = vxpose.xlu0.b32.cont [7/16] 0.0, 128
        %1163 = vxpose.xlu0.b32.cont [8/16] 0.0, 128
        %1164 = vxpose.xlu0.b32.cont [9/16] 0.0, 128
        %1165 = vxpose.xlu0.b32.cont [10/16] 0.0, 128
        %1166 = vxpose.xlu0.b32.cont [11/16] 0.0, 128
        %1167 = vxpose.xlu0.b32.cont [12/16] 0.0, 128
        %1168 = vxpose.xlu0.b32.cont [13/16] 0.0, 128
        %1169 = vxpose.xlu0.b32.cont [14/16] 0.0, 128
        %1170 = vxpose.xlu0.b32.cont [15/16] 0.0, 128
        %1171 = vxpose.xlu0.b32.end [16/16] 0.0, 128
        %v1172 = vpop.trf.xlu0
        %v1173 = vpop.trf.xlu0
        %v1174 = vpop.trf.xlu0
        %v1175 = vpop.trf.xlu0
        %v1176 = vpop.trf.xlu0
        %v1177 = vpop.trf.xlu0
        %v1178 = vpop.trf.xlu0
        %v1179 = vpop.trf.xlu0
        %v1180 = vpop.trf.xlu0
        %v1181 = vpop.trf.xlu0
        %v1182 = vpop.trf.xlu0
        %v1183 = vpop.trf.xlu0
        %v1184 = vpop.trf.xlu0
        %v1185 = vpop.trf.xlu0
        %v1186 = vpop.trf.xlu0
        %v1187 = vpop.trf.xlu0
        %v1188 = vpack.c.bf16 %v1076, %v1076
        %v1189 = vpack.c.bf16 %v1077, %v1077
        %v1190 = vpack.c.bf16 %v1078, %v1078
        %v1191 = vpack.c.bf16 %v1079, %v1079
        %v1192 = vpack.c.bf16 %v1108, %v1108
        %v1193 = vpack.c.bf16 %v1109, %v1109
        %v1194 = vpack.c.bf16 %v1110, %v1110
        %v1195 = vpack.c.bf16 %v1111, %v1111
        %v1196 = vpack.c.bf16 %v1140, %v1140
        %v1197 = vpack.c.bf16 %v1141, %v1141
        %v1198 = vpack.c.bf16 %v1142, %v1142
        %v1199 = vpack.c.bf16 %v1143, %v1143
        %v1200 = vpack.c.bf16 %v1172, %v1172
        %v1201 = vpack.c.bf16 %v1173, %v1173
        %v1202 = vpack.c.bf16 %v1174, %v1174
        %v1203 = vpack.c.bf16 %v1175, %v1175
        %v1204 = vpack.c.bf16 %v920, %v920
        %v1205 = vpack.c.bf16 %v922, %v922
        %v1206 = vpack.c.bf16 %v925, %v925
        %v1207 = vpack.c.bf16 %v927, %v927
        %v1208 = vpack.c.bf16 %v930, %v930
        %v1209 = vpack.c.bf16 %v932, %v932
        %v1210 = vpack.c.bf16 %v935, %v935
        %v1211 = vpack.c.bf16 %v937, %v937
        %v1212 = vpack.c.bf16 %v1041, %v1041
        %v1213 = vpack.c.bf16 %v1043, %v1043
        %v1214 = vpack.c.bf16 %v1046, %v1046
        %v1215 = vpack.c.bf16 %v1048, %v1048
        %v1216 = vpack.c.bf16 %v1051, %v1051
        %v1217 = vpack.c.bf16 %v1053, %v1053
        %v1218 = vpack.c.bf16 %v1056, %v1056
        %v1219 = vpack.c.bf16 %v1058, %v1058
        %v1224 = vunpack.c.l.b16 %v1188
        %v1225 = vunpack.c.l.b16 %v1189
        %v1226 = vunpack.c.l.b16 %v1190
        %v1227 = vunpack.c.l.b16 %v1191
        %v1228 = vpack.c.b16 %v1225, %v1224
        %v1229 = vpack.c.b16 %v1227, %v1226
        %v1232 = vunpack.c.l.b16 %v1204
        %v1233 = vunpack.c.l.b16 %v1205
        %v1234 = vpack.c.b16 %v1233, %v1232
        %vm1236 = vcmask 130048
        %v1238 = vsel %vm1236, %v1228, 0
        %v1241 = vsel %vm1236, %v1229, 0
        %1243 = vmatpush.bf16.msra.mxu0 0
        %1244 = vmatpush.bf16.msra.mxu0 0
        %1245 = vmatpush.bf16.msra.mxu0 0
        %1246 = vmatpush.bf16.msra.mxu0 0
        %1247 = vmatpush.bf16.msra.mxu0 0
        %1248 = vmatpush.bf16.msra.mxu0 0
        %1249 = vmatpush.bf16.msra.mxu0 0
        %1250 = vmatpush.bf16.msra.mxu0 %v1234
        %1251 = vmatmul.bf16.gmra.mxu0 %v1238
        %v1252 = vpop.f32.mrf.mxu0
        %v1253 = vadd.f32 0.0, %v1252
        %v1254 = vpop.f32.mrf.mxu0
        %v1255 = vadd.f32 0.0, %v1254
        %1256 = vmatmul.bf16.gmra.mxu0 %v1241
        %v1257 = vpop.f32.mrf.mxu0
        %v1258 = vadd.f32 0.0, %v1257
        %v1259 = vpop.f32.mrf.mxu0
        %v1260 = vadd.f32 0.0, %v1259
        %1261 = vdwg.mxu0
        %v1266 = vunpack.c.l.b16 %v1192
        %v1267 = vunpack.c.l.b16 %v1193
        %v1268 = vunpack.c.l.b16 %v1194
        %v1269 = vunpack.c.l.b16 %v1195
        %v1270 = vpack.c.b16 %v1267, %v1266
        %v1271 = vpack.c.b16 %v1269, %v1268
        %v1274 = vunpack.c.l.b16 %v1206
        %v1275 = vunpack.c.l.b16 %v1207
        %v1276 = vpack.c.b16 %v1275, %v1274
        %v1279 = vsel %vm1236, %v1270, 0
        %v1282 = vsel %vm1236, %v1271, 0
        %1284 = vmatpush.bf16.msra.mxu0 0
        %1285 = vmatpush.bf16.msra.mxu0 0
        %1286 = vmatpush.bf16.msra.mxu0 0
        %1287 = vmatpush.bf16.msra.mxu0 0
        %1288 = vmatpush.bf16.msra.mxu0 0
        %1289 = vmatpush.bf16.msra.mxu0 0
        %1290 = vmatpush.bf16.msra.mxu0 0
        %1291 = vmatpush.bf16.msra.mxu0 %v1276
        %1292 = vmatmul.bf16.gmra.mxu0 %v1279
        %v1293 = vpop.f32.mrf.mxu0
        %v1294 = vadd.f32 0.0, %v1293
        %v1295 = vpop.f32.mrf.mxu0
        %v1296 = vadd.f32 0.0, %v1295
        %1297 = vmatmul.bf16.gmra.mxu0 %v1282
        %v1298 = vpop.f32.mrf.mxu0
        %v1299 = vadd.f32 0.0, %v1298
        %v1300 = vpop.f32.mrf.mxu0
        %v1301 = vadd.f32 0.0, %v1300
        %1302 = vdwg.mxu0
        %v1307 = vunpack.c.l.b16 %v1196
        %v1308 = vunpack.c.l.b16 %v1197
        %v1309 = vunpack.c.l.b16 %v1198
        %v1310 = vunpack.c.l.b16 %v1199
        %v1311 = vpack.c.b16 %v1308, %v1307
        %v1312 = vpack.c.b16 %v1310, %v1309
        %v1315 = vunpack.c.l.b16 %v1208
        %v1316 = vunpack.c.l.b16 %v1209
        %v1317 = vpack.c.b16 %v1316, %v1315
        %v1320 = vsel %vm1236, %v1311, 0
        %v1323 = vsel %vm1236, %v1312, 0
        %1325 = vmatpush.bf16.msra.mxu0 0
        %1326 = vmatpush.bf16.msra.mxu0 0
        %1327 = vmatpush.bf16.msra.mxu0 0
        %1328 = vmatpush.bf16.msra.mxu0 0
        %1329 = vmatpush.bf16.msra.mxu0 0
        %1330 = vmatpush.bf16.msra.mxu0 0
        %1331 = vmatpush.bf16.msra.mxu0 0
        %1332 = vmatpush.bf16.msra.mxu0 %v1317
        %1333 = vmatmul.bf16.gmra.mxu0 %v1320
        %v1334 = vpop.f32.mrf.mxu0
        %v1335 = vadd.f32 0.0, %v1334
        %v1336 = vpop.f32.mrf.mxu0
        %v1337 = vadd.f32 0.0, %v1336
        %1338 = vmatmul.bf16.gmra.mxu0 %v1323
        %v1339 = vpop.f32.mrf.mxu0
        %v1340 = vadd.f32 0.0, %v1339
        %v1341 = vpop.f32.mrf.mxu0
        %v1342 = vadd.f32 0.0, %v1341
        %1343 = vdwg.mxu0
        %v1348 = vunpack.c.l.b16 %v1200
        %v1349 = vunpack.c.l.b16 %v1201
        %v1350 = vunpack.c.l.b16 %v1202
        %v1351 = vunpack.c.l.b16 %v1203
        %v1352 = vpack.c.b16 %v1349, %v1348
        %v1353 = vpack.c.b16 %v1351, %v1350
        %v1356 = vunpack.c.l.b16 %v1210
        %v1357 = vunpack.c.l.b16 %v1211
        %v1358 = vpack.c.b16 %v1357, %v1356
        %v1361 = vsel %vm1236, %v1352, 0
        %v1364 = vsel %vm1236, %v1353, 0
        %1366 = vmatpush.bf16.msra.mxu0 0
        %1367 = vmatpush.bf16.msra.mxu0 0
        %1368 = vmatpush.bf16.msra.mxu0 0
        %1369 = vmatpush.bf16.msra.mxu0 0
        %1370 = vmatpush.bf16.msra.mxu0 0
        %1371 = vmatpush.bf16.msra.mxu0 0
        %1372 = vmatpush.bf16.msra.mxu0 0
        %1373 = vmatpush.bf16.msra.mxu0 %v1358
        %1374 = vmatmul.bf16.gmra.mxu0 %v1361
        %v1375 = vpop.f32.mrf.mxu0
        %v1376 = vadd.f32 0.0, %v1375
        %v1377 = vpop.f32.mrf.mxu0
        %v1378 = vadd.f32 0.0, %v1377
        %1379 = vmatmul.bf16.gmra.mxu0 %v1364
        %v1380 = vpop.f32.mrf.mxu0
        %v1381 = vadd.f32 0.0, %v1380
        %v1382 = vpop.f32.mrf.mxu0
        %v1383 = vadd.f32 0.0, %v1382
        %1384 = vdwg.mxu0
        %vm1385 = vcmask 261120
        %v1386 = vsel %vm1385, %v1253, -inf
        %1387 = vmax.xlane.f32.xlu0 %v1386
        %v1388 = vpop.xlane.xlu0 %1387
        %v1389 = vsel %vm1385, %v1255, -inf
        %1390 = vmax.xlane.f32.xlu0 %v1389
        %v1391 = vpop.xlane.xlu0 %1390
        %v1392 = vsel %vm1385, %v1258, -inf
        %1393 = vmax.xlane.f32.xlu0 %v1392
        %v1394 = vpop.xlane.xlu0 %1393
        %v1395 = vsel %vm1385, %v1260, -inf
        %1396 = vmax.xlane.f32.xlu0 %v1395
        %v1397 = vpop.xlane.xlu0 %1396
        %v1398 = vsel %vm1385, %v1294, -inf
        %1399 = vmax.xlane.f32.xlu0 %v1398
        %v1400 = vpop.xlane.xlu0 %1399
        %v1401 = vsel %vm1385, %v1296, -inf
        %1402 = vmax.xlane.f32.xlu0 %v1401
        %v1403 = vpop.xlane.xlu0 %1402
        %v1404 = vsel %vm1385, %v1299, -inf
        %1405 = vmax.xlane.f32.xlu0 %v1404
        %v1406 = vpop.xlane.xlu0 %1405
        %v1407 = vsel %vm1385, %v1301, -inf
        %1408 = vmax.xlane.f32.xlu0 %v1407
        %v1409 = vpop.xlane.xlu0 %1408
        %v1410 = vsel %vm1385, %v1335, -inf
        %1411 = vmax.xlane.f32.xlu0 %v1410
        %v1412 = vpop.xlane.xlu0 %1411
        %v1413 = vsel %vm1385, %v1337, -inf
        %1414 = vmax.xlane.f32.xlu0 %v1413
        %v1415 = vpop.xlane.xlu0 %1414
        %v1416 = vsel %vm1385, %v1340, -inf
        %1417 = vmax.xlane.f32.xlu0 %v1416
        %v1418 = vpop.xlane.xlu0 %1417
        %v1419 = vsel %vm1385, %v1342, -inf
        %1420 = vmax.xlane.f32.xlu0 %v1419
        %v1421 = vpop.xlane.xlu0 %1420
        %v1422 = vsel %vm1385, %v1376, -inf
        %1423 = vmax.xlane.f32.xlu0 %v1422
        %v1424 = vpop.xlane.xlu0 %1423
        %v1425 = vsel %vm1385, %v1378, -inf
        %1426 = vmax.xlane.f32.xlu0 %v1425
        %v1427 = vpop.xlane.xlu0 %1426
        %v1428 = vsel %vm1385, %v1381, -inf
        %1429 = vmax.xlane.f32.xlu0 %v1428
        %v1430 = vpop.xlane.xlu0 %1429
        %v1431 = vsel %vm1385, %v1383, -inf
        %1432 = vmax.xlane.f32.xlu0 %v1431
        %v1433 = vpop.xlane.xlu0 %1432
        %v1434 = vsub.f32 %v1253, %v1388
        %v1435 = vsub.f32 %v1255, %v1391
        %v1436 = vsub.f32 %v1258, %v1394
        %v1437 = vsub.f32 %v1260, %v1397
        %v1438 = vsub.f32 %v1294, %v1400
        %v1439 = vsub.f32 %v1296, %v1403
        %v1440 = vsub.f32 %v1299, %v1406
        %v1441 = vsub.f32 %v1301, %v1409
        %v1442 = vsub.f32 %v1335, %v1412
        %v1443 = vsub.f32 %v1337, %v1415
        %v1444 = vsub.f32 %v1340, %v1418
        %v1445 = vsub.f32 %v1342, %v1421
        %v1446 = vsub.f32 %v1376, %v1424
        %v1447 = vsub.f32 %v1378, %v1427
        %v1448 = vsub.f32 %v1381, %v1430
        %v1449 = vsub.f32 %v1383, %v1433
        %v1450 = vmul.f32 %v1434, 1.442695
        %v1451 = vpow.pop %v1450
        %v1452 = vmul.f32 %v1435, 1.442695
        %v1453 = vpow.pop %v1452
        %v1454 = vmul.f32 %v1436, 1.442695
        %v1455 = vpow.pop %v1454
        %v1456 = vmul.f32 %v1437, 1.442695
        %v1457 = vpow.pop %v1456
        %v1458 = vmul.f32 %v1438, 1.442695
        %v1459 = vpow.pop %v1458
        %v1460 = vmul.f32 %v1439, 1.442695
        %v1461 = vpow.pop %v1460
        %v1462 = vmul.f32 %v1440, 1.442695
        %v1463 = vpow.pop %v1462
        %v1464 = vmul.f32 %v1441, 1.442695
        %v1465 = vpow.pop %v1464
        %v1466 = vmul.f32 %v1442, 1.442695
        %v1467 = vpow.pop %v1466
        %v1468 = vmul.f32 %v1443, 1.442695
        %v1469 = vpow.pop %v1468
        %v1470 = vmul.f32 %v1444, 1.442695
        %v1471 = vpow.pop %v1470
        %v1472 = vmul.f32 %v1445, 1.442695
        %v1473 = vpow.pop %v1472
        %v1474 = vmul.f32 %v1446, 1.442695
        %v1475 = vpow.pop %v1474
        %v1476 = vmul.f32 %v1447, 1.442695
        %v1477 = vpow.pop %v1476
        %v1478 = vmul.f32 %v1448, 1.442695
        %v1479 = vpow.pop %v1478
        %v1480 = vmul.f32 %v1449, 1.442695
        %v1481 = vpow.pop %v1480
        %v1482 = vsel %vm1385, %v1451, 0.0
        %1483 = vadd.xlane.f32.xlu0 %v1482
        %v1484 = vpop.xlane.xlu0 %1483
        %v1485 = vsel %vm1385, %v1453, 0.0
        %1486 = vadd.xlane.f32.xlu0 %v1485
        %v1487 = vpop.xlane.xlu0 %1486
        %v1488 = vsel %vm1385, %v1455, 0.0
        %1489 = vadd.xlane.f32.xlu0 %v1488
        %v1490 = vpop.xlane.xlu0 %1489
        %v1491 = vsel %vm1385, %v1457, 0.0
        %1492 = vadd.xlane.f32.xlu0 %v1491
        %v1493 = vpop.xlane.xlu0 %1492
        %v1494 = vsel %vm1385, %v1459, 0.0
        %1495 = vadd.xlane.f32.xlu0 %v1494
        %v1496 = vpop.xlane.xlu0 %1495
        %v1497 = vsel %vm1385, %v1461, 0.0
        %1498 = vadd.xlane.f32.xlu0 %v1497
        %v1499 = vpop.xlane.xlu0 %1498
        %v1500 = vsel %vm1385, %v1463, 0.0
        %1501 = vadd.xlane.f32.xlu0 %v1500
        %v1502 = vpop.xlane.xlu0 %1501
        %v1503 = vsel %vm1385, %v1465, 0.0
        %1504 = vadd.xlane.f32.xlu0 %v1503
        %v1505 = vpop.xlane.xlu0 %1504
        %v1506 = vsel %vm1385, %v1467, 0.0
        %1507 = vadd.xlane.f32.xlu0 %v1506
        %v1508 = vpop.xlane.xlu0 %1507
        %v1509 = vsel %vm1385, %v1469, 0.0
        %1510 = vadd.xlane.f32.xlu0 %v1509
        %v1511 = vpop.xlane.xlu0 %1510
        %v1512 = vsel %vm1385, %v1471, 0.0
        %1513 = vadd.xlane.f32.xlu0 %v1512
        %v1514 = vpop.xlane.xlu0 %1513
        %v1515 = vsel %vm1385, %v1473, 0.0
        %1516 = vadd.xlane.f32.xlu0 %v1515
        %v1517 = vpop.xlane.xlu0 %1516
        %v1518 = vsel %vm1385, %v1475, 0.0
        %1519 = vadd.xlane.f32.xlu0 %v1518
        %v1520 = vpop.xlane.xlu0 %1519
        %v1521 = vsel %vm1385, %v1477, 0.0
        %1522 = vadd.xlane.f32.xlu0 %v1521
        %v1523 = vpop.xlane.xlu0 %1522
        %v1524 = vsel %vm1385, %v1479, 0.0
        %1525 = vadd.xlane.f32.xlu0 %v1524
        %v1526 = vpop.xlane.xlu0 %1525
        %v1527 = vsel %vm1385, %v1481, 0.0
        %1528 = vadd.xlane.f32.xlu0 %v1527
        %v1529 = vpop.xlane.xlu0 %1528
        %v1530 = vrcp.pop %v1484
        %v1531 = vrcp.pop %v1487
        %v1532 = vrcp.pop %v1490
        %v1533 = vrcp.pop %v1493
        %v1534 = vrcp.pop %v1496
        %v1535 = vrcp.pop %v1499
        %v1536 = vrcp.pop %v1502
        %v1537 = vrcp.pop %v1505
        %v1538 = vrcp.pop %v1508
        %v1539 = vrcp.pop %v1511
        %v1540 = vrcp.pop %v1514
        %v1541 = vrcp.pop %v1517
        %v1542 = vrcp.pop %v1520
        %v1543 = vrcp.pop %v1523
        %v1544 = vrcp.pop %v1526
        %v1545 = vrcp.pop %v1529
        %v1546 = vmul.f32 %v1451, %v1530
        %v1547 = vmul.f32 %v1453, %v1531
        %v1548 = vmul.f32 %v1455, %v1532
        %v1549 = vmul.f32 %v1457, %v1533
        %v1550 = vmul.f32 %v1459, %v1534
        %v1551 = vmul.f32 %v1461, %v1535
        %v1552 = vmul.f32 %v1463, %v1536
        %v1553 = vmul.f32 %v1465, %v1537
        %v1554 = vmul.f32 %v1467, %v1538
        %v1555 = vmul.f32 %v1469, %v1539
        %v1556 = vmul.f32 %v1471, %v1540
        %v1557 = vmul.f32 %v1473, %v1541
        %v1558 = vmul.f32 %v1475, %v1542
        %v1559 = vmul.f32 %v1477, %v1543
        %v1560 = vmul.f32 %v1479, %v1544
        %v1561 = vmul.f32 %v1481, %v1545
        %v1562 = vpack.c.bf16 %v1546, %v1546
        %v1563 = vpack.c.bf16 %v1547, %v1547
        %v1564 = vpack.c.bf16 %v1548, %v1548
        %v1565 = vpack.c.bf16 %v1549, %v1549
        %v1566 = vpack.c.bf16 %v1550, %v1550
        %v1567 = vpack.c.bf16 %v1551, %v1551
        %v1568 = vpack.c.bf16 %v1552, %v1552
        %v1569 = vpack.c.bf16 %v1553, %v1553
        %v1570 = vpack.c.bf16 %v1554, %v1554
        %v1571 = vpack.c.bf16 %v1555, %v1555
        %v1572 = vpack.c.bf16 %v1556, %v1556
        %v1573 = vpack.c.bf16 %v1557, %v1557
        %v1574 = vpack.c.bf16 %v1558, %v1558
        %v1575 = vpack.c.bf16 %v1559, %v1559
        %v1576 = vpack.c.bf16 %v1560, %v1560
        %v1577 = vpack.c.bf16 %v1561, %v1561
        %v1582 = vunpack.c.l.b16 %v1562
        %v1583 = vunpack.c.l.b16 %v1563
        %v1584 = vunpack.c.l.b16 %v1564
        %v1585 = vunpack.c.l.b16 %v1565
        %v1586 = vpack.c.b16 %v1583, %v1582
        %v1587 = vpack.c.b16 %v1585, %v1584
        %v1590 = vunpack.c.l.b16 %v1212
        %v1591 = vunpack.c.l.b16 %v1213
        %v1592 = vpack.c.b16 %v1591, %v1590
        %v1594 = vsel %vm1385, %v1586, 0
        %v1597 = vsel %vm1385, %v1587, 0
        %v1600 = vsel %vm1385, %v1592, 0
        %1602 = vmatpush.bf16.xpose.msra.mxu0 0
        %1603 = vmatpush.bf16.xpose.msra.mxu0 0
        %1604 = vmatpush.bf16.xpose.msra.mxu0 0
        %1605 = vmatpush.bf16.xpose.msra.mxu0 0
        %1606 = vmatpush.bf16.xpose.msra.mxu0 0
        %1607 = vmatpush.bf16.xpose.msra.mxu0 0
        %1608 = vmatpush.bf16.xpose.msra.mxu0 0
        %1609 = vmatpush.bf16.xpose.msra.mxu0 %v1600
        %1610 = vmatmul.bf16.gmra.mxu0 %v1594
        %v1611 = vpop.f32.mrf.mxu0
        %v1612 = vadd.f32 0.0, %v1611
        %v1613 = vpop.f32.mrf.mxu0
        %v1614 = vadd.f32 0.0, %v1613
        %1615 = vmatmul.bf16.gmra.mxu0 %v1597
        %v1616 = vpop.f32.mrf.mxu0
        %v1617 = vadd.f32 0.0, %v1616
        %v1618 = vpop.f32.mrf.mxu0
        %v1619 = vadd.f32 0.0, %v1618
        %1620 = vdwg.mxu0
        %v1625 = vunpack.c.l.b16 %v1566
        %v1626 = vunpack.c.l.b16 %v1567
        %v1627 = vunpack.c.l.b16 %v1568
        %v1628 = vunpack.c.l.b16 %v1569
        %v1629 = vpack.c.b16 %v1626, %v1625
        %v1630 = vpack.c.b16 %v1628, %v1627
        %v1633 = vunpack.c.l.b16 %v1214
        %v1634 = vunpack.c.l.b16 %v1215
        %v1635 = vpack.c.b16 %v1634, %v1633
        %v1637 = vsel %vm1385, %v1629, 0
        %v1640 = vsel %vm1385, %v1630, 0
        %v1643 = vsel %vm1385, %v1635, 0
        %1645 = vmatpush.bf16.xpose.msra.mxu0 0
        %1646 = vmatpush.bf16.xpose.msra.mxu0 0
        %1647 = vmatpush.bf16.xpose.msra.mxu0 0
        %1648 = vmatpush.bf16.xpose.msra.mxu0 0
        %1649 = vmatpush.bf16.xpose.msra.mxu0 0
        %1650 = vmatpush.bf16.xpose.msra.mxu0 0
        %1651 = vmatpush.bf16.xpose.msra.mxu0 0
        %1652 = vmatpush.bf16.xpose.msra.mxu0 %v1643
        %1653 = vmatmul.bf16.gmra.mxu0 %v1637
        %v1654 = vpop.f32.mrf.mxu0
        %v1655 = vadd.f32 0.0, %v1654
        %v1656 = vpop.f32.mrf.mxu0
        %v1657 = vadd.f32 0.0, %v1656
        %1658 = vmatmul.bf16.gmra.mxu0 %v1640
        %v1659 = vpop.f32.mrf.mxu0
        %v1660 = vadd.f32 0.0, %v1659
        %v1661 = vpop.f32.mrf.mxu0
        %v1662 = vadd.f32 0.0, %v1661
        %1663 = vdwg.mxu0
        %v1668 = vunpack.c.l.b16 %v1570
        %v1669 = vunpack.c.l.b16 %v1571
        %v1670 = vunpack.c.l.b16 %v1572
        %v1671 = vunpack.c.l.b16 %v1573
        %v1672 = vpack.c.b16 %v1669, %v1668
        %v1673 = vpack.c.b16 %v1671, %v1670
        %v1676 = vunpack.c.l.b16 %v1216
        %v1677 = vunpack.c.l.b16 %v1217
        %v1678 = vpack.c.b16 %v1677, %v1676
        %v1680 = vsel %vm1385, %v1672, 0
        %v1683 = vsel %vm1385, %v1673, 0
        %v1686 = vsel %vm1385, %v1678, 0
        %1688 = vmatpush.bf16.xpose.msra.mxu0 0
        %1689 = vmatpush.bf16.xpose.msra.mxu0 0
        %1690 = vmatpush.bf16.xpose.msra.mxu0 0
        %1691 = vmatpush.bf16.xpose.msra.mxu0 0
        %1692 = vmatpush.bf16.xpose.msra.mxu0 0
        %1693 = vmatpush.bf16.xpose.msra.mxu0 0
        %1694 = vmatpush.bf16.xpose.msra.mxu0 0
        %1695 = vmatpush.bf16.xpose.msra.mxu0 %v1686
        %1696 = vmatmul.bf16.gmra.mxu0 %v1680
        %v1697 = vpop.f32.mrf.mxu0
        %v1698 = vadd.f32 0.0, %v1697
        %v1699 = vpop.f32.mrf.mxu0
        %v1700 = vadd.f32 0.0, %v1699
        %1701 = vmatmul.bf16.gmra.mxu0 %v1683
        %v1702 = vpop.f32.mrf.mxu0
        %v1703 = vadd.f32 0.0, %v1702
        %v1704 = vpop.f32.mrf.mxu0
        %v1705 = vadd.f32 0.0, %v1704
        %1706 = vdwg.mxu0
        %v1711 = vunpack.c.l.b16 %v1574
        %v1712 = vunpack.c.l.b16 %v1575
        %v1713 = vunpack.c.l.b16 %v1576
        %v1714 = vunpack.c.l.b16 %v1577
        %v1715 = vpack.c.b16 %v1712, %v1711
        %v1716 = vpack.c.b16 %v1714, %v1713
        %v1719 = vunpack.c.l.b16 %v1218
        %v1720 = vunpack.c.l.b16 %v1219
        %v1721 = vpack.c.b16 %v1720, %v1719
        %v1723 = vsel %vm1385, %v1715, 0
        %v1726 = vsel %vm1385, %v1716, 0
        %v1729 = vsel %vm1385, %v1721, 0
        %1731 = vmatpush.bf16.xpose.msra.mxu0 0
        %1732 = vmatpush.bf16.xpose.msra.mxu0 0
        %1733 = vmatpush.bf16.xpose.msra.mxu0 0
        %1734 = vmatpush.bf16.xpose.msra.mxu0 0
        %1735 = vmatpush.bf16.xpose.msra.mxu0 0
        %1736 = vmatpush.bf16.xpose.msra.mxu0 0
        %1737 = vmatpush.bf16.xpose.msra.mxu0 0
        %1738 = vmatpush.bf16.xpose.msra.mxu0 %v1729
        %1739 = vmatmul.bf16.gmra.mxu0 %v1723
        %v1740 = vpop.f32.mrf.mxu0
        %v1741 = vadd.f32 0.0, %v1740
        %v1742 = vpop.f32.mrf.mxu0
        %v1743 = vadd.f32 0.0, %v1742
        %1744 = vmatmul.bf16.gmra.mxu0 %v1726
        %v1745 = vpop.f32.mrf.mxu0
        %v1746 = vadd.f32 0.0, %v1745
        %v1747 = vpop.f32.mrf.mxu0
        %v1748 = vadd.f32 0.0, %v1747
        %1749 = vdwg.mxu0
        %1750 = vxpose.xlu0.b32.start [1/16] %v1612, 128
        %1751 = vxpose.xlu0.b32.cont [2/16] %v1614, 128
        %1752 = vxpose.xlu0.b32.cont [3/16] %v1617, 128
        %1753 = vxpose.xlu0.b32.cont [4/16] %v1619, 128
        %1754 = vxpose.xlu0.b32.cont [5/16] 0.0, 128
        %1755 = vxpose.xlu0.b32.cont [6/16] 0.0, 128
        %1756 = vxpose.xlu0.b32.cont [7/16] 0.0, 128
        %1757 = vxpose.xlu0.b32.cont [8/16] 0.0, 128
        %1758 = vxpose.xlu0.b32.cont [9/16] 0.0, 128
        %1759 = vxpose.xlu0.b32.cont [10/16] 0.0, 128
        %1760 = vxpose.xlu0.b32.cont [11/16] 0.0, 128
        %1761 = vxpose.xlu0.b32.cont [12/16] 0.0, 128
        %1762 = vxpose.xlu0.b32.cont [13/16] 0.0, 128
        %1763 = vxpose.xlu0.b32.cont [14/16] 0.0, 128
        %1764 = vxpose.xlu0.b32.cont [15/16] 0.0, 128
        %1765 = vxpose.xlu0.b32.end [16/16] 0.0, 128
        %v1766 = vpop.trf.xlu0
        %v1767 = vpop.trf.xlu0
        %v1768 = vpop.trf.xlu0
        %v1769 = vpop.trf.xlu0
        %v1770 = vpop.trf.xlu0
        %v1771 = vpop.trf.xlu0
        %v1772 = vpop.trf.xlu0
        %v1773 = vpop.trf.xlu0
        %v1774 = vpop.trf.xlu0
        %v1775 = vpop.trf.xlu0
        %v1776 = vpop.trf.xlu0
        %v1777 = vpop.trf.xlu0
        %v1778 = vpop.trf.xlu0
        %v1779 = vpop.trf.xlu0
        %v1780 = vpop.trf.xlu0
        %v1781 = vpop.trf.xlu0
        %1782 = vxpose.xlu0.b32.start [1/16] %v1655, 128
        %1783 = vxpose.xlu0.b32.cont [2/16] %v1657, 128
        %1784 = vxpose.xlu0.b32.cont [3/16] %v1660, 128
        %1785 = vxpose.xlu0.b32.cont [4/16] %v1662, 128
        %1786 = vxpose.xlu0.b32.cont [5/16] 0.0, 128
        %1787 = vxpose.xlu0.b32.cont [6/16] 0.0, 128
        %1788 = vxpose.xlu0.b32.cont [7/16] 0.0, 128
        %1789 = vxpose.xlu0.b32.cont [8/16] 0.0, 128
        %1790 = vxpose.xlu0.b32.cont [9/16] 0.0, 128
        %1791 = vxpose.xlu0.b32.cont [10/16] 0.0, 128
        %1792 = vxpose.xlu0.b32.cont [11/16] 0.0, 128
        %1793 = vxpose.xlu0.b32.cont [12/16] 0.0, 128
        %1794 = vxpose.xlu0.b32.cont [13/16] 0.0, 128
        %1795 = vxpose.xlu0.b32.cont [14/16] 0.0, 128
        %1796 = vxpose.xlu0.b32.cont [15/16] 0.0, 128
        %1797 = vxpose.xlu0.b32.end [16/16] 0.0, 128
        %v1798 = vpop.trf.xlu0
        %v1799 = vpop.trf.xlu0
        %v1800 = vpop.trf.xlu0
        %v1801 = vpop.trf.xlu0
        %v1802 = vpop.trf.xlu0
        %v1803 = vpop.trf.xlu0
        %v1804 = vpop.trf.xlu0
        %v1805 = vpop.trf.xlu0
        %v1806 = vpop.trf.xlu0
        %v1807 = vpop.trf.xlu0
        %v1808 = vpop.trf.xlu0
        %v1809 = vpop.trf.xlu0
        %v1810 = vpop.trf.xlu0
        %v1811 = vpop.trf.xlu0
        %v1812 = vpop.trf.xlu0
        %v1813 = vpop.trf.xlu0
        %1814 = vxpose.xlu0.b32.start [1/16] %v1698, 128
        %1815 = vxpose.xlu0.b32.cont [2/16] %v1700, 128
        %1816 = vxpose.xlu0.b32.cont [3/16] %v1703, 128
        %1817 = vxpose.xlu0.b32.cont [4/16] %v1705, 128
        %1818 = vxpose.xlu0.b32.cont [5/16] 0.0, 128
        %1819 = vxpose.xlu0.b32.cont [6/16] 0.0, 128
        %1820 = vxpose.xlu0.b32.cont [7/16] 0.0, 128
        %1821 = vxpose.xlu0.b32.cont [8/16] 0.0, 128
        %1822 = vxpose.xlu0.b32.cont [9/16] 0.0, 128
        %1823 = vxpose.xlu0.b32.cont [10/16] 0.0, 128
        %1824 = vxpose.xlu0.b32.cont [11/16] 0.0, 128
        %1825 = vxpose.xlu0.b32.cont [12/16] 0.0, 128
        %1826 = vxpose.xlu0.b32.cont [13/16] 0.0, 128
        %1827 = vxpose.xlu0.b32.cont [14/16] 0.0, 128
        %1828 = vxpose.xlu0.b32.cont [15/16] 0.0, 128
        %1829 = vxpose.xlu0.b32.end [16/16] 0.0, 128
        %v1830 = vpop.trf.xlu0
        %v1831 = vpop.trf.xlu0
        %v1832 = vpop.trf.xlu0
        %v1833 = vpop.trf.xlu0
        %v1834 = vpop.trf.xlu0
        %v1835 = vpop.trf.xlu0
        %v1836 = vpop.trf.xlu0
        %v1837 = vpop.trf.xlu0
        %v1838 = vpop.trf.xlu0
        %v1839 = vpop.trf.xlu0
        %v1840 = vpop.trf.xlu0
        %v1841 = vpop.trf.xlu0
        %v1842 = vpop.trf.xlu0
        %v1843 = vpop.trf.xlu0
        %v1844 = vpop.trf.xlu0
        %v1845 = vpop.trf.xlu0
        %1846 = vxpose.xlu0.b32.start [1/16] %v1741, 128
        %1847 = vxpose.xlu0.b32.cont [2/16] %v1743, 128
        %1848 = vxpose.xlu0.b32.cont [3/16] %v1746, 128
        %1849 = vxpose.xlu0.b32.cont [4/16] %v1748, 128
        %1850 = vxpose.xlu0.b32.cont [5/16] 0.0, 128
        %1851 = vxpose.xlu0.b32.cont [6/16] 0.0, 128
        %1852 = vxpose.xlu0.b32.cont [7/16] 0.0, 128
        %1853 = vxpose.xlu0.b32.cont [8/16] 0.0, 128
        %1854 = vxpose.xlu0.b32.cont [9/16] 0.0, 128
        %1855 = vxpose.xlu0.b32.cont [10/16] 0.0, 128
        %1856 = vxpose.xlu0.b32.cont [11/16] 0.0, 128
        %1857 = vxpose.xlu0.b32.cont [12/16] 0.0, 128
        %1858 = vxpose.xlu0.b32.cont [13/16] 0.0, 128
        %1859 = vxpose.xlu0.b32.cont [14/16] 0.0, 128
        %1860 = vxpose.xlu0.b32.cont [15/16] 0.0, 128
        %1861 = vxpose.xlu0.b32.end [16/16] 0.0, 128
        %v1862 = vpop.trf.xlu0
        %v1863 = vpop.trf.xlu0
        %v1864 = vpop.trf.xlu0
        %v1865 = vpop.trf.xlu0
        %v1866 = vpop.trf.xlu0
        %v1867 = vpop.trf.xlu0
        %v1868 = vpop.trf.xlu0
        %v1869 = vpop.trf.xlu0
        %v1870 = vpop.trf.xlu0
        %v1871 = vpop.trf.xlu0
        %v1872 = vpop.trf.xlu0
        %v1873 = vpop.trf.xlu0
        %v1874 = vpop.trf.xlu0
        %v1875 = vpop.trf.xlu0
        %v1876 = vpop.trf.xlu0
        %v1877 = vpop.trf.xlu0
        %v1878 = vld [vmem:[%s6] sm:$0xf]
        %v1879 = vld [vmem:[%s6 + $0x4] sm:$0xf]
        %v1880 = vld [vmem:[%s6 + $0x8] sm:$0xf]
        %v1881 = vld [vmem:[%s6 + $0xc] sm:$0xf]
        %v1882 = vld [vmem:[%s6 + $0x10] sm:$0xf]
        %v1883 = vld [vmem:[%s6 + $0x14] sm:$0xf]
        %v1884 = vld [vmem:[%s6 + $0x18] sm:$0xf]
        %v1885 = vld [vmem:[%s6 + $0x1c] sm:$0xf]
        %v1886 = vpack.c.bf16 %v1767, %v1766
        %v1887 = vpack.c.bf16 %v1799, %v1798
        %v1888 = vpack.c.bf16 %v1831, %v1830
        %v1889 = vpack.c.bf16 %v1863, %v1862
        %v1890 = vld [vmem:[%s7] sm:$0xff]
        %v1891 = vld [vmem:[%s7 + $0x8] sm:$0xff]
        %v1892 = vld [vmem:[%s7 + $0x10] sm:$0xff]
        %v1893 = vld [vmem:[%s7 + $0x18] sm:$0xff]
        %v1894 = vld [vmem:[%s7 + $0x20] sm:$0xff]
        %v1895 = vld [vmem:[%s7 + $0x28] sm:$0xff]
        %v1896 = vld [vmem:[%s7 + $0x30] sm:$0xff]
        %v1897 = vld [vmem:[%s7 + $0x38] sm:$0xff]
        %1899 = vset.pattern.permute.xlu0 0
        %1900 = vperm.xlu0 %1899, %v1890
        %v1901 = vpop.permute.xlu0 %1900
        %1904 = vset.pattern.permute.xlu0 0
        %1905 = vperm.xlu0 %1904, %v1891
        %v1906 = vpop.permute.xlu0 %1905
        %1909 = vset.pattern.permute.xlu0 0
        %1910 = vperm.xlu0 %1909, %v1892
        %v1911 = vpop.permute.xlu0 %1910
        %1914 = vset.pattern.permute.xlu0 0
        %1915 = vperm.xlu0 %1914, %v1893
        %v1916 = vpop.permute.xlu0 %1915
        %1919 = vset.pattern.permute.xlu0 0
        %1920 = vperm.xlu0 %1919, %v1894
        %v1921 = vpop.permute.xlu0 %1920
        %1924 = vset.pattern.permute.xlu0 0
        %1925 = vperm.xlu0 %1924, %v1895
        %v1926 = vpop.permute.xlu0 %1925
        %1929 = vset.pattern.permute.xlu0 0
        %1930 = vperm.xlu0 %1929, %v1896
        %v1931 = vpop.permute.xlu0 %1930
        %1934 = vset.pattern.permute.xlu0 0
        %1935 = vperm.xlu0 %1934, %v1897
        %v1936 = vpop.permute.xlu0 %1935
        %v1946 = vunpack.c.l.b16 %v1878
        %v1947 = vunpack.c.l.b16 %v1879
        %v1948 = vunpack.c.l.b16 %v1880
        %v1949 = vunpack.c.l.b16 %v1881
        %v1950 = vunpack.c.l.b16 %v1882
        %v1951 = vunpack.c.l.b16 %v1883
        %v1952 = vunpack.c.l.b16 %v1884
        %v1953 = vunpack.c.l.b16 %v1885
        %v1954 = vpack.c.b16 %v1947, %v1946
        %v1955 = vpack.c.b16 %v1949, %v1948
        %v1956 = vpack.c.b16 %v1951, %v1950
        %v1957 = vpack.c.b16 %v1953, %v1952
        %v1959 = vsel %vm865, %v1954, 0
        %v1962 = vsel %vm865, %v1955, 0
        %v1965 = vsel %vm865, %v1956, 0
        %v1968 = vsel %vm865, %v1957, 0
        %1970 = vmatpush.bf16.msra.mxu0 0
        %1971 = vmatpush.bf16.msra.mxu0 0
        %1972 = vmatpush.bf16.msra.mxu0 0
        %1973 = vmatpush.bf16.msra.mxu0 0
        %1974 = vmatpush.bf16.msra.mxu0 %v1889
        %1975 = vmatpush.bf16.msra.mxu0 %v1888
        %1976 = vmatpush.bf16.msra.mxu0 %v1887
        %1977 = vmatpush.bf16.msra.mxu0 %v1886
        %1978 = vmatmul.bf16.gmra.mxu0 %v1959
        %v1979 = vpop.f32.mrf.mxu0
        %v1980 = vadd.f32 %v1901, %v1979
        %v1981 = vpop.f32.mrf.mxu0
        %v1982 = vadd.f32 %v1906, %v1981
        %1983 = vmatmul.bf16.gmra.mxu0 %v1962
        %v1984 = vpop.f32.mrf.mxu0
        %v1985 = vadd.f32 %v1911, %v1984
        %v1986 = vpop.f32.mrf.mxu0
        %v1987 = vadd.f32 %v1916, %v1986
        %1988 = vmatmul.bf16.gmra.mxu0 %v1965
        %v1989 = vpop.f32.mrf.mxu0
        %v1990 = vadd.f32 %v1921, %v1989
        %v1991 = vpop.f32.mrf.mxu0
        %v1992 = vadd.f32 %v1926, %v1991
        %1993 = vmatmul.bf16.gmra.mxu0 %v1968
        %v1994 = vpop.f32.mrf.mxu0
        %v1995 = vadd.f32 %v1931, %v1994
        %v1996 = vpop.f32.mrf.mxu0
        %v1997 = vadd.f32 %v1936, %v1996
        %1998 = vdwg.mxu0
        %v1999 = vadd.f32 %v685, %v1980
        %v2000 = vadd.f32 %v686, %v1982
        %v2001 = vadd.f32 %v687, %v1985
        %v2002 = vadd.f32 %v688, %v1987
        %v2003 = vadd.f32 %v689, %v1990
        %v2004 = vadd.f32 %v690, %v1992
        %v2005 = vadd.f32 %v691, %v1995
        %v2006 = vadd.f32 %v692, %v1997
        %v2007 = vld [vmem:[%s16] sm:$0xff]
        %v2008 = vld [vmem:[%s16 + $0x8] sm:$0xff]
        %v2009 = vld [vmem:[%s16 + $0x10] sm:$0xff]
        %v2010 = vld [vmem:[%s16 + $0x18] sm:$0xff]
        %v2011 = vld [vmem:[%s16 + $0x20] sm:$0xff]
        %v2012 = vld [vmem:[%s16 + $0x28] sm:$0xff]
        %v2013 = vld [vmem:[%s16 + $0x30] sm:$0xff]
        %v2014 = vld [vmem:[%s16 + $0x38] sm:$0xff]
        %v2015 = vld [vmem:[%s17] sm:$0xff]
        %v2016 = vld [vmem:[%s17 + $0x8] sm:$0xff]
        %v2017 = vld [vmem:[%s17 + $0x10] sm:$0xff]
        %v2018 = vld [vmem:[%s17 + $0x18] sm:$0xff]
        %v2019 = vld [vmem:[%s17 + $0x20] sm:$0xff]
        %v2020 = vld [vmem:[%s17 + $0x28] sm:$0xff]
        %v2021 = vld [vmem:[%s17 + $0x30] sm:$0xff]
        %v2022 = vld [vmem:[%s17 + $0x38] sm:$0xff]
        %v2023 = vsel %vm1385, %v1999, 0.0
        %v2024 = vsel %vm1385, %v2000, 0.0
        %v2025 = vadd.f32 %v2023, %v2024
        %v2026 = vsel %vm1385, %v2001, 0.0
        %v2027 = vadd.f32 %v2025, %v2026
        %v2028 = vsel %vm1385, %v2002, 0.0
        %v2029 = vadd.f32 %v2027, %v2028
        %v2030 = vsel %vm1385, %v2003, 0.0
        %v2031 = vadd.f32 %v2029, %v2030
        %v2032 = vsel %vm1385, %v2004, 0.0
        %v2033 = vadd.f32 %v2031, %v2032
        %v2034 = vsel %vm1385, %v2005, 0.0
        %v2035 = vadd.f32 %v2033, %v2034
        %v2036 = vsel %vm1385, %v2006, 0.0
        %v2037 = vadd.f32 %v2035, %v2036
        %v2038 = vrot.slane %v2037, 4
        %v2039 = vadd.f32 %v2037, %v2038
        %v2040 = vrot.slane %v2039, 2
        %v2041 = vadd.f32 %v2039, %v2040
        %v2042 = vrot.slane %v2041, 1
        %v2043 = vadd.f32 %v2041, %v2042
        %v2044 = vrcp.pop 64.0
        %v2045 = vmul.f32 64.0, %v2044
        %v2046 = vsub.f32 1.0, %v2045
        %v2047 = vmul.f32 %v2044, %v2046
        %v2048 = vadd.f32 %v2044, %v2047
        %vm2049 = vweird.f32 %v2044
        %v2050 = vsel %vm2049, %v2044, %v2048
        %v2051 = vmul.f32 %v2043, %v2050
        %v2052 = vsub.f32 %v1999, %v2051
        %v2053 = vsub.f32 %v2000, %v2051
        %v2054 = vsub.f32 %v2001, %v2051
        %v2055 = vsub.f32 %v2002, %v2051
        %v2056 = vsub.f32 %v2003, %v2051
        %v2057 = vsub.f32 %v2004, %v2051
        %v2058 = vsub.f32 %v2005, %v2051
        %v2059 = vsub.f32 %v2006, %v2051
        %v2060 = vmul.f32 %v2052, %v2052
        %v2061 = vmul.f32 %v2053, %v2053
        %v2062 = vmul.f32 %v2054, %v2054
        %v2063 = vmul.f32 %v2055, %v2055
        %v2064 = vmul.f32 %v2056, %v2056
        %v2065 = vmul.f32 %v2057, %v2057
        %v2066 = vmul.f32 %v2058, %v2058
        %v2067 = vmul.f32 %v2059, %v2059
        %v2068 = vsel %vm1385, %v2060, 0.0
        %v2069 = vsel %vm1385, %v2061, 0.0
        %v2070 = vadd.f32 %v2068, %v2069
        %v2071 = vsel %vm1385, %v2062, 0.0
        %v2072 = vadd.f32 %v2070, %v2071
        %v2073 = vsel %vm1385, %v2063, 0.0
        %v2074 = vadd.f32 %v2072, %v2073
        %v2075 = vsel %vm1385, %v2064, 0.0
        %v2076 = vadd.f32 %v2074, %v2075
        %v2077 = vsel %vm1385, %v2065, 0.0
        %v2078 = vadd.f32 %v2076, %v2077
        %v2079 = vsel %vm1385, %v2066, 0.0
        %v2080 = vadd.f32 %v2078, %v2079
        %v2081 = vsel %vm1385, %v2067, 0.0
        %v2082 = vadd.f32 %v2080, %v2081
        %v2083 = vrot.slane %v2082, 4
        %v2084 = vadd.f32 %v2082, %v2083
        %v2085 = vrot.slane %v2084, 2
        %v2086 = vadd.f32 %v2084, %v2085
        %v2087 = vrot.slane %v2086, 1
        %v2088 = vadd.f32 %v2086, %v2087
        %v2089 = vmul.f32 %v2088, %v2050
        %v2090 = vadd.f32 %v2089, 1e-05
        %v2091 = vrsqrt.pop %v2090
        %v2092 = vmul.f32 %v2091, %v2090
        %v2093 = vmul.f32 %v2092, %v2091
        %v2094 = vmul.f32 0.5, %v2093
        %v2095 = vsub.f32 1.5, %v2094
        %v2096 = vmul.f32 %v2091, %v2095
        %vm2097 = vweird.f32 %v2090
        %vm2098 = vweird.f32 %v2091
        %vm2099 = vmor %vm2097, %vm2098
        %v2100 = vsel %vm2099, %v2091, %v2096
        %v2101 = vmul.f32 %v2052, %v2100
        %v2102 = vmul.f32 %v2053, %v2100
        %v2103 = vmul.f32 %v2054, %v2100
        %v2104 = vmul.f32 %v2055, %v2100
        %v2105 = vmul.f32 %v2056, %v2100
        %v2106 = vmul.f32 %v2057, %v2100
        %v2107 = vmul.f32 %v2058, %v2100
        %v2108 = vmul.f32 %v2059, %v2100
        %2110 = vset.pattern.permute.xlu0 0
        %2111 = vperm.xlu0 %2110, %v2007
        %v2112 = vpop.permute.xlu0 %2111
        %2115 = vset.pattern.permute.xlu0 0
        %2116 = vperm.xlu0 %2115, %v2008
        %v2117 = vpop.permute.xlu0 %2116
        %2120 = vset.pattern.permute.xlu0 0
        %2121 = vperm.xlu0 %2120, %v2009
        %v2122 = vpop.permute.xlu0 %2121
        %2125 = vset.pattern.permute.xlu0 0
        %2126 = vperm.xlu0 %2125, %v2010
        %v2127 = vpop.permute.xlu0 %2126
        %2130 = vset.pattern.permute.xlu0 0
        %2131 = vperm.xlu0 %2130, %v2011
        %v2132 = vpop.permute.xlu0 %2131
        %2135 = vset.pattern.permute.xlu0 0
        %2136 = vperm.xlu0 %2135, %v2012
        %v2137 = vpop.permute.xlu0 %2136
        %2140 = vset.pattern.permute.xlu0 0
        %2141 = vperm.xlu0 %2140, %v2013
        %v2142 = vpop.permute.xlu0 %2141
        %2145 = vset.pattern.permute.xlu0 0
        %2146 = vperm.xlu0 %2145, %v2014
        %v2147 = vpop.permute.xlu0 %2146
        %v2149 = vmul.f32 %v2101, %v2112
        %v2150 = vmul.f32 %v2102, %v2117
        %v2151 = vmul.f32 %v2103, %v2122
        %v2152 = vmul.f32 %v2104, %v2127
        %v2153 = vmul.f32 %v2105, %v2132
        %v2154 = vmul.f32 %v2106, %v2137
        %v2155 = vmul.f32 %v2107, %v2142
        %v2156 = vmul.f32 %v2108, %v2147
        %2158 = vset.pattern.permute.xlu0 0
        %2159 = vperm.xlu0 %2158, %v2015
        %v2160 = vpop.permute.xlu0 %2159
        %2163 = vset.pattern.permute.xlu0 0
        %2164 = vperm.xlu0 %2163, %v2016
        %v2165 = vpop.permute.xlu0 %2164
        %2168 = vset.pattern.permute.xlu0 0
        %2169 = vperm.xlu0 %2168, %v2017
        %v2170 = vpop.permute.xlu0 %2169
        %2173 = vset.pattern.permute.xlu0 0
        %2174 = vperm.xlu0 %2173, %v2018
        %v2175 = vpop.permute.xlu0 %2174
        %2178 = vset.pattern.permute.xlu0 0
        %2179 = vperm.xlu0 %2178, %v2019
        %v2180 = vpop.permute.xlu0 %2179
        %2183 = vset.pattern.permute.xlu0 0
        %2184 = vperm.xlu0 %2183, %v2020
        %v2185 = vpop.permute.xlu0 %2184
        %2188 = vset.pattern.permute.xlu0 0
        %2189 = vperm.xlu0 %2188, %v2021
        %v2190 = vpop.permute.xlu0 %2189
        %2193 = vset.pattern.permute.xlu0 0
        %2194 = vperm.xlu0 %2193, %v2022
        %v2195 = vpop.permute.xlu0 %2194
        %v2197 = vadd.f32 %v2149, %v2160
        %v2198 = vadd.f32 %v2150, %v2165
        %v2199 = vadd.f32 %v2151, %v2170
        %v2200 = vadd.f32 %v2152, %v2175
        %v2201 = vadd.f32 %v2153, %v2180
        %v2202 = vadd.f32 %v2154, %v2185
        %v2203 = vadd.f32 %v2155, %v2190
        %v2204 = vadd.f32 %v2156, %v2195
        %2205 = vst.msk [vmem:[#allocation2] sm:$0xff] %vm1385, %v2197
        %2206 = vst.msk [vmem:[#allocation2 + $0x8] sm:$0xff] %vm1385, %v2198
        %2207 = vst.msk [vmem:[#allocation2 + $0x10] sm:$0xff] %vm1385, %v2199
        %2208 = vst.msk [vmem:[#allocation2 + $0x18] sm:$0xff] %vm1385, %v2200
        %2209 = vst.msk [vmem:[#allocation2 + $0x20] sm:$0xff] %vm1385, %v2201
        %2210 = vst.msk [vmem:[#allocation2 + $0x28] sm:$0xff] %vm1385, %v2202
        %2211 = vst.msk [vmem:[#allocation2 + $0x30] sm:$0xff] %vm1385, %v2203
        %2212 = vst.msk [vmem:[#allocation2 + $0x38] sm:$0xff] %vm1385, %v2204
        %v2213 = vadd.f32 %v2197, %v693
        %v2214 = vadd.f32 %v2198, %v694
        %v2215 = vadd.f32 %v2199, %v695
        %v2216 = vadd.f32 %v2200, %v696
        %v2217 = vadd.f32 %v2201, %v697
        %v2218 = vadd.f32 %v2202, %v698
        %v2219 = vadd.f32 %v2203, %v699
        %v2220 = vadd.f32 %v2204, %v700
        %v2221 = vpack.c.bf16 %v2214, %v2213
        %v2222 = vpack.c.bf16 %v2216, %v2215
        %v2223 = vpack.c.bf16 %v2218, %v2217
        %v2224 = vpack.c.bf16 %v2220, %v2219
        %v2225 = vld [vmem:[%s8] sm:$0xf]
        %v2226 = vld [vmem:[%s8 + $0x4] sm:$0xf]
        %v2227 = vld [vmem:[%s8 + $0x8] sm:$0xf]
        %v2228 = vld [vmem:[%s8 + $0xc] sm:$0xf]
        %v2229 = vld [vmem:[%s8 + $0x10] sm:$0xf]
        %v2230 = vld [vmem:[%s8 + $0x14] sm:$0xf]
        %v2231 = vld [vmem:[%s8 + $0x18] sm:$0xf]
        %v2232 = vld [vmem:[%s8 + $0x1c] sm:$0xf]
        %v2233 = vld [vmem:[%s9] sm:$0xff]
        %v2234 = vld [vmem:[%s9 + $0x8] sm:$0xff]
        %v2235 = vld [vmem:[%s9 + $0x10] sm:$0xff]
        %v2236 = vld [vmem:[%s9 + $0x18] sm:$0xff]
        %v2237 = vld [vmem:[%s9 + $0x20] sm:$0xff]
        %v2238 = vld [vmem:[%s9 + $0x28] sm:$0xff]
        %v2239 = vld [vmem:[%s9 + $0x30] sm:$0xff]
        %v2240 = vld [vmem:[%s9 + $0x38] sm:$0xff]
        %2242 = vset.pattern.permute.xlu0 0
        %2243 = vperm.xlu0 %2242, %v2233
        %v2244 = vpop.permute.xlu0 %2243
        %2247 = vset.pattern.permute.xlu0 0
        %2248 = vperm.xlu0 %2247, %v2234
        %v2249 = vpop.permute.xlu0 %2248
        %2252 = vset.pattern.permute.xlu0 0
        %2253 = vperm.xlu0 %2252, %v2235
        %v2254 = vpop.permute.xlu0 %2253
        %2257 = vset.pattern.permute.xlu0 0
        %2258 = vperm.xlu0 %2257, %v2236
        %v2259 = vpop.permute.xlu0 %2258
        %2262 = vset.pattern.permute.xlu0 0
        %2263 = vperm.xlu0 %2262, %v2237
        %v2264 = vpop.permute.xlu0 %2263
        %2267 = vset.pattern.permute.xlu0 0
        %2268 = vperm.xlu0 %2267, %v2238
        %v2269 = vpop.permute.xlu0 %2268
        %2272 = vset.pattern.permute.xlu0 0
        %2273 = vperm.xlu0 %2272, %v2239
        %v2274 = vpop.permute.xlu0 %2273
        %2277 = vset.pattern.permute.xlu0 0
        %2278 = vperm.xlu0 %2277, %v2240
        %v2279 = vpop.permute.xlu0 %2278
        %v2289 = vunpack.c.l.b16 %v2225
        %v2290 = vunpack.c.l.b16 %v2226
        %v2291 = vunpack.c.l.b16 %v2227
        %v2292 = vunpack.c.l.b16 %v2228
        %v2293 = vunpack.c.l.b16 %v2229
        %v2294 = vunpack.c.l.b16 %v2230
        %v2295 = vunpack.c.l.b16 %v2231
        %v2296 = vunpack.c.l.b16 %v2232
        %v2297 = vpack.c.b16 %v2290, %v2289
        %v2298 = vpack.c.b16 %v2292, %v2291
        %v2299 = vpack.c.b16 %v2294, %v2293
        %v2300 = vpack.c.b16 %v2296, %v2295
        %v2302 = vsel %vm865, %v2297, 0
        %v2305 = vsel %vm865, %v2298, 0
        %v2308 = vsel %vm865, %v2299, 0
        %v2311 = vsel %vm865, %v2300, 0
        %2313 = vmatpush.bf16.msra.mxu0 0
        %2314 = vmatpush.bf16.msra.mxu0 0
        %2315 = vmatpush.bf16.msra.mxu0 0
        %2316 = vmatpush.bf16.msra.mxu0 0
        %2317 = vmatpush.bf16.msra.mxu0 %v2224
        %2318 = vmatpush.bf16.msra.mxu0 %v2223
        %2319 = vmatpush.bf16.msra.mxu0 %v2222
        %2320 = vmatpush.bf16.msra.mxu0 %v2221
        %2321 = vmatmul.bf16.gmra.mxu0 %v2302
        %v2322 = vpop.f32.mrf.mxu0
        %v2323 = vadd.f32 %v2244, %v2322
        %v2324 = vpop.f32.mrf.mxu0
        %v2325 = vadd.f32 %v2249, %v2324
        %2326 = vmatmul.bf16.gmra.mxu0 %v2305
        %v2327 = vpop.f32.mrf.mxu0
        %v2328 = vadd.f32 %v2254, %v2327
        %v2329 = vpop.f32.mrf.mxu0
        %v2330 = vadd.f32 %v2259, %v2329
        %2331 = vmatmul.bf16.gmra.mxu0 %v2308
        %v2332 = vpop.f32.mrf.mxu0
        %v2333 = vadd.f32 %v2264, %v2332
        %v2334 = vpop.f32.mrf.mxu0
        %v2335 = vadd.f32 %v2269, %v2334
        %2336 = vmatmul.bf16.gmra.mxu0 %v2311
        %v2337 = vpop.f32.mrf.mxu0
        %v2338 = vadd.f32 %v2274, %v2337
        %v2339 = vpop.f32.mrf.mxu0
        %v2340 = vadd.f32 %v2279, %v2339
        %2341 = vdwg.mxu0
        %2342 = vxpose.xlu0.b32.start [1/16] %v2323, 128
        %2343 = vxpose.xlu0.b32.cont [2/16] %v2325, 128
        %2344 = vxpose.xlu0.b32.cont [3/16] 0.0, 128
        %2345 = vxpose.xlu0.b32.cont [4/16] 0.0, 128
        %2346 = vxpose.xlu0.b32.cont [5/16] 0.0, 128
        %2347 = vxpose.xlu0.b32.cont [6/16] 0.0, 128
        %2348 = vxpose.xlu0.b32.cont [7/16] 0.0, 128
        %2349 = vxpose.xlu0.b32.cont [8/16] 0.0, 128
        %2350 = vxpose.xlu0.b32.cont [9/16] 0.0, 128
        %2351 = vxpose.xlu0.b32.cont [10/16] 0.0, 128
        %2352 = vxpose.xlu0.b32.cont [11/16] 0.0, 128
        %2353 = vxpose.xlu0.b32.cont [12/16] 0.0, 128
        %2354 = vxpose.xlu0.b32.cont [13/16] 0.0, 128
        %2355 = vxpose.xlu0.b32.cont [14/16] 0.0, 128
        %2356 = vxpose.xlu0.b32.cont [15/16] 0.0, 128
        %2357 = vxpose.xlu0.b32.end [16/16] 0.0, 128
        %v2358 = vpop.trf.xlu0
        %v2359 = vpop.trf.xlu0
        %v2360 = vpop.trf.xlu0
        %v2361 = vpop.trf.xlu0
        %v2362 = vpop.trf.xlu0
        %v2363 = vpop.trf.xlu0
        %v2364 = vpop.trf.xlu0
        %v2365 = vpop.trf.xlu0
        %v2366 = vpop.trf.xlu0
        %v2367 = vpop.trf.xlu0
        %v2368 = vpop.trf.xlu0
        %v2369 = vpop.trf.xlu0
        %v2370 = vpop.trf.xlu0
        %v2371 = vpop.trf.xlu0
        %v2372 = vpop.trf.xlu0
        %v2373 = vpop.trf.xlu0
        %2374 = vxpose.xlu0.b32.start [1/16] %v2328, 128
        %2375 = vxpose.xlu0.b32.cont [2/16] %v2330, 128
        %2376 = vxpose.xlu0.b32.cont [3/16] 0.0, 128
        %2377 = vxpose.xlu0.b32.cont [4/16] 0.0, 128
        %2378 = vxpose.xlu0.b32.cont [5/16] 0.0, 128
        %2379 = vxpose.xlu0.b32.cont [6/16] 0.0, 128
        %2380 = vxpose.xlu0.b32.cont [7/16] 0.0, 128
        %2381 = vxpose.xlu0.b32.cont [8/16] 0.0, 128
        %2382 = vxpose.xlu0.b32.cont [9/16] 0.0, 128
        %2383 = vxpose.xlu0.b32.cont [10/16] 0.0, 128
        %2384 = vxpose.xlu0.b32.cont [11/16] 0.0, 128
        %2385 = vxpose.xlu0.b32.cont [12/16] 0.0, 128
        %2386 = vxpose.xlu0.b32.cont [13/16] 0.0, 128
        %2387 = vxpose.xlu0.b32.cont [14/16] 0.0, 128
        %2388 = vxpose.xlu0.b32.cont [15/16] 0.0, 128
        %2389 = vxpose.xlu0.b32.end [16/16] 0.0, 128
        %v2390 = vpop.trf.xlu0
        %v2391 = vpop.trf.xlu0
        %v2392 = vpop.trf.xlu0
        %v2393 = vpop.trf.xlu0
        %v2394 = vpop.trf.xlu0
        %v2395 = vpop.trf.xlu0
        %v2396 = vpop.trf.xlu0
        %v2397 = vpop.trf.xlu0
        %v2398 = vpop.trf.xlu0
        %v2399 = vpop.trf.xlu0
        %v2400 = vpop.trf.xlu0
        %v2401 = vpop.trf.xlu0
        %v2402 = vpop.trf.xlu0
        %v2403 = vpop.trf.xlu0
        %v2404 = vpop.trf.xlu0
        %v2405 = vpop.trf.xlu0
        %2406 = vxpose.xlu0.b32.start [1/16] %v2333, 128
        %2407 = vxpose.xlu0.b32.cont [2/16] %v2335, 128
        %2408 = vxpose.xlu0.b32.cont [3/16] 0.0, 128
        %2409 = vxpose.xlu0.b32.cont [4/16] 0.0, 128
        %2410 = vxpose.xlu0.b32.cont [5/16] 0.0, 128
        %2411 = vxpose.xlu0.b32.cont [6/16] 0.0, 128
        %2412 = vxpose.xlu0.b32.cont [7/16] 0.0, 128
        %2413 = vxpose.xlu0.b32.cont [8/16] 0.0, 128
        %2414 = vxpose.xlu0.b32.cont [9/16] 0.0, 128
        %2415 = vxpose.xlu0.b32.cont [10/16] 0.0, 128
        %2416 = vxpose.xlu0.b32.cont [11/16] 0.0, 128
        %2417 = vxpose.xlu0.b32.cont [12/16] 0.0, 128
        %2418 = vxpose.xlu0.b32.cont [13/16] 0.0, 128
        %2419 = vxpose.xlu0.b32.cont [14/16] 0.0, 128
        %2420 = vxpose.xlu0.b32.cont [15/16] 0.0, 128
        %2421 = vxpose.xlu0.b32.end [16/16] 0.0, 128
        %v2422 = vpop.trf.xlu0
        %v2423 = vpop.trf.xlu0
        %v2424 = vpop.trf.xlu0
        %v2425 = vpop.trf.xlu0
        %v2426 = vpop.trf.xlu0
        %v2427 = vpop.trf.xlu0
        %v2428 = vpop.trf.xlu0
        %v2429 = vpop.trf.xlu0
        %v2430 = vpop.trf.xlu0
        %v2431 = vpop.trf.xlu0
        %v2432 = vpop.trf.xlu0
        %v2433 = vpop.trf.xlu0
        %v2434 = vpop.trf.xlu0
        %v2435 = vpop.trf.xlu0
        %v2436 = vpop.trf.xlu0
        %v2437 = vpop.trf.xlu0
        %2438 = vxpose.xlu0.b32.start [1/16] %v2338, 128
        %2439 = vxpose.xlu0.b32.cont [2/16] %v2340, 128
        %2440 = vxpose.xlu0.b32.cont [3/16] 0.0, 128
        %2441 = vxpose.xlu0.b32.cont [4/16] 0.0, 128
        %2442 = vxpose.xlu0.b32.cont [5/16] 0.0, 128
        %2443 = vxpose.xlu0.b32.cont [6/16] 0.0, 128
        %2444 = vxpose.xlu0.b32.cont [7/16] 0.0, 128
        %2445 = vxpose.xlu0.b32.cont [8/16] 0.0, 128
        %2446 = vxpose.xlu0.b32.cont [9/16] 0.0, 128
        %2447 = vxpose.xlu0.b32.cont [10/16] 0.0, 128
        %2448 = vxpose.xlu0.b32.cont [11/16] 0.0, 128
        %2449 = vxpose.xlu0.b32.cont [12/16] 0.0, 128
        %2450 = vxpose.xlu0.b32.cont [13/16] 0.0, 128
        %2451 = vxpose.xlu0.b32.cont [14/16] 0.0, 128
        %2452 = vxpose.xlu0.b32.cont [15/16] 0.0, 128
        %2453 = vxpose.xlu0.b32.end [16/16] 0.0, 128
        %v2454 = vpop.trf.xlu0
        %v2455 = vpop.trf.xlu0
        %v2456 = vpop.trf.xlu0
        %v2457 = vpop.trf.xlu0
        %v2458 = vpop.trf.xlu0
        %v2459 = vpop.trf.xlu0
        %v2460 = vpop.trf.xlu0
        %v2461 = vpop.trf.xlu0
        %v2462 = vpop.trf.xlu0
        %v2463 = vpop.trf.xlu0
        %v2464 = vpop.trf.xlu0
        %v2465 = vpop.trf.xlu0
        %v2466 = vpop.trf.xlu0
        %v2467 = vpop.trf.xlu0
        %v2468 = vpop.trf.xlu0
        %v2469 = vpop.trf.xlu0
        %v2470 = vpack.c.bf16 %v2358, %v2358
        %v2471 = vpack.c.bf16 %v2359, %v2359
        %v2472 = vpack.c.bf16 %v2360, %v2360
        %v2473 = vpack.c.bf16 %v2361, %v2361
        %v2474 = vpack.c.bf16 %v2390, %v2390
        %v2475 = vpack.c.bf16 %v2391, %v2391
        %v2476 = vpack.c.bf16 %v2392, %v2392
        %v2477 = vpack.c.bf16 %v2393, %v2393
        %v2478 = vpack.c.bf16 %v2422, %v2422
        %v2479 = vpack.c.bf16 %v2423, %v2423
        %v2480 = vpack.c.bf16 %v2424, %v2424
        %v2481 = vpack.c.bf16 %v2425, %v2425
        %v2482 = vpack.c.bf16 %v2454, %v2454
        %v2483 = vpack.c.bf16 %v2455, %v2455
        %v2484 = vpack.c.bf16 %v2456, %v2456
        %v2485 = vpack.c.bf16 %v2457, %v2457
        %vm2486 = vcmask 125952
        %2487 = vst.msk [vmem:[#allocation3] sm:$0xf] %vm2486, %v2470
        %2488 = vst.msk [vmem:[#allocation3 + $0x4] sm:$0xf] %vm2486, %v2471
        %2489 = vst.msk [vmem:[#allocation3 + $0x8] sm:$0xf] %vm2486, %v2472
        %2490 = vst.msk [vmem:[#allocation3 + $0xc] sm:$0xf] %vm2486, %v2473
        %2491 = vst.msk [vmem:[#allocation3 + $0x10] sm:$0xf] %vm2486, %v2474
        %2492 = vst.msk [vmem:[#allocation3 + $0x14] sm:$0xf] %vm2486, %v2475
        %2493 = vst.msk [vmem:[#allocation3 + $0x18] sm:$0xf] %vm2486, %v2476
        %2494 = vst.msk [vmem:[#allocation3 + $0x1c] sm:$0xf] %vm2486, %v2477
        %2495 = vst.msk [vmem:[#allocation3 + $0x20] sm:$0xf] %vm2486, %v2478
        %2496 = vst.msk [vmem:[#allocation3 + $0x24] sm:$0xf] %vm2486, %v2479
        %2497 = vst.msk [vmem:[#allocation3 + $0x28] sm:$0xf] %vm2486, %v2480
        %2498 = vst.msk [vmem:[#allocation3 + $0x2c] sm:$0xf] %vm2486, %v2481
        %2499 = vst.msk [vmem:[#allocation3 + $0x30] sm:$0xf] %vm2486, %v2482
        %2500 = vst.msk [vmem:[#allocation3 + $0x34] sm:$0xf] %vm2486, %v2483
        %2501 = vst.msk [vmem:[#allocation3 + $0x38] sm:$0xf] %vm2486, %v2484
        %2502 = vst.msk [vmem:[#allocation3 + $0x3c] sm:$0xf] %vm2486, %v2485
        %vm2503 = vcmask 7168
        %2504 = vst.msk [vmem:[#allocation4] sm:$0xff] %vm2503, -inf
        %2505 = vst.msk [vmem:[#allocation4 + $0x8] sm:$0xff] %vm2503, -inf
        %2506 = vst.msk [vmem:[#allocation4 + $0x10] sm:$0xff] %vm2503, -inf
        %2507 = vst.msk [vmem:[#allocation4 + $0x18] sm:$0xff] %vm2503, -inf
        %2508 = vst.msk [vmem:[#allocation4 + $0x20] sm:$0xff] %vm2503, -inf
        %2509 = vst.msk [vmem:[#allocation4 + $0x28] sm:$0xff] %vm2503, -inf
        %2510 = vst.msk [vmem:[#allocation4 + $0x30] sm:$0xff] %vm2503, -inf
        %2511 = vst.msk [vmem:[#allocation4 + $0x38] sm:$0xff] %vm2503, -inf
        %2512 = vst.msk [vmem:[#allocation4 + $0x40] sm:$0xff] %vm2503, -inf
        %2513 = vst.msk [vmem:[#allocation4 + $0x48] sm:$0xff] %vm2503, -inf
        %2514 = vst.msk [vmem:[#allocation4 + $0x50] sm:$0xff] %vm2503, -inf
        %2515 = vst.msk [vmem:[#allocation4 + $0x58] sm:$0xff] %vm2503, -inf
        %2516 = vst.msk [vmem:[#allocation4 + $0x60] sm:$0xff] %vm2503, -inf
        %2517 = vst.msk [vmem:[#allocation4 + $0x68] sm:$0xff] %vm2503, -inf
        %2518 = vst.msk [vmem:[#allocation4 + $0x70] sm:$0xff] %vm2503, -inf
        %2519 = vst.msk [vmem:[#allocation4 + $0x78] sm:$0xff] %vm2503, -inf
        %2520 = vst.msk [vmem:[#allocation5] sm:$0xff] %vm2503, 0.0
        %2521 = vst.msk [vmem:[#allocation5 + $0x8] sm:$0xff] %vm2503, 0.0
        %2522 = vst.msk [vmem:[#allocation5 + $0x10] sm:$0xff] %vm2503, 0.0
        %2523 = vst.msk [vmem:[#allocation5 + $0x18] sm:$0xff] %vm2503, 0.0
        %2524 = vst.msk [vmem:[#allocation5 + $0x20] sm:$0xff] %vm2503, 0.0
        %2525 = vst.msk [vmem:[#allocation5 + $0x28] sm:$0xff] %vm2503, 0.0
        %2526 = vst.msk [vmem:[#allocation5 + $0x30] sm:$0xff] %vm2503, 0.0
        %2527 = vst.msk [vmem:[#allocation5 + $0x38] sm:$0xff] %vm2503, 0.0
        %2528 = vst.msk [vmem:[#allocation5 + $0x40] sm:$0xff] %vm2503, 0.0
        %2529 = vst.msk [vmem:[#allocation5 + $0x48] sm:$0xff] %vm2503, 0.0
        %2530 = vst.msk [vmem:[#allocation5 + $0x50] sm:$0xff] %vm2503, 0.0
        %2531 = vst.msk [vmem:[#allocation5 + $0x58] sm:$0xff] %vm2503, 0.0
        %2532 = vst.msk [vmem:[#allocation5 + $0x60] sm:$0xff] %vm2503, 0.0
        %2533 = vst.msk [vmem:[#allocation5 + $0x68] sm:$0xff] %vm2503, 0.0
        %2534 = vst.msk [vmem:[#allocation5 + $0x70] sm:$0xff] %vm2503, 0.0
        %2535 = vst.msk [vmem:[#allocation5 + $0x78] sm:$0xff] %vm2503, 0.0
        %2536 = vst.msk [vmem:[#allocation6] sm:$0xff] %vm1236, 0.0
        %2537 = vst.msk [vmem:[#allocation6 + $0x8] sm:$0xff] %vm1236, 0.0
        %2538 = vst.msk [vmem:[#allocation6 + $0x10] sm:$0xff] %vm1236, 0.0
        %2539 = vst.msk [vmem:[#allocation6 + $0x18] sm:$0xff] %vm1236, 0.0
        %2540 = vst.msk [vmem:[#allocation6 + $0x20] sm:$0xff] %vm1236, 0.0
        %2541 = vst.msk [vmem:[#allocation6 + $0x28] sm:$0xff] %vm1236, 0.0
        %2542 = vst.msk [vmem:[#allocation6 + $0x30] sm:$0xff] %vm1236, 0.0
        %2543 = vst.msk [vmem:[#allocation6 + $0x38] sm:$0xff] %vm1236, 0.0
        %2544 = vst.msk [vmem:[#allocation6 + $0x40] sm:$0xff] %vm1236, 0.0
        %2545 = vst.msk [vmem:[#allocation6 + $0x48] sm:$0xff] %vm1236, 0.0
        %2546 = vst.msk [vmem:[#allocation6 + $0x50] sm:$0xff] %vm1236, 0.0
        %2547 = vst.msk [vmem:[#allocation6 + $0x58] sm:$0xff] %vm1236, 0.0
        %2548 = vst.msk [vmem:[#allocation6 + $0x60] sm:$0xff] %vm1236, 0.0
        %2549 = vst.msk [vmem:[#allocation6 + $0x68] sm:$0xff] %vm1236, 0.0
        %2550 = vst.msk [vmem:[#allocation6 + $0x70] sm:$0xff] %vm1236, 0.0
        %2551 = vst.msk [vmem:[#allocation6 + $0x78] sm:$0xff] %vm1236, 0.0
      $region96: #{tpu_custom_call.1} parent=91 // pred_fallthru
        _
      %v2552 = vld [vmem:[%s663] sm:$0xff]
      %v2553 = vld [vmem:[%s663 + $0x8] sm:$0xff]
      %v2554 = vld [vmem:[%s663 + $0x10] sm:$0xff]
      %v2555 = vld [vmem:[%s663 + $0x18] sm:$0xff]
      %v2556 = vld [vmem:[%s663 + $0x20] sm:$0xff]
      %v2557 = vld [vmem:[%s663 + $0x28] sm:$0xff]
      %v2558 = vld [vmem:[%s663 + $0x30] sm:$0xff]
      %v2559 = vld [vmem:[%s663 + $0x38] sm:$0xff]
      %v2560 = vld [vmem:[%s673] sm:$0xff]
      %v2561 = vld [vmem:[%s673 + $0x8] sm:$0xff]
      %v2562 = vld [vmem:[%s673 + $0x10] sm:$0xff]
      %v2563 = vld [vmem:[%s673 + $0x18] sm:$0xff]
      %v2564 = vld [vmem:[%s673 + $0x20] sm:$0xff]
      %v2565 = vld [vmem:[%s673 + $0x28] sm:$0xff]
      %v2566 = vld [vmem:[%s673 + $0x30] sm:$0xff]
      %v2567 = vld [vmem:[%s673 + $0x38] sm:$0xff]
      %v2568 = vld [vmem:[%s8 + $0x20] sm:$0xf]
      %v2569 = vld [vmem:[%s8 + $0x24] sm:$0xf]
      %v2570 = vld [vmem:[%s8 + $0x28] sm:$0xf]
      %v2571 = vld [vmem:[%s8 + $0x2c] sm:$0xf]
      %v2572 = vld [vmem:[%s8 + $0x30] sm:$0xf]
      %v2573 = vld [vmem:[%s8 + $0x34] sm:$0xf]
      %v2574 = vld [vmem:[%s8 + $0x38] sm:$0xf]
      %v2575 = vld [vmem:[%s8 + $0x3c] sm:$0xf]
      %v2576 = vld [vmem:[%s9 + $0x40] sm:$0xff]
      %v2577 = vld [vmem:[%s9 + $0x48] sm:$0xff]
      %v2578 = vld [vmem:[%s9 + $0x50] sm:$0xff]
      %v2579 = vld [vmem:[%s9 + $0x58] sm:$0xff]
      %v2580 = vld [vmem:[%s9 + $0x60] sm:$0xff]
      %v2581 = vld [vmem:[%s9 + $0x68] sm:$0xff]
      %v2582 = vld [vmem:[%s9 + $0x70] sm:$0xff]
      %v2583 = vld [vmem:[%s9 + $0x78] sm:$0xff]
      %2585 = vset.pattern.permute.xlu0 0
      %2586 = vperm.xlu0 %2585, %v2576
      %v2587 = vpop.permute.xlu0 %2586
      %2590 = vset.pattern.permute.xlu0 0
      %2591 = vperm.xlu0 %2590, %v2577
      %v2592 = vpop.permute.xlu0 %2591
      %2595 = vset.pattern.permute.xlu0 0
      %2596 = vperm.xlu0 %2595, %v2578
      %v2597 = vpop.permute.xlu0 %2596
      %2600 = vset.pattern.permute.xlu0 0
      %2601 = vperm.xlu0 %2600, %v2579
      %v2602 = vpop.permute.xlu0 %2601
      %2605 = vset.pattern.permute.xlu0 0
      %2606 = vperm.xlu0 %2605, %v2580
      %v2607 = vpop.permute.xlu0 %2606
      %2610 = vset.pattern.permute.xlu0 0
      %2611 = vperm.xlu0 %2610, %v2581
      %v2612 = vpop.permute.xlu0 %2611
      %2615 = vset.pattern.permute.xlu0 0
      %2616 = vperm.xlu0 %2615, %v2582
      %v2617 = vpop.permute.xlu0 %2616
      %2620 = vset.pattern.permute.xlu0 0
      %2621 = vperm.xlu0 %2620, %v2583
      %v2622 = vpop.permute.xlu0 %2621
      %v2632 = vunpack.c.l.b16 %v2568
      %v2633 = vunpack.c.l.b16 %v2569
      %v2634 = vunpack.c.l.b16 %v2570
      %v2635 = vunpack.c.l.b16 %v2571
      %v2636 = vunpack.c.l.b16 %v2572
      %v2637 = vunpack.c.l.b16 %v2573
      %v2638 = vunpack.c.l.b16 %v2574
      %v2639 = vunpack.c.l.b16 %v2575
      %v2640 = vpack.c.b16 %v2633, %v2632
      %v2641 = vpack.c.b16 %v2635, %v2634
      %v2642 = vpack.c.b16 %v2637, %v2636
      %v2643 = vpack.c.b16 %v2639, %v2638
      %v2652 = vunpack.c.l.b16 %v2552
      %v2653 = vunpack.c.h.b16 %v2552
      %v2654 = vunpack.c.l.b16 %v2553
      %v2655 = vunpack.c.h.b16 %v2553
      %v2656 = vunpack.c.l.b16 %v2554
      %v2657 = vunpack.c.h.b16 %v2554
      %v2658 = vunpack.c.l.b16 %v2555
      %v2659 = vunpack.c.h.b16 %v2555
      %v2660 = vunpack.c.l.b16 %v2556
      %v2661 = vunpack.c.h.b16 %v2556
      %v2662 = vunpack.c.l.b16 %v2557
      %v2663 = vunpack.c.h.b16 %v2557
      %v2664 = vunpack.c.l.b16 %v2558
      %v2665 = vunpack.c.h.b16 %v2558
      %v2666 = vunpack.c.l.b16 %v2559
      %v2667 = vunpack.c.h.b16 %v2559
      %v2668 = vpack.c.b16 %v2654, %v2652
      %v2669 = vpack.c.b16 %v2655, %v2653
      %v2670 = vpack.c.b16 %v2658, %v2656
      %v2671 = vpack.c.b16 %v2659, %v2657
      %v2672 = vpack.c.b16 %v2662, %v2660
      %v2673 = vpack.c.b16 %v2663, %v2661
      %v2674 = vpack.c.b16 %v2666, %v2664
      %v2675 = vpack.c.b16 %v2667, %v2665
      %vm2684 = vcmask 523264
      %v2686 = vsel %vm2684, %v2640, 0
      %v2689 = vsel %vm2684, %v2641, 0
      %v2692 = vsel %vm2684, %v2642, 0
      %v2695 = vsel %vm2684, %v2643, 0
      %2697 = vmatpush.bf16.msra.mxu0 0
      %2698 = vmatpush.bf16.msra.mxu0 0
      %2699 = vmatpush.bf16.msra.mxu0 0
      %2700 = vmatpush.bf16.msra.mxu0 0
      %2701 = vmatpush.bf16.msra.mxu0 %v2674
      %2702 = vmatpush.bf16.msra.mxu0 %v2672
      %2703 = vmatpush.bf16.msra.mxu0 %v2670
      %2704 = vmatpush.bf16.msra.mxu0 %v2668
      %2705 = vmatmul.bf16.gmra.mxu0 %v2686
      %v2706 = vpop.f32.mrf.mxu0
      %v2707 = vadd.f32 %v2587, %v2706
      %v2708 = vpop.f32.mrf.mxu0
      %v2709 = vadd.f32 %v2592, %v2708
      %2710 = vmatmul.bf16.gmra.mxu0 %v2689
      %v2711 = vpop.f32.mrf.mxu0
      %v2712 = vadd.f32 %v2597, %v2711
      %v2713 = vpop.f32.mrf.mxu0
      %v2714 = vadd.f32 %v2602, %v2713
      %2715 = vmatmul.bf16.gmra.mxu0 %v2692
      %v2716 = vpop.f32.mrf.mxu0
      %v2717 = vadd.f32 %v2607, %v2716
      %v2718 = vpop.f32.mrf.mxu0
      %v2719 = vadd.f32 %v2612, %v2718
      %2720 = vmatmul.bf16.gmra.mxu0 %v2695
      %v2721 = vpop.f32.mrf.mxu0
      %v2722 = vadd.f32 %v2617, %v2721
      %v2723 = vpop.f32.mrf.mxu0
      %v2724 = vadd.f32 %v2622, %v2723
      %2725 = vdwg.mxu0
      %2726 = vmatpush.bf16.msra.mxu0 0
      %2727 = vmatpush.bf16.msra.mxu0 0
      %2728 = vmatpush.bf16.msra.mxu0 0
      %2729 = vmatpush.bf16.msra.mxu0 0
      %2730 = vmatpush.bf16.msra.mxu0 %v2675
      %2731 = vmatpush.bf16.msra.mxu0 %v2673
      %2732 = vmatpush.bf16.msra.mxu0 %v2671
      %2733 = vmatpush.bf16.msra.mxu0 %v2669
      %2734 = vmatmul.bf16.gmra.mxu0 %v2686
      %v2735 = vpop.f32.mrf.mxu0
      %v2736 = vadd.f32 %v2587, %v2735
      %v2737 = vpop.f32.mrf.mxu0
      %v2738 = vadd.f32 %v2592, %v2737
      %2739 = vmatmul.bf16.gmra.mxu0 %v2689
      %v2740 = vpop.f32.mrf.mxu0
      %v2741 = vadd.f32 %v2597, %v2740
      %v2742 = vpop.f32.mrf.mxu0
      %v2743 = vadd.f32 %v2602, %v2742
      %2744 = vmatmul.bf16.gmra.mxu0 %v2692
      %v2745 = vpop.f32.mrf.mxu0
      %v2746 = vadd.f32 %v2607, %v2745
      %v2747 = vpop.f32.mrf.mxu0
      %v2748 = vadd.f32 %v2612, %v2747
      %2749 = vmatmul.bf16.gmra.mxu0 %v2695
      %v2750 = vpop.f32.mrf.mxu0
      %v2751 = vadd.f32 %v2617, %v2750
      %v2752 = vpop.f32.mrf.mxu0
      %v2753 = vadd.f32 %v2622, %v2752
      %2754 = vdwg.mxu0
      %v2755 = vld [vmem:[%s8 + $0x40] sm:$0xf]
      %v2756 = vld [vmem:[%s8 + $0x44] sm:$0xf]
      %v2757 = vld [vmem:[%s8 + $0x48] sm:$0xf]
      %v2758 = vld [vmem:[%s8 + $0x4c] sm:$0xf]
      %v2759 = vld [vmem:[%s8 + $0x50] sm:$0xf]
      %v2760 = vld [vmem:[%s8 + $0x54] sm:$0xf]
      %v2761 = vld [vmem:[%s8 + $0x58] sm:$0xf]
      %v2762 = vld [vmem:[%s8 + $0x5c] sm:$0xf]
      %v2763 = vld [vmem:[%s9 + $0x80] sm:$0xff]
      %v2764 = vld [vmem:[%s9 + $0x88] sm:$0xff]
      %v2765 = vld [vmem:[%s9 + $0x90] sm:$0xff]
      %v2766 = vld [vmem:[%s9 + $0x98] sm:$0xff]
      %v2767 = vld [vmem:[%s9 + $0xa0] sm:$0xff]
      %v2768 = vld [vmem:[%s9 + $0xa8] sm:$0xff]
      %v2769 = vld [vmem:[%s9 + $0xb0] sm:$0xff]
      %v2770 = vld [vmem:[%s9 + $0xb8] sm:$0xff]
      %2772 = vset.pattern.permute.xlu0 0
      %2773 = vperm.xlu0 %2772, %v2763
      %v2774 = vpop.permute.xlu0 %2773
      %2777 = vset.pattern.permute.xlu0 0
      %2778 = vperm.xlu0 %2777, %v2764
      %v2779 = vpop.permute.xlu0 %2778
      %2782 = vset.pattern.permute.xlu0 0
      %2783 = vperm.xlu0 %2782, %v2765
      %v2784 = vpop.permute.xlu0 %2783
      %2787 = vset.pattern.permute.xlu0 0
      %2788 = vperm.xlu0 %2787, %v2766
      %v2789 = vpop.permute.xlu0 %2788
      %2792 = vset.pattern.permute.xlu0 0
      %2793 = vperm.xlu0 %2792, %v2767
      %v2794 = vpop.permute.xlu0 %2793
      %2797 = vset.pattern.permute.xlu0 0
      %2798 = vperm.xlu0 %2797, %v2768
      %v2799 = vpop.permute.xlu0 %2798
      %2802 = vset.pattern.permute.xlu0 0
      %2803 = vperm.xlu0 %2802, %v2769
      %v2804 = vpop.permute.xlu0 %2803
      %2807 = vset.pattern.permute.xlu0 0
      %2808 = vperm.xlu0 %2807, %v2770
      %v2809 = vpop.permute.xlu0 %2808
      %v2819 = vunpack.c.l.b16 %v2755
      %v2820 = vunpack.c.l.b16 %v2756
      %v2821 = vunpack.c.l.b16 %v2757
      %v2822 = vunpack.c.l.b16 %v2758
      %v2823 = vunpack.c.l.b16 %v2759
      %v2824 = vunpack.c.l.b16 %v2760
      %v2825 = vunpack.c.l.b16 %v2761
      %v2826 = vunpack.c.l.b16 %v2762
      %v2827 = vpack.c.b16 %v2820, %v2819
      %v2828 = vpack.c.b16 %v2822, %v2821
      %v2829 = vpack.c.b16 %v2824, %v2823
      %v2830 = vpack.c.b16 %v2826, %v2825
      %v2839 = vunpack.c.l.b16 %v2560
      %v2840 = vunpack.c.h.b16 %v2560
      %v2841 = vunpack.c.l.b16 %v2561
      %v2842 = vunpack.c.h.b16 %v2561
      %v2843 = vunpack.c.l.b16 %v2562
      %v2844 = vunpack.c.h.b16 %v2562
      %v2845 = vunpack.c.l.b16 %v2563
      %v2846 = vunpack.c.h.b16 %v2563
      %v2847 = vunpack.c.l.b16 %v2564
      %v2848 = vunpack.c.h.b16 %v2564
      %v2849 = vunpack.c.l.b16 %v2565
      %v2850 = vunpack.c.h.b16 %v2565
      %v2851 = vunpack.c.l.b16 %v2566
      %v2852 = vunpack.c.h.b16 %v2566
      %v2853 = vunpack.c.l.b16 %v2567
      %v2854 = vunpack.c.h.b16 %v2567
      %v2855 = vpack.c.b16 %v2841, %v2839
      %v2856 = vpack.c.b16 %v2842, %v2840
      %v2857 = vpack.c.b16 %v2845, %v2843
      %v2858 = vpack.c.b16 %v2846, %v2844
      %v2859 = vpack.c.b16 %v2849, %v2847
      %v2860 = vpack.c.b16 %v2850, %v2848
      %v2861 = vpack.c.b16 %v2853, %v2851
      %v2862 = vpack.c.b16 %v2854, %v2852
      %v2872 = vsel %vm2684, %v2827, 0
      %v2875 = vsel %vm2684, %v2828, 0
      %v2878 = vsel %vm2684, %v2829, 0
      %v2881 = vsel %vm2684, %v2830, 0
      %2883 = vmatpush.bf16.msra.mxu0 0
      %2884 = vmatpush.bf16.msra.mxu0 0
      %2885 = vmatpush.bf16.msra.mxu0 0
      %2886 = vmatpush.bf16.msra.mxu0 0
      %2887 = vmatpush.bf16.msra.mxu0 %v2861
      %2888 = vmatpush.bf16.msra.mxu0 %v2859
      %2889 = vmatpush.bf16.msra.mxu0 %v2857
      %2890 = vmatpush.bf16.msra.mxu0 %v2855
      %2891 = vmatmul.bf16.gmra.mxu0 %v2872
      %v2892 = vpop.f32.mrf.mxu0
      %v2893 = vadd.f32 %v2774, %v2892
      %v2894 = vpop.f32.mrf.mxu0
      %v2895 = vadd.f32 %v2779, %v2894
      %2896 = vmatmul.bf16.gmra.mxu0 %v2875
      %v2897 = vpop.f32.mrf.mxu0
      %v2898 = vadd.f32 %v2784, %v2897
      %v2899 = vpop.f32.mrf.mxu0
      %v2900 = vadd.f32 %v2789, %v2899
      %2901 = vmatmul.bf16.gmra.mxu0 %v2878
      %v2902 = vpop.f32.mrf.mxu0
      %v2903 = vadd.f32 %v2794, %v2902
      %v2904 = vpop.f32.mrf.mxu0
      %v2905 = vadd.f32 %v2799, %v2904
      %2906 = vmatmul.bf16.gmra.mxu0 %v2881
      %v2907 = vpop.f32.mrf.mxu0
      %v2908 = vadd.f32 %v2804, %v2907
      %v2909 = vpop.f32.mrf.mxu0
      %v2910 = vadd.f32 %v2809, %v2909
      %2911 = vdwg.mxu0
      %2912 = vmatpush.bf16.msra.mxu0 0
      %2913 = vmatpush.bf16.msra.mxu0 0
      %2914 = vmatpush.bf16.msra.mxu0 0
      %2915 = vmatpush.bf16.msra.mxu0 0
      %2916 = vmatpush.bf16.msra.mxu0 %v2862
      %2917 = vmatpush.bf16.msra.mxu0 %v2860
      %2918 = vmatpush.bf16.msra.mxu0 %v2858
      %2919 = vmatpush.bf16.msra.mxu0 %v2856
      %2920 = vmatmul.bf16.gmra.mxu0 %v2872
      %v2921 = vpop.f32.mrf.mxu0
      %v2922 = vadd.f32 %v2774, %v2921
      %v2923 = vpop.f32.mrf.mxu0
      %v2924 = vadd.f32 %v2779, %v2923
      %2925 = vmatmul.bf16.gmra.mxu0 %v2875
      %v2926 = vpop.f32.mrf.mxu0
      %v2927 = vadd.f32 %v2784, %v2926
      %v2928 = vpop.f32.mrf.mxu0
      %v2929 = vadd.f32 %v2789, %v2928
      %2930 = vmatmul.bf16.gmra.mxu0 %v2878
      %v2931 = vpop.f32.mrf.mxu0
      %v2932 = vadd.f32 %v2794, %v2931
      %v2933 = vpop.f32.mrf.mxu0
      %v2934 = vadd.f32 %v2799, %v2933
      %2935 = vmatmul.bf16.gmra.mxu0 %v2881
      %v2936 = vpop.f32.mrf.mxu0
      %v2937 = vadd.f32 %v2804, %v2936
      %v2938 = vpop.f32.mrf.mxu0
      %v2939 = vadd.f32 %v2809, %v2938
      %2940 = vdwg.mxu0
      %v2941 = vpack.c.bf16 %v2736, %v2707
      %v2942 = vpack.c.bf16 %v2738, %v2709
      %v2943 = vpack.c.bf16 %v2741, %v2712
      %v2944 = vpack.c.bf16 %v2743, %v2714
      %v2945 = vpack.c.bf16 %v2746, %v2717
      %v2946 = vpack.c.bf16 %v2748, %v2719
      %v2947 = vpack.c.bf16 %v2751, %v2722
      %v2948 = vpack.c.bf16 %v2753, %v2724
      %v2949 = vpack.c.bf16 %v2922, %v2893
      %v2950 = vpack.c.bf16 %v2924, %v2895
      %v2951 = vpack.c.bf16 %v2927, %v2898
      %v2952 = vpack.c.bf16 %v2929, %v2900
      %v2953 = vpack.c.bf16 %v2932, %v2903
      %v2954 = vpack.c.bf16 %v2934, %v2905
      %v2955 = vpack.c.bf16 %v2937, %v2908
      %v2956 = vpack.c.bf16 %v2939, %v2910
      %v2957 = vld [vmem:[#allocation3] sm:$0xf]
      %v2958 = vld [vmem:[#allocation3 + $0x4] sm:$0xf]
      %v2959 = vld [vmem:[#allocation3 + $0x8] sm:$0xf]
      %v2960 = vld [vmem:[#allocation3 + $0xc] sm:$0xf]
      %v2961 = vld [vmem:[#allocation3 + $0x10] sm:$0xf]
      %v2962 = vld [vmem:[#allocation3 + $0x14] sm:$0xf]
      %v2963 = vld [vmem:[#allocation3 + $0x18] sm:$0xf]
      %v2964 = vld [vmem:[#allocation3 + $0x1c] sm:$0xf]
      %v2965 = vld [vmem:[#allocation3 + $0x20] sm:$0xf]
      %v2966 = vld [vmem:[#allocation3 + $0x24] sm:$0xf]
      %v2967 = vld [vmem:[#allocation3 + $0x28] sm:$0xf]
      %v2968 = vld [vmem:[#allocation3 + $0x2c] sm:$0xf]
      %v2969 = vld [vmem:[#allocation3 + $0x30] sm:$0xf]
      %v2970 = vld [vmem:[#allocation3 + $0x34] sm:$0xf]
      %v2971 = vld [vmem:[#allocation3 + $0x38] sm:$0xf]
      %v2972 = vld [vmem:[#allocation3 + $0x3c] sm:$0xf]
      %v2977 = vunpack.c.l.b16 %v2957
      %v2978 = vunpack.c.l.b16 %v2958
      %v2979 = vunpack.c.l.b16 %v2959
      %v2980 = vunpack.c.l.b16 %v2960
      %v2981 = vpack.c.b16 %v2978, %v2977
      %v2982 = vpack.c.b16 %v2980, %v2979
      %v2985 = vunpack.c.l.b16 %v2941
      %v2986 = vunpack.c.h.b16 %v2941
      %v2987 = vunpack.c.l.b16 %v2942
      %v2988 = vunpack.c.h.b16 %v2942
      %v2989 = vpack.c.b16 %v2987, %v2985
      %v2990 = vpack.c.b16 %v2988, %v2986
      %vm2993 = vcmask 130048
      %v2995 = vsel %vm2993, %v2981, 0
      %v2998 = vsel %vm2993, %v2982, 0
      %3000 = vmatpush.bf16.msra.mxu0 0
      %3001 = vmatpush.bf16.msra.mxu0 0
      %3002 = vmatpush.bf16.msra.mxu0 0
      %3003 = vmatpush.bf16.msra.mxu0 0
      %3004 = vmatpush.bf16.msra.mxu0 0
      %3005 = vmatpush.bf16.msra.mxu0 0
      %3006 = vmatpush.bf16.msra.mxu0 0
      %3007 = vmatpush.bf16.msra.mxu0 %v2989
      %3008 = vmatmul.bf16.gmra.mxu0 %v2995
      %v3009 = vpop.f32.mrf.mxu0
      %v3010 = vadd.f32 0.0, %v3009
      %v3011 = vpop.f32.mrf.mxu0
      %v3012 = vadd.f32 0.0, %v3011
      %3013 = vmatmul.bf16.gmra.mxu0 %v2998
      %v3014 = vpop.f32.mrf.mxu0
      %v3015 = vadd.f32 0.0, %v3014
      %v3016 = vpop.f32.mrf.mxu0
      %v3017 = vadd.f32 0.0, %v3016
      %3018 = vdwg.mxu0
      %3019 = vmatpush.bf16.msra.mxu0 0
      %3020 = vmatpush.bf16.msra.mxu0 0
      %3021 = vmatpush.bf16.msra.mxu0 0
      %3022 = vmatpush.bf16.msra.mxu0 0
      %3023 = vmatpush.bf16.msra.mxu0 0
      %3024 = vmatpush.bf16.msra.mxu0 0
      %3025 = vmatpush.bf16.msra.mxu0 0
      %3026 = vmatpush.bf16.msra.mxu0 %v2990
      %3027 = vmatmul.bf16.gmra.mxu0 %v2995
      %v3028 = vpop.f32.mrf.mxu0
      %v3029 = vadd.f32 0.0, %v3028
      %v3030 = vpop.f32.mrf.mxu0
      %v3031 = vadd.f32 0.0, %v3030
      %3032 = vmatmul.bf16.gmra.mxu0 %v2998
      %v3033 = vpop.f32.mrf.mxu0
      %v3034 = vadd.f32 0.0, %v3033
      %v3035 = vpop.f32.mrf.mxu0
      %v3036 = vadd.f32 0.0, %v3035
      %3037 = vdwg.mxu0
      %v3042 = vunpack.c.l.b16 %v2961
      %v3043 = vunpack.c.l.b16 %v2962
      %v3044 = vunpack.c.l.b16 %v2963
      %v3045 = vunpack.c.l.b16 %v2964
      %v3046 = vpack.c.b16 %v3043, %v3042
      %v3047 = vpack.c.b16 %v3045, %v3044
      %v3050 = vunpack.c.l.b16 %v2943
      %v3051 = vunpack.c.h.b16 %v2943
      %v3052 = vunpack.c.l.b16 %v2944
      %v3053 = vunpack.c.h.b16 %v2944
      %v3054 = vpack.c.b16 %v3052, %v3050
      %v3055 = vpack.c.b16 %v3053, %v3051
      %v3059 = vsel %vm2993, %v3046, 0
      %v3062 = vsel %vm2993, %v3047, 0
      %3064 = vmatpush.bf16.msra.mxu0 0
      %3065 = vmatpush.bf16.msra.mxu0 0
      %3066 = vmatpush.bf16.msra.mxu0 0
      %3067 = vmatpush.bf16.msra.mxu0 0
      %3068 = vmatpush.bf16.msra.mxu0 0
      %3069 = vmatpush.bf16.msra.mxu0 0
      %3070 = vmatpush.bf16.msra.mxu0 0
      %3071 = vmatpush.bf16.msra.mxu0 %v3054
      %3072 = vmatmul.bf16.gmra.mxu0 %v3059
      %v3073 = vpop.f32.mrf.mxu0
      %v3074 = vadd.f32 0.0, %v3073
      %v3075 = vpop.f32.mrf.mxu0
      %v3076 = vadd.f32 0.0, %v3075
      %3077 = vmatmul.bf16.gmra.mxu0 %v3062
      %v3078 = vpop.f32.mrf.mxu0
      %v3079 = vadd.f32 0.0, %v3078
      %v3080 = vpop.f32.mrf.mxu0
      %v3081 = vadd.f32 0.0, %v3080
      %3082 = vdwg.mxu0
      %3083 = vmatpush.bf16.msra.mxu0 0
      %3084 = vmatpush.bf16.msra.mxu0 0
      %3085 = vmatpush.bf16.msra.mxu0 0
      %3086 = vmatpush.bf16.msra.mxu0 0
      %3087 = vmatpush.bf16.msra.mxu0 0
      %3088 = vmatpush.bf16.msra.mxu0 0
      %3089 = vmatpush.bf16.msra.mxu0 0
      %3090 = vmatpush.bf16.msra.mxu0 %v3055
      %3091 = vmatmul.bf16.gmra.mxu0 %v3059
      %v3092 = vpop.f32.mrf.mxu0
      %v3093 = vadd.f32 0.0, %v3092
      %v3094 = vpop.f32.mrf.mxu0
      %v3095 = vadd.f32 0.0, %v3094
      %3096 = vmatmul.bf16.gmra.mxu0 %v3062
      %v3097 = vpop.f32.mrf.mxu0
      %v3098 = vadd.f32 0.0, %v3097
      %v3099 = vpop.f32.mrf.mxu0
      %v3100 = vadd.f32 0.0, %v3099
      %3101 = vdwg.mxu0
      %v3106 = vunpack.c.l.b16 %v2965
      %v3107 = vunpack.c.l.b16 %v2966
      %v3108 = vunpack.c.l.b16 %v2967
      %v3109 = vunpack.c.l.b16 %v2968
      %v3110 = vpack.c.b16 %v3107, %v3106
      %v3111 = vpack.c.b16 %v3109, %v3108
      %v3114 = vunpack.c.l.b16 %v2945
      %v3115 = vunpack.c.h.b16 %v2945
      %v3116 = vunpack.c.l.b16 %v2946
      %v3117 = vunpack.c.h.b16 %v2946
      %v3118 = vpack.c.b16 %v3116, %v3114
      %v3119 = vpack.c.b16 %v3117, %v3115
      %v3123 = vsel %vm2993, %v3110, 0
      %v3126 = vsel %vm2993, %v3111, 0
      %3128 = vmatpush.bf16.msra.mxu0 0
      %3129 = vmatpush.bf16.msra.mxu0 0
      %3130 = vmatpush.bf16.msra.mxu0 0
      %3131 = vmatpush.bf16.msra.mxu0 0
      %3132 = vmatpush.bf16.msra.mxu0 0
      %3133 = vmatpush.bf16.msra.mxu0 0
      %3134 = vmatpush.bf16.msra.mxu0 0
      %3135 = vmatpush.bf16.msra.mxu0 %v3118
      %3136 = vmatmul.bf16.gmra.mxu0 %v3123
      %v3137 = vpop.f32.mrf.mxu0
      %v3138 = vadd.f32 0.0, %v3137
      %v3139 = vpop.f32.mrf.mxu0
      %v3140 = vadd.f32 0.0, %v3139
      %3141 = vmatmul.bf16.gmra.mxu0 %v3126
      %v3142 = vpop.f32.mrf.mxu0
      %v3143 = vadd.f32 0.0, %v3142
      %v3144 = vpop.f32.mrf.mxu0
      %v3145 = vadd.f32 0.0, %v3144
      %3146 = vdwg.mxu0
      %3147 = vmatpush.bf16.msra.mxu0 0
      %3148 = vmatpush.bf16.msra.mxu0 0
      %3149 = vmatpush.bf16.msra.mxu0 0
      %3150 = vmatpush.bf16.msra.mxu0 0
      %3151 = vmatpush.bf16.msra.mxu0 0
      %3152 = vmatpush.bf16.msra.mxu0 0
      %3153 = vmatpush.bf16.msra.mxu0 0
      %3154 = vmatpush.bf16.msra.mxu0 %v3119
      %3155 = vmatmul.bf16.gmra.mxu0 %v3123
      %v3156 = vpop.f32.mrf.mxu0
      %v3157 = vadd.f32 0.0, %v3156
      %v3158 = vpop.f32.mrf.mxu0
      %v3159 = vadd.f32 0.0, %v3158
      %3160 = vmatmul.bf16.gmra.mxu0 %v3126
      %v3161 = vpop.f32.mrf.mxu0
      %v3162 = vadd.f32 0.0, %v3161
      %v3163 = vpop.f32.mrf.mxu0
      %v3164 = vadd.f32 0.0, %v3163
      %3165 = vdwg.mxu0
      %v3170 = vunpack.c.l.b16 %v2969
      %v3171 = vunpack.c.l.b16 %v2970
      %v3172 = vunpack.c.l.b16 %v2971
      %v3173 = vunpack.c.l.b16 %v2972
      %v3174 = vpack.c.b16 %v3171, %v3170
      %v3175 = vpack.c.b16 %v3173, %v3172
      %v3178 = vunpack.c.l.b16 %v2947
      %v3179 = vunpack.c.h.b16 %v2947
      %v3180 = vunpack.c.l.b16 %v2948
      %v3181 = vunpack.c.h.b16 %v2948
      %v3182 = vpack.c.b16 %v3180, %v3178
      %v3183 = vpack.c.b16 %v3181, %v3179
      %v3187 = vsel %vm2993, %v3174, 0
      %v3190 = vsel %vm2993, %v3175, 0
      %3192 = vmatpush.bf16.msra.mxu0 0
      %3193 = vmatpush.bf16.msra.mxu0 0
      %3194 = vmatpush.bf16.msra.mxu0 0
      %3195 = vmatpush.bf16.msra.mxu0 0
      %3196 = vmatpush.bf16.msra.mxu0 0
      %3197 = vmatpush.bf16.msra.mxu0 0
      %3198 = vmatpush.bf16.msra.mxu0 0
      %3199 = vmatpush.bf16.msra.mxu0 %v3182
      %3200 = vmatmul.bf16.gmra.mxu0 %v3187
      %v3201 = vpop.f32.mrf.mxu0
      %v3202 = vadd.f32 0.0, %v3201
      %v3203 = vpop.f32.mrf.mxu0
      %v3204 = vadd.f32 0.0, %v3203
      %3205 = vmatmul.bf16.gmra.mxu0 %v3190
      %v3206 = vpop.f32.mrf.mxu0
      %v3207 = vadd.f32 0.0, %v3206
      %v3208 = vpop.f32.mrf.mxu0
      %v3209 = vadd.f32 0.0, %v3208
      %3210 = vdwg.mxu0
      %3211 = vmatpush.bf16.msra.mxu0 0
      %3212 = vmatpush.bf16.msra.mxu0 0
      %3213 = vmatpush.bf16.msra.mxu0 0
      %3214 = vmatpush.bf16.msra.mxu0 0
      %3215 = vmatpush.bf16.msra.mxu0 0
      %3216 = vmatpush.bf16.msra.mxu0 0
      %3217 = vmatpush.bf16.msra.mxu0 0
      %3218 = vmatpush.bf16.msra.mxu0 %v3183
      %3219 = vmatmul.bf16.gmra.mxu0 %v3187
      %v3220 = vpop.f32.mrf.mxu0
      %v3221 = vadd.f32 0.0, %v3220
      %v3222 = vpop.f32.mrf.mxu0
      %v3223 = vadd.f32 0.0, %v3222
      %3224 = vmatmul.bf16.gmra.mxu0 %v3190
      %v3225 = vpop.f32.mrf.mxu0
      %v3226 = vadd.f32 0.0, %v3225
      %v3227 = vpop.f32.mrf.mxu0
      %v3228 = vadd.f32 0.0, %v3227
      %3229 = vdwg.mxu0
      %v3230 = vld [vmem:[#allocation4] sm:$0xff]
      %v3231 = vld [vmem:[#allocation4 + $0x8] sm:$0xff]
      %v3232 = vld [vmem:[#allocation4 + $0x10] sm:$0xff]
      %v3233 = vld [vmem:[#allocation4 + $0x18] sm:$0xff]
      %v3234 = vld [vmem:[#allocation4 + $0x20] sm:$0xff]
      %v3235 = vld [vmem:[#allocation4 + $0x28] sm:$0xff]
      %v3236 = vld [vmem:[#allocation4 + $0x30] sm:$0xff]
      %v3237 = vld [vmem:[#allocation4 + $0x38] sm:$0xff]
      %v3238 = vld [vmem:[#allocation4 + $0x40] sm:$0xff]
      %v3239 = vld [vmem:[#allocation4 + $0x48] sm:$0xff]
      %v3240 = vld [vmem:[#allocation4 + $0x50] sm:$0xff]
      %v3241 = vld [vmem:[#allocation4 + $0x58] sm:$0xff]
      %v3242 = vld [vmem:[#allocation4 + $0x60] sm:$0xff]
      %v3243 = vld [vmem:[#allocation4 + $0x68] sm:$0xff]
      %v3244 = vld [vmem:[#allocation4 + $0x70] sm:$0xff]
      %v3245 = vld [vmem:[#allocation4 + $0x78] sm:$0xff]
      %v3246 = vmax.f32 %v3010, %v3029
      %3247 = vmax.xlane.f32.xlu0 %v3246
      %v3248 = vpop.xlane.xlu0 %3247
      %v3249 = vmax.f32 %v3012, %v3031
      %3250 = vmax.xlane.f32.xlu0 %v3249
      %v3251 = vpop.xlane.xlu0 %3250
      %v3252 = vmax.f32 %v3015, %v3034
      %3253 = vmax.xlane.f32.xlu0 %v3252
      %v3254 = vpop.xlane.xlu0 %3253
      %v3255 = vmax.f32 %v3017, %v3036
      %3256 = vmax.xlane.f32.xlu0 %v3255
      %v3257 = vpop.xlane.xlu0 %3256
      %v3258 = vmax.f32 %v3074, %v3093
      %3259 = vmax.xlane.f32.xlu0 %v3258
      %v3260 = vpop.xlane.xlu0 %3259
      %v3261 = vmax.f32 %v3076, %v3095
      %3262 = vmax.xlane.f32.xlu0 %v3261
      %v3263 = vpop.xlane.xlu0 %3262
      %v3264 = vmax.f32 %v3079, %v3098
      %3265 = vmax.xlane.f32.xlu0 %v3264
      %v3266 = vpop.xlane.xlu0 %3265
      %v3267 = vmax.f32 %v3081, %v3100
      %3268 = vmax.xlane.f32.xlu0 %v3267
      %v3269 = vpop.xlane.xlu0 %3268
      %v3270 = vmax.f32 %v3138, %v3157
      %3271 = vmax.xlane.f32.xlu0 %v3270
      %v3272 = vpop.xlane.xlu0 %3271
      %v3273 = vmax.f32 %v3140, %v3159
      %3274 = vmax.xlane.f32.xlu0 %v3273
      %v3275 = vpop.xlane.xlu0 %3274
      %v3276 = vmax.f32 %v3143, %v3162
      %3277 = vmax.xlane.f32.xlu0 %v3276
      %v3278 = vpop.xlane.xlu0 %3277
      %v3279 = vmax.f32 %v3145, %v3164
      %3280 = vmax.xlane.f32.xlu0 %v3279
      %v3281 = vpop.xlane.xlu0 %3280
      %v3282 = vmax.f32 %v3202, %v3221
      %3283 = vmax.xlane.f32.xlu0 %v3282
      %v3284 = vpop.xlane.xlu0 %3283
      %v3285 = vmax.f32 %v3204, %v3223
      %3286 = vmax.xlane.f32.xlu0 %v3285
      %v3287 = vpop.xlane.xlu0 %3286
      %v3288 = vmax.f32 %v3207, %v3226
      %3289 = vmax.xlane.f32.xlu0 %v3288
      %v3290 = vpop.xlane.xlu0 %3289
      %v3291 = vmax.f32 %v3209, %v3228
      %3292 = vmax.xlane.f32.xlu0 %v3291
      %v3293 = vpop.xlane.xlu0 %3292
      %v3294 = vmax.f32 %v3230, %v3248
      %v3295 = vmax.f32 %v3231, %v3251
      %v3296 = vmax.f32 %v3232, %v3254
      %v3297 = vmax.f32 %v3233, %v3257
      %v3298 = vmax.f32 %v3234, %v3260
      %v3299 = vmax.f32 %v3235, %v3263
      %v3300 = vmax.f32 %v3236, %v3266
      %v3301 = vmax.f32 %v3237, %v3269
      %v3302 = vmax.f32 %v3238, %v3272
      %v3303 = vmax.f32 %v3239, %v3275
      %v3304 = vmax.f32 %v3240, %v3278
      %v3305 = vmax.f32 %v3241, %v3281
      %v3306 = vmax.f32 %v3242, %v3284
      %v3307 = vmax.f32 %v3243, %v3287
      %v3308 = vmax.f32 %v3244, %v3290
      %v3309 = vmax.f32 %v3245, %v3293
      %v3310 = vsub.f32 %v3230, %v3294
      %v3311 = vsub.f32 %v3231, %v3295
      %v3312 = vsub.f32 %v3232, %v3296
      %v3313 = vsub.f32 %v3233, %v3297
      %v3314 = vsub.f32 %v3234, %v3298
      %v3315 = vsub.f32 %v3235, %v3299
      %v3316 = vsub.f32 %v3236, %v3300
      %v3317 = vsub.f32 %v3237, %v3301
      %v3318 = vsub.f32 %v3238, %v3302
      %v3319 = vsub.f32 %v3239, %v3303
      %v3320 = vsub.f32 %v3240, %v3304
      %v3321 = vsub.f32 %v3241, %v3305
      %v3322 = vsub.f32 %v3242, %v3306
      %v3323 = vsub.f32 %v3243, %v3307
      %v3324 = vsub.f32 %v3244, %v3308
      %v3325 = vsub.f32 %v3245, %v3309
      %v3326 = vmul.f32 %v3310, 1.442695
      %v3327 = vpow.pop %v3326
      %v3328 = vmul.f32 %v3311, 1.442695
      %v3329 = vpow.pop %v3328
      %v3330 = vmul.f32 %v3312, 1.442695
      %v3331 = vpow.pop %v3330
      %v3332 = vmul.f32 %v3313, 1.442695
      %v3333 = vpow.pop %v3332
      %v3334 = vmul.f32 %v3314, 1.442695
      %v3335 = vpow.pop %v3334
      %v3336 = vmul.f32 %v3315, 1.442695
      %v3337 = vpow.pop %v3336
      %v3338 = vmul.f32 %v3316, 1.442695
      %v3339 = vpow.pop %v3338
      %v3340 = vmul.f32 %v3317, 1.442695
      %v3341 = vpow.pop %v3340
      %v3342 = vmul.f32 %v3318, 1.442695
      %v3343 = vpow.pop %v3342
      %v3344 = vmul.f32 %v3319, 1.442695
      %v3345 = vpow.pop %v3344
      %v3346 = vmul.f32 %v3320, 1.442695
      %v3347 = vpow.pop %v3346
      %v3348 = vmul.f32 %v3321, 1.442695
      %v3349 = vpow.pop %v3348
      %v3350 = vmul.f32 %v3322, 1.442695
      %v3351 = vpow.pop %v3350
      %v3352 = vmul.f32 %v3323, 1.442695
      %v3353 = vpow.pop %v3352
      %v3354 = vmul.f32 %v3324, 1.442695
      %v3355 = vpow.pop %v3354
      %v3356 = vmul.f32 %v3325, 1.442695
      %v3357 = vpow.pop %v3356
      %3359 = vset.pattern.permute.xlu0 0
      %3360 = vperm.xlu0 %3359, %v3294
      %v3361 = vpop.permute.xlu0 %3360
      %3364 = vset.pattern.permute.xlu0 0
      %3365 = vperm.xlu0 %3364, %v3295
      %v3366 = vpop.permute.xlu0 %3365
      %3369 = vset.pattern.permute.xlu0 0
      %3370 = vperm.xlu0 %3369, %v3296
      %v3371 = vpop.permute.xlu0 %3370
      %3374 = vset.pattern.permute.xlu0 0
      %3375 = vperm.xlu0 %3374, %v3297
      %v3376 = vpop.permute.xlu0 %3375
      %3379 = vset.pattern.permute.xlu0 0
      %3380 = vperm.xlu0 %3379, %v3298
      %v3381 = vpop.permute.xlu0 %3380
      %3384 = vset.pattern.permute.xlu0 0
      %3385 = vperm.xlu0 %3384, %v3299
      %v3386 = vpop.permute.xlu0 %3385
      %3389 = vset.pattern.permute.xlu0 0
      %3390 = vperm.xlu0 %3389, %v3300
      %v3391 = vpop.permute.xlu0 %3390
      %3394 = vset.pattern.permute.xlu0 0
      %3395 = vperm.xlu0 %3394, %v3301
      %v3396 = vpop.permute.xlu0 %3395
      %3399 = vset.pattern.permute.xlu0 0
      %3400 = vperm.xlu0 %3399, %v3302
      %v3401 = vpop.permute.xlu0 %3400
      %3404 = vset.pattern.permute.xlu0 0
      %3405 = vperm.xlu0 %3404, %v3303
      %v3406 = vpop.permute.xlu0 %3405
      %3409 = vset.pattern.permute.xlu0 0
      %3410 = vperm.xlu0 %3409, %v3304
      %v3411 = vpop.permute.xlu0 %3410
      %3414 = vset.pattern.permute.xlu0 0
      %3415 = vperm.xlu0 %3414, %v3305
      %v3416 = vpop.permute.xlu0 %3415
      %3419 = vset.pattern.permute.xlu0 0
      %3420 = vperm.xlu0 %3419, %v3306
      %v3421 = vpop.permute.xlu0 %3420
      %3424 = vset.pattern.permute.xlu0 0
      %3425 = vperm.xlu0 %3424, %v3307
      %v3426 = vpop.permute.xlu0 %3425
      %3429 = vset.pattern.permute.xlu0 0
      %3430 = vperm.xlu0 %3429, %v3308
      %v3431 = vpop.permute.xlu0 %3430
      %3434 = vset.pattern.permute.xlu0 0
      %3435 = vperm.xlu0 %3434, %v3309
      %v3436 = vpop.permute.xlu0 %3435
      %v3438 = vsub.f32 %v3010, %v3361
      %v3439 = vsub.f32 %v3029, %v3361
      %v3440 = vsub.f32 %v3012, %v3366
      %v3441 = vsub.f32 %v3031, %v3366
      %v3442 = vsub.f32 %v3015, %v3371
      %v3443 = vsub.f32 %v3034, %v3371
      %v3444 = vsub.f32 %v3017, %v3376
      %v3445 = vsub.f32 %v3036, %v3376
      %v3446 = vsub.f32 %v3074, %v3381
      %v3447 = vsub.f32 %v3093, %v3381
      %v3448 = vsub.f32 %v3076, %v3386
      %v3449 = vsub.f32 %v3095, %v3386
      %v3450 = vsub.f32 %v3079, %v3391
      %v3451 = vsub.f32 %v3098, %v3391
      %v3452 = vsub.f32 %v3081, %v3396
      %v3453 = vsub.f32 %v3100, %v3396
      %v3454 = vsub.f32 %v3138, %v3401
      %v3455 = vsub.f32 %v3157, %v3401
      %v3456 = vsub.f32 %v3140, %v3406
      %v3457 = vsub.f32 %v3159, %v3406
      %v3458 = vsub.f32 %v3143, %v3411
      %v3459 = vsub.f32 %v3162, %v3411
      %v3460 = vsub.f32 %v3145, %v3416
      %v3461 = vsub.f32 %v3164, %v3416
      %v3462 = vsub.f32 %v3202, %v3421
      %v3463 = vsub.f32 %v3221, %v3421
      %v3464 = vsub.f32 %v3204, %v3426
      %v3465 = vsub.f32 %v3223, %v3426
      %v3466 = vsub.f32 %v3207, %v3431
      %v3467 = vsub.f32 %v3226, %v3431
      %v3468 = vsub.f32 %v3209, %v3436
      %v3469 = vsub.f32 %v3228, %v3436
      %v3470 = vmul.f32 %v3438, 1.442695
      %v3471 = vpow.pop %v3470
      %v3472 = vmul.f32 %v3439, 1.442695
      %v3473 = vpow.pop %v3472
      %v3474 = vmul.f32 %v3440, 1.442695
      %v3475 = vpow.pop %v3474
      %v3476 = vmul.f32 %v3441, 1.442695
      %v3477 = vpow.pop %v3476
      %v3478 = vmul.f32 %v3442, 1.442695
      %v3479 = vpow.pop %v3478
      %v3480 = vmul.f32 %v3443, 1.442695
      %v3481 = vpow.pop %v3480
      %v3482 = vmul.f32 %v3444, 1.442695
      %v3483 = vpow.pop %v3482
      %v3484 = vmul.f32 %v3445, 1.442695
      %v3485 = vpow.pop %v3484
      %v3486 = vmul.f32 %v3446, 1.442695
      %v3487 = vpow.pop %v3486
      %v3488 = vmul.f32 %v3447, 1.442695
      %v3489 = vpow.pop %v3488
      %v3490 = vmul.f32 %v3448, 1.442695
      %v3491 = vpow.pop %v3490
      %v3492 = vmul.f32 %v3449, 1.442695
      %v3493 = vpow.pop %v3492
      %v3494 = vmul.f32 %v3450, 1.442695
      %v3495 = vpow.pop %v3494
      %v3496 = vmul.f32 %v3451, 1.442695
      %v3497 = vpow.pop %v3496
      %v3498 = vmul.f32 %v3452, 1.442695
      %v3499 = vpow.pop %v3498
      %v3500 = vmul.f32 %v3453, 1.442695
      %v3501 = vpow.pop %v3500
      %v3502 = vmul.f32 %v3454, 1.442695
      %v3503 = vpow.pop %v3502
      %v3504 = vmul.f32 %v3455, 1.442695
      %v3505 = vpow.pop %v3504
      %v3506 = vmul.f32 %v3456, 1.442695
      %v3507 = vpow.pop %v3506
      %v3508 = vmul.f32 %v3457, 1.442695
      %v3509 = vpow.pop %v3508
      %v3510 = vmul.f32 %v3458, 1.442695
      %v3511 = vpow.pop %v3510
      %v3512 = vmul.f32 %v3459, 1.442695
      %v3513 = vpow.pop %v3512
      %v3514 = vmul.f32 %v3460, 1.442695
      %v3515 = vpow.pop %v3514
      %v3516 = vmul.f32 %v3461, 1.442695
      %v3517 = vpow.pop %v3516
      %v3518 = vmul.f32 %v3462, 1.442695
      %v3519 = vpow.pop %v3518
      %v3520 = vmul.f32 %v3463, 1.442695
      %v3521 = vpow.pop %v3520
      %v3522 = vmul.f32 %v3464, 1.442695
      %v3523 = vpow.pop %v3522
      %v3524 = vmul.f32 %v3465, 1.442695
      %v3525 = vpow.pop %v3524
      %v3526 = vmul.f32 %v3466, 1.442695
      %v3527 = vpow.pop %v3526
      %v3528 = vmul.f32 %v3467, 1.442695
      %v3529 = vpow.pop %v3528
      %v3530 = vmul.f32 %v3468, 1.442695
      %v3531 = vpow.pop %v3530
      %v3532 = vmul.f32 %v3469, 1.442695
      %v3533 = vpow.pop %v3532
      %v3534 = vld [vmem:[#allocation5] sm:$0xff]
      %v3535 = vld [vmem:[#allocation5 + $0x8] sm:$0xff]
      %v3536 = vld [vmem:[#allocation5 + $0x10] sm:$0xff]
      %v3537 = vld [vmem:[#allocation5 + $0x18] sm:$0xff]
      %v3538 = vld [vmem:[#allocation5 + $0x20] sm:$0xff]
      %v3539 = vld [vmem:[#allocation5 + $0x28] sm:$0xff]
      %v3540 = vld [vmem:[#allocation5 + $0x30] sm:$0xff]
      %v3541 = vld [vmem:[#allocation5 + $0x38] sm:$0xff]
      %v3542 = vld [vmem:[#allocation5 + $0x40] sm:$0xff]
      %v3543 = vld [vmem:[#allocation5 + $0x48] sm:$0xff]
      %v3544 = vld [vmem:[#allocation5 + $0x50] sm:$0xff]
      %v3545 = vld [vmem:[#allocation5 + $0x58] sm:$0xff]
      %v3546 = vld [vmem:[#allocation5 + $0x60] sm:$0xff]
      %v3547 = vld [vmem:[#allocation5 + $0x68] sm:$0xff]
      %v3548 = vld [vmem:[#allocation5 + $0x70] sm:$0xff]
      %v3549 = vld [vmem:[#allocation5 + $0x78] sm:$0xff]
      %v3550 = vmul.f32 %v3327, %v3534
      %v3551 = vmul.f32 %v3329, %v3535
      %v3552 = vmul.f32 %v3331, %v3536
      %v3553 = vmul.f32 %v3333, %v3537
      %v3554 = vmul.f32 %v3335, %v3538
      %v3555 = vmul.f32 %v3337, %v3539
      %v3556 = vmul.f32 %v3339, %v3540
      %v3557 = vmul.f32 %v3341, %v3541
      %v3558 = vmul.f32 %v3343, %v3542
      %v3559 = vmul.f32 %v3345, %v3543
      %v3560 = vmul.f32 %v3347, %v3544
      %v3561 = vmul.f32 %v3349, %v3545
      %v3562 = vmul.f32 %v3351, %v3546
      %v3563 = vmul.f32 %v3353, %v3547
      %v3564 = vmul.f32 %v3355, %v3548
      %v3565 = vmul.f32 %v3357, %v3549
      %v3566 = vadd.f32 %v3471, %v3473
      %3567 = vadd.xlane.f32.xlu0 %v3566
      %v3568 = vpop.xlane.xlu0 %3567
      %v3569 = vadd.f32 %v3475, %v3477
      %3570 = vadd.xlane.f32.xlu0 %v3569
      %v3571 = vpop.xlane.xlu0 %3570
      %v3572 = vadd.f32 %v3479, %v3481
      %3573 = vadd.xlane.f32.xlu0 %v3572
      %v3574 = vpop.xlane.xlu0 %3573
      %v3575 = vadd.f32 %v3483, %v3485
      %3576 = vadd.xlane.f32.xlu0 %v3575
      %v3577 = vpop.xlane.xlu0 %3576
      %v3578 = vadd.f32 %v3487, %v3489
      %3579 = vadd.xlane.f32.xlu0 %v3578
      %v3580 = vpop.xlane.xlu0 %3579
      %v3581 = vadd.f32 %v3491, %v3493
      %3582 = vadd.xlane.f32.xlu0 %v3581
      %v3583 = vpop.xlane.xlu0 %3582
      %v3584 = vadd.f32 %v3495, %v3497
      %3585 = vadd.xlane.f32.xlu0 %v3584
      %v3586 = vpop.xlane.xlu0 %3585
      %v3587 = vadd.f32 %v3499, %v3501
      %3588 = vadd.xlane.f32.xlu0 %v3587
      %v3589 = vpop.xlane.xlu0 %3588
      %v3590 = vadd.f32 %v3503, %v3505
      %3591 = vadd.xlane.f32.xlu0 %v3590
      %v3592 = vpop.xlane.xlu0 %3591
      %v3593 = vadd.f32 %v3507, %v3509
      %3594 = vadd.xlane.f32.xlu0 %v3593
      %v3595 = vpop.xlane.xlu0 %3594
      %v3596 = vadd.f32 %v3511, %v3513
      %3597 = vadd.xlane.f32.xlu0 %v3596
      %v3598 = vpop.xlane.xlu0 %3597
      %v3599 = vadd.f32 %v3515, %v3517
      %3600 = vadd.xlane.f32.xlu0 %v3599
      %v3601 = vpop.xlane.xlu0 %3600
      %v3602 = vadd.f32 %v3519, %v3521
      %3603 = vadd.xlane.f32.xlu0 %v3602
      %v3604 = vpop.xlane.xlu0 %3603
      %v3605 = vadd.f32 %v3523, %v3525
      %3606 = vadd.xlane.f32.xlu0 %v3605
      %v3607 = vpop.xlane.xlu0 %3606
      %v3608 = vadd.f32 %v3527, %v3529
      %3609 = vadd.xlane.f32.xlu0 %v3608
      %v3610 = vpop.xlane.xlu0 %3609
      %v3611 = vadd.f32 %v3531, %v3533
      %3612 = vadd.xlane.f32.xlu0 %v3611
      %v3613 = vpop.xlane.xlu0 %3612
      %v3614 = vadd.f32 %v3550, %v3568
      %v3615 = vadd.f32 %v3551, %v3571
      %v3616 = vadd.f32 %v3552, %v3574
      %v3617 = vadd.f32 %v3553, %v3577
      %v3618 = vadd.f32 %v3554, %v3580
      %v3619 = vadd.f32 %v3555, %v3583
      %v3620 = vadd.f32 %v3556, %v3586
      %v3621 = vadd.f32 %v3557, %v3589
      %v3622 = vadd.f32 %v3558, %v3592
      %v3623 = vadd.f32 %v3559, %v3595
      %v3624 = vadd.f32 %v3560, %v3598
      %v3625 = vadd.f32 %v3561, %v3601
      %v3626 = vadd.f32 %v3562, %v3604
      %v3627 = vadd.f32 %v3563, %v3607
      %v3628 = vadd.f32 %v3564, %v3610
      %v3629 = vadd.f32 %v3565, %v3613
      %vm3630 = vcmask 7168
      %3631 = vst.msk [vmem:[#allocation5] sm:$0xff] %vm3630, %v3614
      %3632 = vst.msk [vmem:[#allocation5 + $0x8] sm:$0xff] %vm3630, %v3615
      %3633 = vst.msk [vmem:[#allocation5 + $0x10] sm:$0xff] %vm3630, %v3616
      %3634 = vst.msk [vmem:[#allocation5 + $0x18] sm:$0xff] %vm3630, %v3617
      %3635 = vst.msk [vmem:[#allocation5 + $0x20] sm:$0xff] %vm3630, %v3618
      %3636 = vst.msk [vmem:[#allocation5 + $0x28] sm:$0xff] %vm3630, %v3619
      %3637 = vst.msk [vmem:[#allocation5 + $0x30] sm:$0xff] %vm3630, %v3620
      %3638 = vst.msk [vmem:[#allocation5 + $0x38] sm:$0xff] %vm3630, %v3621
      %3639 = vst.msk [vmem:[#allocation5 + $0x40] sm:$0xff] %vm3630, %v3622
      %3640 = vst.msk [vmem:[#allocation5 + $0x48] sm:$0xff] %vm3630, %v3623
      %3641 = vst.msk [vmem:[#allocation5 + $0x50] sm:$0xff] %vm3630, %v3624
      %3642 = vst.msk [vmem:[#allocation5 + $0x58] sm:$0xff] %vm3630, %v3625
      %3643 = vst.msk [vmem:[#allocation5 + $0x60] sm:$0xff] %vm3630, %v3626
      %3644 = vst.msk [vmem:[#allocation5 + $0x68] sm:$0xff] %vm3630, %v3627
      %3645 = vst.msk [vmem:[#allocation5 + $0x70] sm:$0xff] %vm3630, %v3628
      %3646 = vst.msk [vmem:[#allocation5 + $0x78] sm:$0xff] %vm3630, %v3629
      %v3647 = vld [vmem:[#allocation6] sm:$0xff]
      %v3648 = vld [vmem:[#allocation6 + $0x8] sm:$0xff]
      %v3649 = vld [vmem:[#allocation6 + $0x10] sm:$0xff]
      %v3650 = vld [vmem:[#allocation6 + $0x18] sm:$0xff]
      %v3651 = vld [vmem:[#allocation6 + $0x20] sm:$0xff]
      %v3652 = vld [vmem:[#allocation6 + $0x28] sm:$0xff]
      %v3653 = vld [vmem:[#allocation6 + $0x30] sm:$0xff]
      %v3654 = vld [vmem:[#allocation6 + $0x38] sm:$0xff]
      %v3655 = vld [vmem:[#allocation6 + $0x40] sm:$0xff]
      %v3656 = vld [vmem:[#allocation6 + $0x48] sm:$0xff]
      %v3657 = vld [vmem:[#allocation6 + $0x50] sm:$0xff]
      %v3658 = vld [vmem:[#allocation6 + $0x58] sm:$0xff]
      %v3659 = vld [vmem:[#allocation6 + $0x60] sm:$0xff]
      %v3660 = vld [vmem:[#allocation6 + $0x68] sm:$0xff]
      %v3661 = vld [vmem:[#allocation6 + $0x70] sm:$0xff]
      %v3662 = vld [vmem:[#allocation6 + $0x78] sm:$0xff]
      %3664 = vset.pattern.permute.xlu0 0
      %3665 = vperm.xlu0 %3664, %v3327
      %v3666 = vpop.permute.xlu0 %3665
      %3669 = vset.pattern.permute.xlu0 0
      %3670 = vperm.xlu0 %3669, %v3329
      %v3671 = vpop.permute.xlu0 %3670
      %3674 = vset.pattern.permute.xlu0 0
      %3675 = vperm.xlu0 %3674, %v3331
      %v3676 = vpop.permute.xlu0 %3675
      %3679 = vset.pattern.permute.xlu0 0
      %3680 = vperm.xlu0 %3679, %v3333
      %v3681 = vpop.permute.xlu0 %3680
      %3684 = vset.pattern.permute.xlu0 0
      %3685 = vperm.xlu0 %3684, %v3335
      %v3686 = vpop.permute.xlu0 %3685
      %3689 = vset.pattern.permute.xlu0 0
      %3690 = vperm.xlu0 %3689, %v3337
      %v3691 = vpop.permute.xlu0 %3690
      %3694 = vset.pattern.permute.xlu0 0
      %3695 = vperm.xlu0 %3694, %v3339
      %v3696 = vpop.permute.xlu0 %3695
      %3699 = vset.pattern.permute.xlu0 0
      %3700 = vperm.xlu0 %3699, %v3341
      %v3701 = vpop.permute.xlu0 %3700
      %3704 = vset.pattern.permute.xlu0 0
      %3705 = vperm.xlu0 %3704, %v3343
      %v3706 = vpop.permute.xlu0 %3705
      %3709 = vset.pattern.permute.xlu0 0
      %3710 = vperm.xlu0 %3709, %v3345
      %v3711 = vpop.permute.xlu0 %3710
      %3714 = vset.pattern.permute.xlu0 0
      %3715 = vperm.xlu0 %3714, %v3347
      %v3716 = vpop.permute.xlu0 %3715
      %3719 = vset.pattern.permute.xlu0 0
      %3720 = vperm.xlu0 %3719, %v3349
      %v3721 = vpop.permute.xlu0 %3720
      %3724 = vset.pattern.permute.xlu0 0
      %3725 = vperm.xlu0 %3724, %v3351
      %v3726 = vpop.permute.xlu0 %3725
      %3729 = vset.pattern.permute.xlu0 0
      %3730 = vperm.xlu0 %3729, %v3353
      %v3731 = vpop.permute.xlu0 %3730
      %3734 = vset.pattern.permute.xlu0 0
      %3735 = vperm.xlu0 %3734, %v3355
      %v3736 = vpop.permute.xlu0 %3735
      %3739 = vset.pattern.permute.xlu0 0
      %3740 = vperm.xlu0 %3739, %v3357
      %v3741 = vpop.permute.xlu0 %3740
      %v3743 = vmul.f32 %v3666, %v3647
      %v3744 = vmul.f32 %v3671, %v3648
      %v3745 = vmul.f32 %v3676, %v3649
      %v3746 = vmul.f32 %v3681, %v3650
      %v3747 = vmul.f32 %v3686, %v3651
      %v3748 = vmul.f32 %v3691, %v3652
      %v3749 = vmul.f32 %v3696, %v3653
      %v3750 = vmul.f32 %v3701, %v3654
      %v3751 = vmul.f32 %v3706, %v3655
      %v3752 = vmul.f32 %v3711, %v3656
      %v3753 = vmul.f32 %v3716, %v3657
      %v3754 = vmul.f32 %v3721, %v3658
      %v3755 = vmul.f32 %v3726, %v3659
      %v3756 = vmul.f32 %v3731, %v3660
      %v3757 = vmul.f32 %v3736, %v3661
      %v3758 = vmul.f32 %v3741, %v3662
      %v3759 = vpack.c.bf16 %v3473, %v3471
      %v3760 = vpack.c.bf16 %v3477, %v3475
      %v3761 = vpack.c.bf16 %v3481, %v3479
      %v3762 = vpack.c.bf16 %v3485, %v3483
      %v3763 = vpack.c.bf16 %v3489, %v3487
      %v3764 = vpack.c.bf16 %v3493, %v3491
      %v3765 = vpack.c.bf16 %v3497, %v3495
      %v3766 = vpack.c.bf16 %v3501, %v3499
      %v3767 = vpack.c.bf16 %v3505, %v3503
      %v3768 = vpack.c.bf16 %v3509, %v3507
      %v3769 = vpack.c.bf16 %v3513, %v3511
      %v3770 = vpack.c.bf16 %v3517, %v3515
      %v3771 = vpack.c.bf16 %v3521, %v3519
      %v3772 = vpack.c.bf16 %v3525, %v3523
      %v3773 = vpack.c.bf16 %v3529, %v3527
      %v3774 = vpack.c.bf16 %v3533, %v3531
      %v3779 = vunpack.c.l.b16 %v3759
      %v3780 = vunpack.c.h.b16 %v3759
      %v3781 = vunpack.c.l.b16 %v3760
      %v3782 = vunpack.c.h.b16 %v3760
      %v3783 = vunpack.c.l.b16 %v3761
      %v3784 = vunpack.c.h.b16 %v3761
      %v3785 = vunpack.c.l.b16 %v3762
      %v3786 = vunpack.c.h.b16 %v3762
      %v3787 = vpack.c.b16 %v3781, %v3779
      %v3788 = vpack.c.b16 %v3782, %v3780
      %v3789 = vpack.c.b16 %v3785, %v3783
      %v3790 = vpack.c.b16 %v3786, %v3784
      %v3797 = vunpack.c.l.b16 %v2949
      %v3798 = vunpack.c.h.b16 %v2949
      %v3799 = vunpack.c.l.b16 %v2950
      %v3800 = vunpack.c.h.b16 %v2950
      %v3801 = vpack.c.b16 %v3799, %v3797
      %v3802 = vpack.c.b16 %v3800, %v3798
      %3805 = vmatpush.bf16.xpose.msra.mxu0 0
      %3806 = vmatpush.bf16.xpose.msra.mxu0 0
      %3807 = vmatpush.bf16.xpose.msra.mxu0 0
      %3808 = vmatpush.bf16.xpose.msra.mxu0 0
      %3809 = vmatpush.bf16.xpose.msra.mxu0 0
      %3810 = vmatpush.bf16.xpose.msra.mxu0 0
      %3811 = vmatpush.bf16.xpose.msra.mxu0 0
      %3812 = vmatpush.bf16.xpose.msra.mxu0 %v3801
      %3813 = vmatmul.bf16.gmra.mxu0 %v3787
      %v3814 = vpop.f32.mrf.mxu0
      %v3815 = vadd.f32 0.0, %v3814
      %v3816 = vpop.f32.mrf.mxu0
      %v3817 = vadd.f32 0.0, %v3816
      %3818 = vmatmul.bf16.gmra.mxu0 %v3789
      %v3819 = vpop.f32.mrf.mxu0
      %v3820 = vadd.f32 0.0, %v3819
      %v3821 = vpop.f32.mrf.mxu0
      %v3822 = vadd.f32 0.0, %v3821
      %3823 = vdwg.mxu0
      %3824 = vmatpush.bf16.xpose.msra.mxu0 0
      %3825 = vmatpush.bf16.xpose.msra.mxu0 0
      %3826 = vmatpush.bf16.xpose.msra.mxu0 0
      %3827 = vmatpush.bf16.xpose.msra.mxu0 0
      %3828 = vmatpush.bf16.xpose.msra.mxu0 0
      %3829 = vmatpush.bf16.xpose.msra.mxu0 0
      %3830 = vmatpush.bf16.xpose.msra.mxu0 0
      %3831 = vmatpush.bf16.xpose.msra.mxu0 %v3802
      %3832 = vmatmul.bf16.gmra.mxu0 %v3788
      %v3833 = vpop.f32.mrf.mxu0
      %v3834 = vadd.f32 %v3815, %v3833
      %v3835 = vpop.f32.mrf.mxu0
      %v3836 = vadd.f32 %v3817, %v3835
      %3837 = vmatmul.bf16.gmra.mxu0 %v3790
      %v3838 = vpop.f32.mrf.mxu0
      %v3839 = vadd.f32 %v3820, %v3838
      %v3840 = vpop.f32.mrf.mxu0
      %v3841 = vadd.f32 %v3822, %v3840
      %3842 = vdwg.mxu0
      %v3847 = vunpack.c.l.b16 %v3763
      %v3848 = vunpack.c.h.b16 %v3763
      %v3849 = vunpack.c.l.b16 %v3764
      %v3850 = vunpack.c.h.b16 %v3764
      %v3851 = vunpack.c.l.b16 %v3765
      %v3852 = vunpack.c.h.b16 %v3765
      %v3853 = vunpack.c.l.b16 %v3766
      %v3854 = vunpack.c.h.b16 %v3766
      %v3855 = vpack.c.b16 %v3849, %v3847
      %v3856 = vpack.c.b16 %v3850, %v3848
      %v3857 = vpack.c.b16 %v3853, %v3851
      %v3858 = vpack.c.b16 %v3854, %v3852
      %v3865 = vunpack.c.l.b16 %v2951
      %v3866 = vunpack.c.h.b16 %v2951
      %v3867 = vunpack.c.l.b16 %v2952
      %v3868 = vunpack.c.h.b16 %v2952
      %v3869 = vpack.c.b16 %v3867, %v3865
      %v3870 = vpack.c.b16 %v3868, %v3866
      %3873 = vmatpush.bf16.xpose.msra.mxu0 0
      %3874 = vmatpush.bf16.xpose.msra.mxu0 0
      %3875 = vmatpush.bf16.xpose.msra.mxu0 0
      %3876 = vmatpush.bf16.xpose.msra.mxu0 0
      %3877 = vmatpush.bf16.xpose.msra.mxu0 0
      %3878 = vmatpush.bf16.xpose.msra.mxu0 0
      %3879 = vmatpush.bf16.xpose.msra.mxu0 0
      %3880 = vmatpush.bf16.xpose.msra.mxu0 %v3869
      %3881 = vmatmul.bf16.gmra.mxu0 %v3855
      %v3882 = vpop.f32.mrf.mxu0
      %v3883 = vadd.f32 0.0, %v3882
      %v3884 = vpop.f32.mrf.mxu0
      %v3885 = vadd.f32 0.0, %v3884
      %3886 = vmatmul.bf16.gmra.mxu0 %v3857
      %v3887 = vpop.f32.mrf.mxu0
      %v3888 = vadd.f32 0.0, %v3887
      %v3889 = vpop.f32.mrf.mxu0
      %v3890 = vadd.f32 0.0, %v3889
      %3891 = vdwg.mxu0
      %3892 = vmatpush.bf16.xpose.msra.mxu0 0
      %3893 = vmatpush.bf16.xpose.msra.mxu0 0
      %3894 = vmatpush.bf16.xpose.msra.mxu0 0
      %3895 = vmatpush.bf16.xpose.msra.mxu0 0
      %3896 = vmatpush.bf16.xpose.msra.mxu0 0
      %3897 = vmatpush.bf16.xpose.msra.mxu0 0
      %3898 = vmatpush.bf16.xpose.msra.mxu0 0
      %3899 = vmatpush.bf16.xpose.msra.mxu0 %v3870
      %3900 = vmatmul.bf16.gmra.mxu0 %v3856
      %v3901 = vpop.f32.mrf.mxu0
      %v3902 = vadd.f32 %v3883, %v3901
      %v3903 = vpop.f32.mrf.mxu0
      %v3904 = vadd.f32 %v3885, %v3903
      %3905 = vmatmul.bf16.gmra.mxu0 %v3858
      %v3906 = vpop.f32.mrf.mxu0
      %v3907 = vadd.f32 %v3888, %v3906
      %v3908 = vpop.f32.mrf.mxu0
      %v3909 = vadd.f32 %v3890, %v3908
      %3910 = vdwg.mxu0
      %v3915 = vunpack.c.l.b16 %v3767
      %v3916 = vunpack.c.h.b16 %v3767
      %v3917 = vunpack.c.l.b16 %v3768
      %v3918 = vunpack.c.h.b16 %v3768
      %v3919 = vunpack.c.l.b16 %v3769
      %v3920 = vunpack.c.h.b16 %v3769
      %v3921 = vunpack.c.l.b16 %v3770
      %v3922 = vunpack.c.h.b16 %v3770
      %v3923 = vpack.c.b16 %v3917, %v3915
      %v3924 = vpack.c.b16 %v3918, %v3916
      %v3925 = vpack.c.b16 %v3921, %v3919
      %v3926 = vpack.c.b16 %v3922, %v3920
      %v3933 = vunpack.c.l.b16 %v2953
      %v3934 = vunpack.c.h.b16 %v2953
      %v3935 = vunpack.c.l.b16 %v2954
      %v3936 = vunpack.c.h.b16 %v2954
      %v3937 = vpack.c.b16 %v3935, %v3933
      %v3938 = vpack.c.b16 %v3936, %v3934
      %3941 = vmatpush.bf16.xpose.msra.mxu0 0
      %3942 = vmatpush.bf16.xpose.msra.mxu0 0
      %3943 = vmatpush.bf16.xpose.msra.mxu0 0
      %3944 = vmatpush.bf16.xpose.msra.mxu0 0
      %3945 = vmatpush.bf16.xpose.msra.mxu0 0
      %3946 = vmatpush.bf16.xpose.msra.mxu0 0
      %3947 = vmatpush.bf16.xpose.msra.mxu0 0
      %3948 = vmatpush.bf16.xpose.msra.mxu0 %v3937
      %3949 = vmatmul.bf16.gmra.mxu0 %v3923
      %v3950 = vpop.f32.mrf.mxu0
      %v3951 = vadd.f32 0.0, %v3950
      %v3952 = vpop.f32.mrf.mxu0
      %v3953 = vadd.f32 0.0, %v3952
      %3954 = vmatmul.bf16.gmra.mxu0 %v3925
      %v3955 = vpop.f32.mrf.mxu0
      %v3956 = vadd.f32 0.0, %v3955
      %v3957 = vpop.f32.mrf.mxu0
      %v3958 = vadd.f32 0.0, %v3957
      %3959 = vdwg.mxu0
      %3960 = vmatpush.bf16.xpose.msra.mxu0 0
      %3961 = vmatpush.bf16.xpose.msra.mxu0 0
      %3962 = vmatpush.bf16.xpose.msra.mxu0 0
      %3963 = vmatpush.bf16.xpose.msra.mxu0 0
      %3964 = vmatpush.bf16.xpose.msra.mxu0 0
      %3965 = vmatpush.bf16.xpose.msra.mxu0 0
      %3966 = vmatpush.bf16.xpose.msra.mxu0 0
      %3967 = vmatpush.bf16.xpose.msra.mxu0 %v3938
      %3968 = vmatmul.bf16.gmra.mxu0 %v3924
      %v3969 = vpop.f32.mrf.mxu0
      %v3970 = vadd.f32 %v3951, %v3969
      %v3971 = vpop.f32.mrf.mxu0
      %v3972 = vadd.f32 %v3953, %v3971
      %3973 = vmatmul.bf16.gmra.mxu0 %v3926
      %v3974 = vpop.f32.mrf.mxu0
      %v3975 = vadd.f32 %v3956, %v3974
      %v3976 = vpop.f32.mrf.mxu0
      %v3977 = vadd.f32 %v3958, %v3976
      %3978 = vdwg.mxu0
      %v3983 = vunpack.c.l.b16 %v3771
      %v3984 = vunpack.c.h.b16 %v3771
      %v3985 = vunpack.c.l.b16 %v3772
      %v3986 = vunpack.c.h.b16 %v3772
      %v3987 = vunpack.c.l.b16 %v3773
      %v3988 = vunpack.c.h.b16 %v3773
      %v3989 = vunpack.c.l.b16 %v3774
      %v3990 = vunpack.c.h.b16 %v3774
      %v3991 = vpack.c.b16 %v3985, %v3983
      %v3992 = vpack.c.b16 %v3986, %v3984
      %v3993 = vpack.c.b16 %v3989, %v3987
      %v3994 = vpack.c.b16 %v3990, %v3988
      %v4001 = vunpack.c.l.b16 %v2955
      %v4002 = vunpack.c.h.b16 %v2955
      %v4003 = vunpack.c.l.b16 %v2956
      %v4004 = vunpack.c.h.b16 %v2956
      %v4005 = vpack.c.b16 %v4003, %v4001
      %v4006 = vpack.c.b16 %v4004, %v4002
      %4009 = vmatpush.bf16.xpose.msra.mxu0 0
      %4010 = vmatpush.bf16.xpose.msra.mxu0 0
      %4011 = vmatpush.bf16.xpose.msra.mxu0 0
      %4012 = vmatpush.bf16.xpose.msra.mxu0 0
      %4013 = vmatpush.bf16.xpose.msra.mxu0 0
      %4014 = vmatpush.bf16.xpose.msra.mxu0 0
      %4015 = vmatpush.bf16.xpose.msra.mxu0 0
      %4016 = vmatpush.bf16.xpose.msra.mxu0 %v4005
      %4017 = vmatmul.bf16.gmra.mxu0 %v3991
      %v4018 = vpop.f32.mrf.mxu0
      %v4019 = vadd.f32 0.0, %v4018
      %v4020 = vpop.f32.mrf.mxu0
      %v4021 = vadd.f32 0.0, %v4020
      %4022 = vmatmul.bf16.gmra.mxu0 %v3993
      %v4023 = vpop.f32.mrf.mxu0
      %v4024 = vadd.f32 0.0, %v4023
      %v4025 = vpop.f32.mrf.mxu0
      %v4026 = vadd.f32 0.0, %v4025
      %4027 = vdwg.mxu0
      %4028 = vmatpush.bf16.xpose.msra.mxu0 0
      %4029 = vmatpush.bf16.xpose.msra.mxu0 0
      %4030 = vmatpush.bf16.xpose.msra.mxu0 0
      %4031 = vmatpush.bf16.xpose.msra.mxu0 0
      %4032 = vmatpush.bf16.xpose.msra.mxu0 0
      %4033 = vmatpush.bf16.xpose.msra.mxu0 0
      %4034 = vmatpush.bf16.xpose.msra.mxu0 0
      %4035 = vmatpush.bf16.xpose.msra.mxu0 %v4006
      %4036 = vmatmul.bf16.gmra.mxu0 %v3992
      %v4037 = vpop.f32.mrf.mxu0
      %v4038 = vadd.f32 %v4019, %v4037
      %v4039 = vpop.f32.mrf.mxu0
      %v4040 = vadd.f32 %v4021, %v4039
      %4041 = vmatmul.bf16.gmra.mxu0 %v3994
      %v4042 = vpop.f32.mrf.mxu0
      %v4043 = vadd.f32 %v4024, %v4042
      %v4044 = vpop.f32.mrf.mxu0
      %v4045 = vadd.f32 %v4026, %v4044
      %4046 = vdwg.mxu0
      %v4047 = vadd.f32 %v3743, %v3834
      %v4048 = vadd.f32 %v3744, %v3836
      %v4049 = vadd.f32 %v3745, %v3839
      %v4050 = vadd.f32 %v3746, %v3841
      %v4051 = vadd.f32 %v3747, %v3902
      %v4052 = vadd.f32 %v3748, %v3904
      %v4053 = vadd.f32 %v3749, %v3907
      %v4054 = vadd.f32 %v3750, %v3909
      %v4055 = vadd.f32 %v3751, %v3970
      %v4056 = vadd.f32 %v3752, %v3972
      %v4057 = vadd.f32 %v3753, %v3975
      %v4058 = vadd.f32 %v3754, %v3977
      %v4059 = vadd.f32 %v3755, %v4038
      %v4060 = vadd.f32 %v3756, %v4040
      %v4061 = vadd.f32 %v3757, %v4043
      %v4062 = vadd.f32 %v3758, %v4045
      %4063 = vst.msk [vmem:[#allocation6] sm:$0xff] %vm2993, %v4047
      %4064 = vst.msk [vmem:[#allocation6 + $0x8] sm:$0xff] %vm2993, %v4048
      %4065 = vst.msk [vmem:[#allocation6 + $0x10] sm:$0xff] %vm2993, %v4049
      %4066 = vst.msk [vmem:[#allocation6 + $0x18] sm:$0xff] %vm2993, %v4050
      %4067 = vst.msk [vmem:[#allocation6 + $0x20] sm:$0xff] %vm2993, %v4051
      %4068 = vst.msk [vmem:[#allocation6 + $0x28] sm:$0xff] %vm2993, %v4052
      %4069 = vst.msk [vmem:[#allocation6 + $0x30] sm:$0xff] %vm2993, %v4053
      %4070 = vst.msk [vmem:[#allocation6 + $0x38] sm:$0xff] %vm2993, %v4054
      %4071 = vst.msk [vmem:[#allocation6 + $0x40] sm:$0xff] %vm2993, %v4055
      %4072 = vst.msk [vmem:[#allocation6 + $0x48] sm:$0xff] %vm2993, %v4056
      %4073 = vst.msk [vmem:[#allocation6 + $0x50] sm:$0xff] %vm2993, %v4057
      %4074 = vst.msk [vmem:[#allocation6 + $0x58] sm:$0xff] %vm2993, %v4058
      %4075 = vst.msk [vmem:[#allocation6 + $0x60] sm:$0xff] %vm2993, %v4059
      %4076 = vst.msk [vmem:[#allocation6 + $0x68] sm:$0xff] %vm2993, %v4060
      %4077 = vst.msk [vmem:[#allocation6 + $0x70] sm:$0xff] %vm2993, %v4061
      %4078 = vst.msk [vmem:[#allocation6 + $0x78] sm:$0xff] %vm2993, %v4062
      %4079 = vst.msk [vmem:[#allocation4] sm:$0xff] %vm3630, %v3294
      %4080 = vst.msk [vmem:[#allocation4 + $0x8] sm:$0xff] %vm3630, %v3295
      %4081 = vst.msk [vmem:[#allocation4 + $0x10] sm:$0xff] %vm3630, %v3296
      %4082 = vst.msk [vmem:[#allocation4 + $0x18] sm:$0xff] %vm3630, %v3297
      %4083 = vst.msk [vmem:[#allocation4 + $0x20] sm:$0xff] %vm3630, %v3298
      %4084 = vst.msk [vmem:[#allocation4 + $0x28] sm:$0xff] %vm3630, %v3299
      %4085 = vst.msk [vmem:[#allocation4 + $0x30] sm:$0xff] %vm3630, %v3300
      %4086 = vst.msk [vmem:[#allocation4 + $0x38] sm:$0xff] %vm3630, %v3301
      %4087 = vst.msk [vmem:[#allocation4 + $0x40] sm:$0xff] %vm3630, %v3302
      %4088 = vst.msk [vmem:[#allocation4 + $0x48] sm:$0xff] %vm3630, %v3303
      %4089 = vst.msk [vmem:[#allocation4 + $0x50] sm:$0xff] %vm3630, %v3304
      %4090 = vst.msk [vmem:[#allocation4 + $0x58] sm:$0xff] %vm3630, %v3305
      %4091 = vst.msk [vmem:[#allocation4 + $0x60] sm:$0xff] %vm3630, %v3306
      %4092 = vst.msk [vmem:[#allocation4 + $0x68] sm:$0xff] %vm3630, %v3307
      %4093 = vst.msk [vmem:[#allocation4 + $0x70] sm:$0xff] %vm3630, %v3308
      %4094 = vst.msk [vmem:[#allocation4 + $0x78] sm:$0xff] %vm3630, %v3309
      // Predicated region
      $region97: #{tpu_custom_call.1} parent=91 // pred_check
        %p4095 = pneg %p681
      $region98: #{tpu_custom_call.1} parent=91 // pred_check_branch
        %4097 = sbr.rel (%p4095) target = $region100
      $region99: #{tpu_custom_call.1} parent=91 // pred_region
        %v4098 = vld [vmem:[#allocation5] sm:$0xff]
        %v4099 = vld [vmem:[#allocation5 + $0x8] sm:$0xff]
        %v4100 = vld [vmem:[#allocation5 + $0x10] sm:$0xff]
        %v4101 = vld [vmem:[#allocation5 + $0x18] sm:$0xff]
        %v4102 = vld [vmem:[#allocation5 + $0x20] sm:$0xff]
        %v4103 = vld [vmem:[#allocation5 + $0x28] sm:$0xff]
        %v4104 = vld [vmem:[#allocation5 + $0x30] sm:$0xff]
        %v4105 = vld [vmem:[#allocation5 + $0x38] sm:$0xff]
        %v4106 = vld [vmem:[#allocation5 + $0x40] sm:$0xff]
        %v4107 = vld [vmem:[#allocation5 + $0x48] sm:$0xff]
        %v4108 = vld [vmem:[#allocation5 + $0x50] sm:$0xff]
        %v4109 = vld [vmem:[#allocation5 + $0x58] sm:$0xff]
        %v4110 = vld [vmem:[#allocation5 + $0x60] sm:$0xff]
        %v4111 = vld [vmem:[#allocation5 + $0x68] sm:$0xff]
        %v4112 = vld [vmem:[#allocation5 + $0x70] sm:$0xff]
        %v4113 = vld [vmem:[#allocation5 + $0x78] sm:$0xff]
        %v4114 = vrcp.pop %v4098
        %v4115 = vrcp.pop %v4099
        %v4116 = vrcp.pop %v4100
        %v4117 = vrcp.pop %v4101
        %v4118 = vrcp.pop %v4102
        %v4119 = vrcp.pop %v4103
        %v4120 = vrcp.pop %v4104
        %v4121 = vrcp.pop %v4105
        %v4122 = vrcp.pop %v4106
        %v4123 = vrcp.pop %v4107
        %v4124 = vrcp.pop %v4108
        %v4125 = vrcp.pop %v4109
        %v4126 = vrcp.pop %v4110
        %v4127 = vrcp.pop %v4111
        %v4128 = vrcp.pop %v4112
        %v4129 = vrcp.pop %v4113
        %v4130 = vld [vmem:[#allocation6] sm:$0xff]
        %v4131 = vld [vmem:[#allocation6 + $0x8] sm:$0xff]
        %v4132 = vld [vmem:[#allocation6 + $0x10] sm:$0xff]
        %v4133 = vld [vmem:[#allocation6 + $0x18] sm:$0xff]
        %v4134 = vld [vmem:[#allocation6 + $0x20] sm:$0xff]
        %v4135 = vld [vmem:[#allocation6 + $0x28] sm:$0xff]
        %v4136 = vld [vmem:[#allocation6 + $0x30] sm:$0xff]
        %v4137 = vld [vmem:[#allocation6 + $0x38] sm:$0xff]
        %v4138 = vld [vmem:[#allocation6 + $0x40] sm:$0xff]
        %v4139 = vld [vmem:[#allocation6 + $0x48] sm:$0xff]
        %v4140 = vld [vmem:[#allocation6 + $0x50] sm:$0xff]
        %v4141 = vld [vmem:[#allocation6 + $0x58] sm:$0xff]
        %v4142 = vld [vmem:[#allocation6 + $0x60] sm:$0xff]
        %v4143 = vld [vmem:[#allocation6 + $0x68] sm:$0xff]
        %v4144 = vld [vmem:[#allocation6 + $0x70] sm:$0xff]
        %v4145 = vld [vmem:[#allocation6 + $0x78] sm:$0xff]
        %4147 = vset.pattern.permute.xlu0 0
        %4148 = vperm.xlu0 %4147, %v4114
        %v4149 = vpop.permute.xlu0 %4148
        %4152 = vset.pattern.permute.xlu0 0
        %4153 = vperm.xlu0 %4152, %v4115
        %v4154 = vpop.permute.xlu0 %4153
        %4157 = vset.pattern.permute.xlu0 0
        %4158 = vperm.xlu0 %4157, %v4116
        %v4159 = vpop.permute.xlu0 %4158
        %4162 = vset.pattern.permute.xlu0 0
        %4163 = vperm.xlu0 %4162, %v4117
        %v4164 = vpop.permute.xlu0 %4163
        %4167 = vset.pattern.permute.xlu0 0
        %4168 = vperm.xlu0 %4167, %v4118
        %v4169 = vpop.permute.xlu0 %4168
        %4172 = vset.pattern.permute.xlu0 0
        %4173 = vperm.xlu0 %4172, %v4119
        %v4174 = vpop.permute.xlu0 %4173
        %4177 = vset.pattern.permute.xlu0 0
        %4178 = vperm.xlu0 %4177, %v4120
        %v4179 = vpop.permute.xlu0 %4178
        %4182 = vset.pattern.permute.xlu0 0
        %4183 = vperm.xlu0 %4182, %v4121
        %v4184 = vpop.permute.xlu0 %4183
        %4187 = vset.pattern.permute.xlu0 0
        %4188 = vperm.xlu0 %4187, %v4122
        %v4189 = vpop.permute.xlu0 %4188
        %4192 = vset.pattern.permute.xlu0 0
        %4193 = vperm.xlu0 %4192, %v4123
        %v4194 = vpop.permute.xlu0 %4193
        %4197 = vset.pattern.permute.xlu0 0
        %4198 = vperm.xlu0 %4197, %v4124
        %v4199 = vpop.permute.xlu0 %4198
        %4202 = vset.pattern.permute.xlu0 0
        %4203 = vperm.xlu0 %4202, %v4125
        %v4204 = vpop.permute.xlu0 %4203
        %4207 = vset.pattern.permute.xlu0 0
        %4208 = vperm.xlu0 %4207, %v4126
        %v4209 = vpop.permute.xlu0 %4208
        %4212 = vset.pattern.permute.xlu0 0
        %4213 = vperm.xlu0 %4212, %v4127
        %v4214 = vpop.permute.xlu0 %4213
        %4217 = vset.pattern.permute.xlu0 0
        %4218 = vperm.xlu0 %4217, %v4128
        %v4219 = vpop.permute.xlu0 %4218
        %4222 = vset.pattern.permute.xlu0 0
        %4223 = vperm.xlu0 %4222, %v4129
        %v4224 = vpop.permute.xlu0 %4223
        %v4226 = vmul.f32 %v4130, %v4149
        %v4227 = vmul.f32 %v4131, %v4154
        %v4228 = vmul.f32 %v4132, %v4159
        %v4229 = vmul.f32 %v4133, %v4164
        %v4230 = vmul.f32 %v4134, %v4169
        %v4231 = vmul.f32 %v4135, %v4174
        %v4232 = vmul.f32 %v4136, %v4179
        %v4233 = vmul.f32 %v4137, %v4184
        %v4234 = vmul.f32 %v4138, %v4189
        %v4235 = vmul.f32 %v4139, %v4194
        %v4236 = vmul.f32 %v4140, %v4199
        %v4237 = vmul.f32 %v4141, %v4204
        %v4238 = vmul.f32 %v4142, %v4209
        %v4239 = vmul.f32 %v4143, %v4214
        %v4240 = vmul.f32 %v4144, %v4219
        %v4241 = vmul.f32 %v4145, %v4224
        %4242 = vxpose.xlu0.b32.start [1/16] %v4226, 128
        %4243 = vxpose.xlu0.b32.cont [2/16] %v4227, 128
        %4244 = vxpose.xlu0.b32.cont [3/16] %v4228, 128
        %4245 = vxpose.xlu0.b32.cont [4/16] %v4229, 128
        %4246 = vxpose.xlu0.b32.cont [5/16] 0.0, 128
        %4247 = vxpose.xlu0.b32.cont [6/16] 0.0, 128
        %4248 = vxpose.xlu0.b32.cont [7/16] 0.0, 128
        %4249 = vxpose.xlu0.b32.cont [8/16] 0.0, 128
        %4250 = vxpose.xlu0.b32.cont [9/16] 0.0, 128
        %4251 = vxpose.xlu0.b32.cont [10/16] 0.0, 128
        %4252 = vxpose.xlu0.b32.cont [11/16] 0.0, 128
        %4253 = vxpose.xlu0.b32.cont [12/16] 0.0, 128
        %4254 = vxpose.xlu0.b32.cont [13/16] 0.0, 128
        %4255 = vxpose.xlu0.b32.cont [14/16] 0.0, 128
        %4256 = vxpose.xlu0.b32.cont [15/16] 0.0, 128
        %4257 = vxpose.xlu0.b32.end [16/16] 0.0, 128
        %v4258 = vpop.trf.xlu0
        %v4259 = vpop.trf.xlu0
        %v4260 = vpop.trf.xlu0
        %v4261 = vpop.trf.xlu0
        %v4262 = vpop.trf.xlu0
        %v4263 = vpop.trf.xlu0
        %v4264 = vpop.trf.xlu0
        %v4265 = vpop.trf.xlu0
        %v4266 = vpop.trf.xlu0
        %v4267 = vpop.trf.xlu0
        %v4268 = vpop.trf.xlu0
        %v4269 = vpop.trf.xlu0
        %v4270 = vpop.trf.xlu0
        %v4271 = vpop.trf.xlu0
        %v4272 = vpop.trf.xlu0
        %v4273 = vpop.trf.xlu0
        %4274 = vxpose.xlu0.b32.start [1/16] %v4230, 128
        %4275 = vxpose.xlu0.b32.cont [2/16] %v4231, 128
        %4276 = vxpose.xlu0.b32.cont [3/16] %v4232, 128
        %4277 = vxpose.xlu0.b32.cont [4/16] %v4233, 128
        %4278 = vxpose.xlu0.b32.cont [5/16] 0.0, 128
        %4279 = vxpose.xlu0.b32.cont [6/16] 0.0, 128
        %4280 = vxpose.xlu0.b32.cont [7/16] 0.0, 128
        %4281 = vxpose.xlu0.b32.cont [8/16] 0.0, 128
        %4282 = vxpose.xlu0.b32.cont [9/16] 0.0, 128
        %4283 = vxpose.xlu0.b32.cont [10/16] 0.0, 128
        %4284 = vxpose.xlu0.b32.cont [11/16] 0.0, 128
        %4285 = vxpose.xlu0.b32.cont [12/16] 0.0, 128
        %4286 = vxpose.xlu0.b32.cont [13/16] 0.0, 128
        %4287 = vxpose.xlu0.b32.cont [14/16] 0.0, 128
        %4288 = vxpose.xlu0.b32.cont [15/16] 0.0, 128
        %4289 = vxpose.xlu0.b32.end [16/16] 0.0, 128
        %v4290 = vpop.trf.xlu0
        %v4291 = vpop.trf.xlu0
        %v4292 = vpop.trf.xlu0
        %v4293 = vpop.trf.xlu0
        %v4294 = vpop.trf.xlu0
        %v4295 = vpop.trf.xlu0
        %v4296 = vpop.trf.xlu0
        %v4297 = vpop.trf.xlu0
        %v4298 = vpop.trf.xlu0
        %v4299 = vpop.trf.xlu0
        %v4300 = vpop.trf.xlu0
        %v4301 = vpop.trf.xlu0
        %v4302 = vpop.trf.xlu0
        %v4303 = vpop.trf.xlu0
        %v4304 = vpop.trf.xlu0
        %v4305 = vpop.trf.xlu0
        %4306 = vxpose.xlu0.b32.start [1/16] %v4234, 128
        %4307 = vxpose.xlu0.b32.cont [2/16] %v4235, 128
        %4308 = vxpose.xlu0.b32.cont [3/16] %v4236, 128
        %4309 = vxpose.xlu0.b32.cont [4/16] %v4237, 128
        %4310 = vxpose.xlu0.b32.cont [5/16] 0.0, 128
        %4311 = vxpose.xlu0.b32.cont [6/16] 0.0, 128
        %4312 = vxpose.xlu0.b32.cont [7/16] 0.0, 128
        %4313 = vxpose.xlu0.b32.cont [8/16] 0.0, 128
        %4314 = vxpose.xlu0.b32.cont [9/16] 0.0, 128
        %4315 = vxpose.xlu0.b32.cont [10/16] 0.0, 128
        %4316 = vxpose.xlu0.b32.cont [11/16] 0.0, 128
        %4317 = vxpose.xlu0.b32.cont [12/16] 0.0, 128
        %4318 = vxpose.xlu0.b32.cont [13/16] 0.0, 128
        %4319 = vxpose.xlu0.b32.cont [14/16] 0.0, 128
        %4320 = vxpose.xlu0.b32.cont [15/16] 0.0, 128
        %4321 = vxpose.xlu0.b32.end [16/16] 0.0, 128
        %v4322 = vpop.trf.xlu0
        %v4323 = vpop.trf.xlu0
        %v4324 = vpop.trf.xlu0
        %v4325 = vpop.trf.xlu0
        %v4326 = vpop.trf.xlu0
        %v4327 = vpop.trf.xlu0
        %v4328 = vpop.trf.xlu0
        %v4329 = vpop.trf.xlu0
        %v4330 = vpop.trf.xlu0
        %v4331 = vpop.trf.xlu0
        %v4332 = vpop.trf.xlu0
        %v4333 = vpop.trf.xlu0
        %v4334 = vpop.trf.xlu0
        %v4335 = vpop.trf.xlu0
        %v4336 = vpop.trf.xlu0
        %v4337 = vpop.trf.xlu0
        %4338 = vxpose.xlu0.b32.start [1/16] %v4238, 128
        %4339 = vxpose.xlu0.b32.cont [2/16] %v4239, 128
        %4340 = vxpose.xlu0.b32.cont [3/16] %v4240, 128
        %4341 = vxpose.xlu0.b32.cont [4/16] %v4241, 128
        %4342 = vxpose.xlu0.b32.cont [5/16] 0.0, 128
        %4343 = vxpose.xlu0.b32.cont [6/16] 0.0, 128
        %4344 = vxpose.xlu0.b32.cont [7/16] 0.0, 128
        %4345 = vxpose.xlu0.b32.cont [8/16] 0.0, 128
        %4346 = vxpose.xlu0.b32.cont [9/16] 0.0, 128
        %4347 = vxpose.xlu0.b32.cont [10/16] 0.0, 128
        %4348 = vxpose.xlu0.b32.cont [11/16] 0.0, 128
        %4349 = vxpose.xlu0.b32.cont [12/16] 0.0, 128
        %4350 = vxpose.xlu0.b32.cont [13/16] 0.0, 128
        %4351 = vxpose.xlu0.b32.cont [14/16] 0.0, 128
        %4352 = vxpose.xlu0.b32.cont [15/16] 0.0, 128
        %4353 = vxpose.xlu0.b32.end [16/16] 0.0, 128
        %v4354 = vpop.trf.xlu0
        %v4355 = vpop.trf.xlu0
        %v4356 = vpop.trf.xlu0
        %v4357 = vpop.trf.xlu0
        %v4358 = vpop.trf.xlu0
        %v4359 = vpop.trf.xlu0
        %v4360 = vpop.trf.xlu0
        %v4361 = vpop.trf.xlu0
        %v4362 = vpop.trf.xlu0
        %v4363 = vpop.trf.xlu0
        %v4364 = vpop.trf.xlu0
        %v4365 = vpop.trf.xlu0
        %v4366 = vpop.trf.xlu0
        %v4367 = vpop.trf.xlu0
        %v4368 = vpop.trf.xlu0
        %v4369 = vpop.trf.xlu0
        %v4370 = vld [vmem:[%s10] sm:$0xf]
        %v4371 = vld [vmem:[%s10 + $0x4] sm:$0xf]
        %v4372 = vld [vmem:[%s10 + $0x8] sm:$0xf]
        %v4373 = vld [vmem:[%s10 + $0xc] sm:$0xf]
        %v4374 = vld [vmem:[%s10 + $0x10] sm:$0xf]
        %v4375 = vld [vmem:[%s10 + $0x14] sm:$0xf]
        %v4376 = vld [vmem:[%s10 + $0x18] sm:$0xf]
        %v4377 = vld [vmem:[%s10 + $0x1c] sm:$0xf]
        %v4378 = vpack.c.bf16 %v4259, %v4258
        %v4379 = vpack.c.bf16 %v4291, %v4290
        %v4380 = vpack.c.bf16 %v4323, %v4322
        %v4381 = vpack.c.bf16 %v4355, %v4354
        %v4382 = vld [vmem:[%s11] sm:$0xff]
        %v4383 = vld [vmem:[%s11 + $0x8] sm:$0xff]
        %v4384 = vld [vmem:[%s11 + $0x10] sm:$0xff]
        %v4385 = vld [vmem:[%s11 + $0x18] sm:$0xff]
        %v4386 = vld [vmem:[%s11 + $0x20] sm:$0xff]
        %v4387 = vld [vmem:[%s11 + $0x28] sm:$0xff]
        %v4388 = vld [vmem:[%s11 + $0x30] sm:$0xff]
        %v4389 = vld [vmem:[%s11 + $0x38] sm:$0xff]
        %4391 = vset.pattern.permute.xlu0 0
        %4392 = vperm.xlu0 %4391, %v4382
        %v4393 = vpop.permute.xlu0 %4392
        %4396 = vset.pattern.permute.xlu0 0
        %4397 = vperm.xlu0 %4396, %v4383
        %v4398 = vpop.permute.xlu0 %4397
        %4401 = vset.pattern.permute.xlu0 0
        %4402 = vperm.xlu0 %4401, %v4384
        %v4403 = vpop.permute.xlu0 %4402
        %4406 = vset.pattern.permute.xlu0 0
        %4407 = vperm.xlu0 %4406, %v4385
        %v4408 = vpop.permute.xlu0 %4407
        %4411 = vset.pattern.permute.xlu0 0
        %4412 = vperm.xlu0 %4411, %v4386
        %v4413 = vpop.permute.xlu0 %4412
        %4416 = vset.pattern.permute.xlu0 0
        %4417 = vperm.xlu0 %4416, %v4387
        %v4418 = vpop.permute.xlu0 %4417
        %4421 = vset.pattern.permute.xlu0 0
        %4422 = vperm.xlu0 %4421, %v4388
        %v4423 = vpop.permute.xlu0 %4422
        %4426 = vset.pattern.permute.xlu0 0
        %4427 = vperm.xlu0 %4426, %v4389
        %v4428 = vpop.permute.xlu0 %4427
        %v4438 = vunpack.c.l.b16 %v4370
        %v4439 = vunpack.c.l.b16 %v4371
        %v4440 = vunpack.c.l.b16 %v4372
        %v4441 = vunpack.c.l.b16 %v4373
        %v4442 = vunpack.c.l.b16 %v4374
        %v4443 = vunpack.c.l.b16 %v4375
        %v4444 = vunpack.c.l.b16 %v4376
        %v4445 = vunpack.c.l.b16 %v4377
        %v4446 = vpack.c.b16 %v4439, %v4438
        %v4447 = vpack.c.b16 %v4441, %v4440
        %v4448 = vpack.c.b16 %v4443, %v4442
        %v4449 = vpack.c.b16 %v4445, %v4444
        %v4451 = vsel %vm2684, %v4446, 0
        %v4454 = vsel %vm2684, %v4447, 0
        %v4457 = vsel %vm2684, %v4448, 0
        %v4460 = vsel %vm2684, %v4449, 0
        %4462 = vmatpush.bf16.msra.mxu0 0
        %4463 = vmatpush.bf16.msra.mxu0 0
        %4464 = vmatpush.bf16.msra.mxu0 0
        %4465 = vmatpush.bf16.msra.mxu0 0
        %4466 = vmatpush.bf16.msra.mxu0 %v4381
        %4467 = vmatpush.bf16.msra.mxu0 %v4380
        %4468 = vmatpush.bf16.msra.mxu0 %v4379
        %4469 = vmatpush.bf16.msra.mxu0 %v4378
        %4470 = vmatmul.bf16.gmra.mxu0 %v4451
        %v4471 = vpop.f32.mrf.mxu0
        %v4472 = vadd.f32 %v4393, %v4471
        %v4473 = vpop.f32.mrf.mxu0
        %v4474 = vadd.f32 %v4398, %v4473
        %4475 = vmatmul.bf16.gmra.mxu0 %v4454
        %v4476 = vpop.f32.mrf.mxu0
        %v4477 = vadd.f32 %v4403, %v4476
        %v4478 = vpop.f32.mrf.mxu0
        %v4479 = vadd.f32 %v4408, %v4478
        %4480 = vmatmul.bf16.gmra.mxu0 %v4457
        %v4481 = vpop.f32.mrf.mxu0
        %v4482 = vadd.f32 %v4413, %v4481
        %v4483 = vpop.f32.mrf.mxu0
        %v4484 = vadd.f32 %v4418, %v4483
        %4485 = vmatmul.bf16.gmra.mxu0 %v4460
        %v4486 = vpop.f32.mrf.mxu0
        %v4487 = vadd.f32 %v4423, %v4486
        %v4488 = vpop.f32.mrf.mxu0
        %v4489 = vadd.f32 %v4428, %v4488
        %4490 = vdwg.mxu0
        %v4491 = vld [vmem:[#allocation2] sm:$0xff]
        %v4492 = vld [vmem:[#allocation2 + $0x8] sm:$0xff]
        %v4493 = vld [vmem:[#allocation2 + $0x10] sm:$0xff]
        %v4494 = vld [vmem:[#allocation2 + $0x18] sm:$0xff]
        %v4495 = vld [vmem:[#allocation2 + $0x20] sm:$0xff]
        %v4496 = vld [vmem:[#allocation2 + $0x28] sm:$0xff]
        %v4497 = vld [vmem:[#allocation2 + $0x30] sm:$0xff]
        %v4498 = vld [vmem:[#allocation2 + $0x38] sm:$0xff]
        %v4499 = vadd.f32 %v4491, %v4472
        %v4500 = vadd.f32 %v4492, %v4474
        %v4501 = vadd.f32 %v4493, %v4477
        %v4502 = vadd.f32 %v4494, %v4479
        %v4503 = vadd.f32 %v4495, %v4482
        %v4504 = vadd.f32 %v4496, %v4484
        %v4505 = vadd.f32 %v4497, %v4487
        %v4506 = vadd.f32 %v4498, %v4489
        %v4507 = vld [vmem:[%s16] sm:$0xff]
        %v4508 = vld [vmem:[%s16 + $0x8] sm:$0xff]
        %v4509 = vld [vmem:[%s16 + $0x10] sm:$0xff]
        %v4510 = vld [vmem:[%s16 + $0x18] sm:$0xff]
        %v4511 = vld [vmem:[%s16 + $0x20] sm:$0xff]
        %v4512 = vld [vmem:[%s16 + $0x28] sm:$0xff]
        %v4513 = vld [vmem:[%s16 + $0x30] sm:$0xff]
        %v4514 = vld [vmem:[%s16 + $0x38] sm:$0xff]
        %v4515 = vld [vmem:[%s17] sm:$0xff]
        %v4516 = vld [vmem:[%s17 + $0x8] sm:$0xff]
        %v4517 = vld [vmem:[%s17 + $0x10] sm:$0xff]
        %v4518 = vld [vmem:[%s17 + $0x18] sm:$0xff]
        %v4519 = vld [vmem:[%s17 + $0x20] sm:$0xff]
        %v4520 = vld [vmem:[%s17 + $0x28] sm:$0xff]
        %v4521 = vld [vmem:[%s17 + $0x30] sm:$0xff]
        %v4522 = vld [vmem:[%s17 + $0x38] sm:$0xff]
        %vm4523 = vcmask 261120
        %v4524 = vsel %vm4523, %v4499, 0.0
        %v4525 = vsel %vm4523, %v4500, 0.0
        %v4526 = vadd.f32 %v4524, %v4525
        %v4527 = vsel %vm4523, %v4501, 0.0
        %v4528 = vadd.f32 %v4526, %v4527
        %v4529 = vsel %vm4523, %v4502, 0.0
        %v4530 = vadd.f32 %v4528, %v4529
        %v4531 = vsel %vm4523, %v4503, 0.0
        %v4532 = vadd.f32 %v4530, %v4531
        %v4533 = vsel %vm4523, %v4504, 0.0
        %v4534 = vadd.f32 %v4532, %v4533
        %v4535 = vsel %vm4523, %v4505, 0.0
        %v4536 = vadd.f32 %v4534, %v4535
        %v4537 = vsel %vm4523, %v4506, 0.0
        %v4538 = vadd.f32 %v4536, %v4537
        %v4539 = vrot.slane %v4538, 4
        %v4540 = vadd.f32 %v4538, %v4539
        %v4541 = vrot.slane %v4540, 2
        %v4542 = vadd.f32 %v4540, %v4541
        %v4543 = vrot.slane %v4542, 1
        %v4544 = vadd.f32 %v4542, %v4543
        %v4545 = vrcp.pop 64.0
        %v4546 = vmul.f32 64.0, %v4545
        %v4547 = vsub.f32 1.0, %v4546
        %v4548 = vmul.f32 %v4545, %v4547
        %v4549 = vadd.f32 %v4545, %v4548
        %vm4550 = vweird.f32 %v4545
        %v4551 = vsel %vm4550, %v4545, %v4549
        %v4552 = vmul.f32 %v4544, %v4551
        %v4553 = vsub.f32 %v4499, %v4552
        %v4554 = vsub.f32 %v4500, %v4552
        %v4555 = vsub.f32 %v4501, %v4552
        %v4556 = vsub.f32 %v4502, %v4552
        %v4557 = vsub.f32 %v4503, %v4552
        %v4558 = vsub.f32 %v4504, %v4552
        %v4559 = vsub.f32 %v4505, %v4552
        %v4560 = vsub.f32 %v4506, %v4552
        %v4561 = vmul.f32 %v4553, %v4553
        %v4562 = vmul.f32 %v4554, %v4554
        %v4563 = vmul.f32 %v4555, %v4555
        %v4564 = vmul.f32 %v4556, %v4556
        %v4565 = vmul.f32 %v4557, %v4557
        %v4566 = vmul.f32 %v4558, %v4558
        %v4567 = vmul.f32 %v4559, %v4559
        %v4568 = vmul.f32 %v4560, %v4560
        %v4569 = vsel %vm4523, %v4561, 0.0
        %v4570 = vsel %vm4523, %v4562, 0.0
        %v4571 = vadd.f32 %v4569, %v4570
        %v4572 = vsel %vm4523, %v4563, 0.0
        %v4573 = vadd.f32 %v4571, %v4572
        %v4574 = vsel %vm4523, %v4564, 0.0
        %v4575 = vadd.f32 %v4573, %v4574
        %v4576 = vsel %vm4523, %v4565, 0.0
        %v4577 = vadd.f32 %v4575, %v4576
        %v4578 = vsel %vm4523, %v4566, 0.0
        %v4579 = vadd.f32 %v4577, %v4578
        %v4580 = vsel %vm4523, %v4567, 0.0
        %v4581 = vadd.f32 %v4579, %v4580
        %v4582 = vsel %vm4523, %v4568, 0.0
        %v4583 = vadd.f32 %v4581, %v4582
        %v4584 = vrot.slane %v4583, 4
        %v4585 = vadd.f32 %v4583, %v4584
        %v4586 = vrot.slane %v4585, 2
        %v4587 = vadd.f32 %v4585, %v4586
        %v4588 = vrot.slane %v4587, 1
        %v4589 = vadd.f32 %v4587, %v4588
        %v4590 = vmul.f32 %v4589, %v4551
        %v4591 = vadd.f32 %v4590, 1e-05
        %v4592 = vrsqrt.pop %v4591
        %v4593 = vmul.f32 %v4592, %v4591
        %v4594 = vmul.f32 %v4593, %v4592
        %v4595 = vmul.f32 0.5, %v4594
        %v4596 = vsub.f32 1.5, %v4595
        %v4597 = vmul.f32 %v4592, %v4596
        %vm4598 = vweird.f32 %v4591
        %vm4599 = vweird.f32 %v4592
        %vm4600 = vmor %vm4598, %vm4599
        %v4601 = vsel %vm4600, %v4592, %v4597
        %v4602 = vmul.f32 %v4553, %v4601
        %v4603 = vmul.f32 %v4554, %v4601
        %v4604 = vmul.f32 %v4555, %v4601
        %v4605 = vmul.f32 %v4556, %v4601
        %v4606 = vmul.f32 %v4557, %v4601
        %v4607 = vmul.f32 %v4558, %v4601
        %v4608 = vmul.f32 %v4559, %v4601
        %v4609 = vmul.f32 %v4560, %v4601
        %4611 = vset.pattern.permute.xlu0 1
        %4612 = vperm.xlu0 %4611, %v4507
        %v4613 = vpop.permute.xlu0 %4612
        %4616 = vset.pattern.permute.xlu0 1
        %4617 = vperm.xlu0 %4616, %v4508
        %v4618 = vpop.permute.xlu0 %4617
        %4621 = vset.pattern.permute.xlu0 1
        %4622 = vperm.xlu0 %4621, %v4509
        %v4623 = vpop.permute.xlu0 %4622
        %4626 = vset.pattern.permute.xlu0 1
        %4627 = vperm.xlu0 %4626, %v4510
        %v4628 = vpop.permute.xlu0 %4627
        %4631 = vset.pattern.permute.xlu0 1
        %4632 = vperm.xlu0 %4631, %v4511
        %v4633 = vpop.permute.xlu0 %4632
        %4636 = vset.pattern.permute.xlu0 1
        %4637 = vperm.xlu0 %4636, %v4512
        %v4638 = vpop.permute.xlu0 %4637
        %4641 = vset.pattern.permute.xlu0 1
        %4642 = vperm.xlu0 %4641, %v4513
        %v4643 = vpop.permute.xlu0 %4642
        %4646 = vset.pattern.permute.xlu0 1
        %4647 = vperm.xlu0 %4646, %v4514
        %v4648 = vpop.permute.xlu0 %4647
        %v4650 = vmul.f32 %v4602, %v4613
        %v4651 = vmul.f32 %v4603, %v4618
        %v4652 = vmul.f32 %v4604, %v4623
        %v4653 = vmul.f32 %v4605, %v4628
        %v4654 = vmul.f32 %v4606, %v4633
        %v4655 = vmul.f32 %v4607, %v4638
        %v4656 = vmul.f32 %v4608, %v4643
        %v4657 = vmul.f32 %v4609, %v4648
        %4659 = vset.pattern.permute.xlu0 1
        %4660 = vperm.xlu0 %4659, %v4515
        %v4661 = vpop.permute.xlu0 %4660
        %4664 = vset.pattern.permute.xlu0 1
        %4665 = vperm.xlu0 %4664, %v4516
        %v4666 = vpop.permute.xlu0 %4665
        %4669 = vset.pattern.permute.xlu0 1
        %4670 = vperm.xlu0 %4669, %v4517
        %v4671 = vpop.permute.xlu0 %4670
        %4674 = vset.pattern.permute.xlu0 1
        %4675 = vperm.xlu0 %4674, %v4518
        %v4676 = vpop.permute.xlu0 %4675
        %4679 = vset.pattern.permute.xlu0 1
        %4680 = vperm.xlu0 %4679, %v4519
        %v4681 = vpop.permute.xlu0 %4680
        %4684 = vset.pattern.permute.xlu0 1
        %4685 = vperm.xlu0 %4684, %v4520
        %v4686 = vpop.permute.xlu0 %4685
        %4689 = vset.pattern.permute.xlu0 1
        %4690 = vperm.xlu0 %4689, %v4521
        %v4691 = vpop.permute.xlu0 %4690
        %4694 = vset.pattern.permute.xlu0 1
        %4695 = vperm.xlu0 %4694, %v4522
        %v4696 = vpop.permute.xlu0 %4695
        %v4698 = vadd.f32 %v4650, %v4661
        %v4699 = vadd.f32 %v4651, %v4666
        %v4700 = vadd.f32 %v4652, %v4671
        %v4701 = vadd.f32 %v4653, %v4676
        %v4702 = vadd.f32 %v4654, %v4681
        %v4703 = vadd.f32 %v4655, %v4686
        %v4704 = vadd.f32 %v4656, %v4691
        %v4705 = vadd.f32 %v4657, %v4696
        %v4706 = vld [vmem:[%s12] sm:$0xf]
        %v4707 = vld [vmem:[%s12 + $0x4] sm:$0xf]
        %v4708 = vld [vmem:[%s12 + $0x8] sm:$0xf]
        %v4709 = vld [vmem:[%s12 + $0xc] sm:$0xf]
        %v4710 = vld [vmem:[%s12 + $0x10] sm:$0xf]
        %v4711 = vld [vmem:[%s12 + $0x14] sm:$0xf]
        %v4712 = vld [vmem:[%s12 + $0x18] sm:$0xf]
        %v4713 = vld [vmem:[%s12 + $0x1c] sm:$0xf]
        %v4714 = vld [vmem:[%s12 + $0x20] sm:$0xf]
        %v4715 = vld [vmem:[%s12 + $0x24] sm:$0xf]
        %v4716 = vld [vmem:[%s12 + $0x28] sm:$0xf]
        %v4717 = vld [vmem:[%s12 + $0x2c] sm:$0xf]
        %v4718 = vld [vmem:[%s12 + $0x30] sm:$0xf]
        %v4719 = vld [vmem:[%s12 + $0x34] sm:$0xf]
        %v4720 = vld [vmem:[%s12 + $0x38] sm:$0xf]
        %v4721 = vld [vmem:[%s12 + $0x3c] sm:$0xf]
        %v4722 = vpack.c.bf16 %v4699, %v4698
        %v4723 = vpack.c.bf16 %v4701, %v4700
        %v4724 = vpack.c.bf16 %v4703, %v4702
        %v4725 = vpack.c.bf16 %v4705, %v4704
        %v4726 = vld [vmem:[%s13] sm:$0xff]
        %v4727 = vld [vmem:[%s13 + $0x8] sm:$0xff]
        %v4728 = vld [vmem:[%s13 + $0x10] sm:$0xff]
        %v4729 = vld [vmem:[%s13 + $0x18] sm:$0xff]
        %v4730 = vld [vmem:[%s13 + $0x20] sm:$0xff]
        %v4731 = vld [vmem:[%s13 + $0x28] sm:$0xff]
        %v4732 = vld [vmem:[%s13 + $0x30] sm:$0xff]
        %v4733 = vld [vmem:[%s13 + $0x38] sm:$0xff]
        %v4734 = vld [vmem:[%s13 + $0x40] sm:$0xff]
        %v4735 = vld [vmem:[%s13 + $0x48] sm:$0xff]
        %v4736 = vld [vmem:[%s13 + $0x50] sm:$0xff]
        %v4737 = vld [vmem:[%s13 + $0x58] sm:$0xff]
        %v4738 = vld [vmem:[%s13 + $0x60] sm:$0xff]
        %v4739 = vld [vmem:[%s13 + $0x68] sm:$0xff]
        %v4740 = vld [vmem:[%s13 + $0x70] sm:$0xff]
        %v4741 = vld [vmem:[%s13 + $0x78] sm:$0xff]
        %4743 = vset.pattern.permute.xlu0 0
        %4744 = vperm.xlu0 %4743, %v4726
        %v4745 = vpop.permute.xlu0 %4744
        %4748 = vset.pattern.permute.xlu0 0
        %4749 = vperm.xlu0 %4748, %v4727
        %v4750 = vpop.permute.xlu0 %4749
        %4753 = vset.pattern.permute.xlu0 0
        %4754 = vperm.xlu0 %4753, %v4728
        %v4755 = vpop.permute.xlu0 %4754
        %4758 = vset.pattern.permute.xlu0 0
        %4759 = vperm.xlu0 %4758, %v4729
        %v4760 = vpop.permute.xlu0 %4759
        %4763 = vset.pattern.permute.xlu0 0
        %4764 = vperm.xlu0 %4763, %v4730
        %v4765 = vpop.permute.xlu0 %4764
        %4768 = vset.pattern.permute.xlu0 0
        %4769 = vperm.xlu0 %4768, %v4731
        %v4770 = vpop.permute.xlu0 %4769
        %4773 = vset.pattern.permute.xlu0 0
        %4774 = vperm.xlu0 %4773, %v4732
        %v4775 = vpop.permute.xlu0 %4774
        %4778 = vset.pattern.permute.xlu0 0
        %4779 = vperm.xlu0 %4778, %v4733
        %v4780 = vpop.permute.xlu0 %4779
        %4783 = vset.pattern.permute.xlu0 0
        %4784 = vperm.xlu0 %4783, %v4734
        %v4785 = vpop.permute.xlu0 %4784
        %4788 = vset.pattern.permute.xlu0 0
        %4789 = vperm.xlu0 %4788, %v4735
        %v4790 = vpop.permute.xlu0 %4789
        %4793 = vset.pattern.permute.xlu0 0
        %4794 = vperm.xlu0 %4793, %v4736
        %v4795 = vpop.permute.xlu0 %4794
        %4798 = vset.pattern.permute.xlu0 0
        %4799 = vperm.xlu0 %4798, %v4737
        %v4800 = vpop.permute.xlu0 %4799
        %4803 = vset.pattern.permute.xlu0 0
        %4804 = vperm.xlu0 %4803, %v4738
        %v4805 = vpop.permute.xlu0 %4804
        %4808 = vset.pattern.permute.xlu0 0
        %4809 = vperm.xlu0 %4808, %v4739
        %v4810 = vpop.permute.xlu0 %4809
        %4813 = vset.pattern.permute.xlu0 0
        %4814 = vperm.xlu0 %4813, %v4740
        %v4815 = vpop.permute.xlu0 %4814
        %4818 = vset.pattern.permute.xlu0 0
        %4819 = vperm.xlu0 %4818, %v4741
        %v4820 = vpop.permute.xlu0 %4819
        %v4838 = vunpack.c.l.b16 %v4706
        %v4839 = vunpack.c.l.b16 %v4707
        %v4840 = vunpack.c.l.b16 %v4708
        %v4841 = vunpack.c.l.b16 %v4709
        %v4842 = vunpack.c.l.b16 %v4710
        %v4843 = vunpack.c.l.b16 %v4711
        %v4844 = vunpack.c.l.b16 %v4712
        %v4845 = vunpack.c.l.b16 %v4713
        %v4846 = vunpack.c.l.b16 %v4714
        %v4847 = vunpack.c.l.b16 %v4715
        %v4848 = vunpack.c.l.b16 %v4716
        %v4849 = vunpack.c.l.b16 %v4717
        %v4850 = vunpack.c.l.b16 %v4718
        %v4851 = vunpack.c.l.b16 %v4719
        %v4852 = vunpack.c.l.b16 %v4720
        %v4853 = vunpack.c.l.b16 %v4721
        %v4854 = vpack.c.b16 %v4839, %v4838
        %v4855 = vpack.c.b16 %v4841, %v4840
        %v4856 = vpack.c.b16 %v4843, %v4842
        %v4857 = vpack.c.b16 %v4845, %v4844
        %v4858 = vpack.c.b16 %v4847, %v4846
        %v4859 = vpack.c.b16 %v4849, %v4848
        %v4860 = vpack.c.b16 %v4851, %v4850
        %v4861 = vpack.c.b16 %v4853, %v4852
        %v4863 = vsel %vm2684, %v4854, 0
        %v4866 = vsel %vm2684, %v4855, 0
        %v4869 = vsel %vm2684, %v4856, 0
        %v4872 = vsel %vm2684, %v4857, 0
        %v4875 = vsel %vm2684, %v4858, 0
        %v4878 = vsel %vm2684, %v4859, 0
        %v4881 = vsel %vm2684, %v4860, 0
        %v4884 = vsel %vm2684, %v4861, 0
        %4886 = vmatpush.bf16.msra.mxu0 0
        %4887 = vmatpush.bf16.msra.mxu0 0
        %4888 = vmatpush.bf16.msra.mxu0 0
        %4889 = vmatpush.bf16.msra.mxu0 0
        %4890 = vmatpush.bf16.msra.mxu0 %v4725
        %4891 = vmatpush.bf16.msra.mxu0 %v4724
        %4892 = vmatpush.bf16.msra.mxu0 %v4723
        %4893 = vmatpush.bf16.msra.mxu0 %v4722
        %4894 = vmatmul.bf16.gmra.mxu0 %v4863
        %v4895 = vpop.f32.mrf.mxu0
        %v4896 = vadd.f32 %v4745, %v4895
        %v4897 = vpop.f32.mrf.mxu0
        %v4898 = vadd.f32 %v4750, %v4897
        %4899 = vmatmul.bf16.gmra.mxu0 %v4866
        %v4900 = vpop.f32.mrf.mxu0
        %v4901 = vadd.f32 %v4755, %v4900
        %v4902 = vpop.f32.mrf.mxu0
        %v4903 = vadd.f32 %v4760, %v4902
        %4904 = vmatmul.bf16.gmra.mxu0 %v4869
        %v4905 = vpop.f32.mrf.mxu0
        %v4906 = vadd.f32 %v4765, %v4905
        %v4907 = vpop.f32.mrf.mxu0
        %v4908 = vadd.f32 %v4770, %v4907
        %4909 = vmatmul.bf16.gmra.mxu0 %v4872
        %v4910 = vpop.f32.mrf.mxu0
        %v4911 = vadd.f32 %v4775, %v4910
        %v4912 = vpop.f32.mrf.mxu0
        %v4913 = vadd.f32 %v4780, %v4912
        %4914 = vmatmul.bf16.gmra.mxu0 %v4875
        %v4915 = vpop.f32.mrf.mxu0
        %v4916 = vadd.f32 %v4785, %v4915
        %v4917 = vpop.f32.mrf.mxu0
        %v4918 = vadd.f32 %v4790, %v4917
        %4919 = vmatmul.bf16.gmra.mxu0 %v4878
        %v4920 = vpop.f32.mrf.mxu0
        %v4921 = vadd.f32 %v4795, %v4920
        %v4922 = vpop.f32.mrf.mxu0
        %v4923 = vadd.f32 %v4800, %v4922
        %4924 = vmatmul.bf16.gmra.mxu0 %v4881
        %v4925 = vpop.f32.mrf.mxu0
        %v4926 = vadd.f32 %v4805, %v4925
        %v4927 = vpop.f32.mrf.mxu0
        %v4928 = vadd.f32 %v4810, %v4927
        %4929 = vmatmul.bf16.gmra.mxu0 %v4884
        %v4930 = vpop.f32.mrf.mxu0
        %v4931 = vadd.f32 %v4815, %v4930
        %v4932 = vpop.f32.mrf.mxu0
        %v4933 = vadd.f32 %v4820, %v4932
        %4934 = vdwg.mxu0
        %v4935 = vmax.f32 %v4896, 0.0
        %v4936 = vmax.f32 %v4898, 0.0
        %v4937 = vmax.f32 %v4901, 0.0
        %v4938 = vmax.f32 %v4903, 0.0
        %v4939 = vmax.f32 %v4906, 0.0
        %v4940 = vmax.f32 %v4908, 0.0
        %v4941 = vmax.f32 %v4911, 0.0
        %v4942 = vmax.f32 %v4913, 0.0
        %v4943 = vmax.f32 %v4916, 0.0
        %v4944 = vmax.f32 %v4918, 0.0
        %v4945 = vmax.f32 %v4921, 0.0
        %v4946 = vmax.f32 %v4923, 0.0
        %v4947 = vmax.f32 %v4926, 0.0
        %v4948 = vmax.f32 %v4928, 0.0
        %v4949 = vmax.f32 %v4931, 0.0
        %v4950 = vmax.f32 %v4933, 0.0
        %v4951 = vld [vmem:[%s14] sm:$0xf]
        %v4952 = vld [vmem:[%s14 + $0x4] sm:$0xf]
        %v4953 = vld [vmem:[%s14 + $0x8] sm:$0xf]
        %v4954 = vld [vmem:[%s14 + $0xc] sm:$0xf]
        %v4955 = vld [vmem:[%s14 + $0x10] sm:$0xf]
        %v4956 = vld [vmem:[%s14 + $0x14] sm:$0xf]
        %v4957 = vld [vmem:[%s14 + $0x18] sm:$0xf]
        %v4958 = vld [vmem:[%s14 + $0x1c] sm:$0xf]
        %v4959 = vpack.c.bf16 %v4936, %v4935
        %v4960 = vpack.c.bf16 %v4938, %v4937
        %v4961 = vpack.c.bf16 %v4940, %v4939
        %v4962 = vpack.c.bf16 %v4942, %v4941
        %v4963 = vpack.c.bf16 %v4944, %v4943
        %v4964 = vpack.c.bf16 %v4946, %v4945
        %v4965 = vpack.c.bf16 %v4948, %v4947
        %v4966 = vpack.c.bf16 %v4950, %v4949
        %v4967 = vld [vmem:[%s15] sm:$0xff]
        %v4968 = vld [vmem:[%s15 + $0x8] sm:$0xff]
        %v4969 = vld [vmem:[%s15 + $0x10] sm:$0xff]
        %v4970 = vld [vmem:[%s15 + $0x18] sm:$0xff]
        %v4971 = vld [vmem:[%s15 + $0x20] sm:$0xff]
        %v4972 = vld [vmem:[%s15 + $0x28] sm:$0xff]
        %v4973 = vld [vmem:[%s15 + $0x30] sm:$0xff]
        %v4974 = vld [vmem:[%s15 + $0x38] sm:$0xff]
        %4976 = vset.pattern.permute.xlu0 0
        %4977 = vperm.xlu0 %4976, %v4967
        %v4978 = vpop.permute.xlu0 %4977
        %4981 = vset.pattern.permute.xlu0 0
        %4982 = vperm.xlu0 %4981, %v4968
        %v4983 = vpop.permute.xlu0 %4982
        %4986 = vset.pattern.permute.xlu0 0
        %4987 = vperm.xlu0 %4986, %v4969
        %v4988 = vpop.permute.xlu0 %4987
        %4991 = vset.pattern.permute.xlu0 0
        %4992 = vperm.xlu0 %4991, %v4970
        %v4993 = vpop.permute.xlu0 %4992
        %4996 = vset.pattern.permute.xlu0 0
        %4997 = vperm.xlu0 %4996, %v4971
        %v4998 = vpop.permute.xlu0 %4997
        %5001 = vset.pattern.permute.xlu0 0
        %5002 = vperm.xlu0 %5001, %v4972
        %v5003 = vpop.permute.xlu0 %5002
        %5006 = vset.pattern.permute.xlu0 0
        %5007 = vperm.xlu0 %5006, %v4973
        %v5008 = vpop.permute.xlu0 %5007
        %5011 = vset.pattern.permute.xlu0 0
        %5012 = vperm.xlu0 %5011, %v4974
        %v5013 = vpop.permute.xlu0 %5012
        %v5023 = vunpack.c.l.b16 %v4951
        %v5024 = vunpack.c.l.b16 %v4952
        %v5025 = vunpack.c.l.b16 %v4953
        %v5026 = vunpack.c.l.b16 %v4954
        %v5027 = vunpack.c.l.b16 %v4955
        %v5028 = vunpack.c.l.b16 %v4956
        %v5029 = vunpack.c.l.b16 %v4957
        %v5030 = vunpack.c.l.b16 %v4958
        %v5031 = vpack.c.b16 %v5024, %v5023
        %v5032 = vpack.c.b16 %v5026, %v5025
        %v5033 = vpack.c.b16 %v5028, %v5027
        %v5034 = vpack.c.b16 %v5030, %v5029
        %5039 = vmatpush.bf16.msra.mxu0 %v4966
        %5040 = vmatpush.bf16.msra.mxu0 %v4965
        %5041 = vmatpush.bf16.msra.mxu0 %v4964
        %5042 = vmatpush.bf16.msra.mxu0 %v4963
        %5043 = vmatpush.bf16.msra.mxu0 %v4962
        %5044 = vmatpush.bf16.msra.mxu0 %v4961
        %5045 = vmatpush.bf16.msra.mxu0 %v4960
        %5046 = vmatpush.bf16.msra.mxu0 %v4959
        %5047 = vmatmul.bf16.gmra.mxu0 %v5031
        %v5048 = vpop.f32.mrf.mxu0
        %v5049 = vadd.f32 %v4978, %v5048
        %v5050 = vpop.f32.mrf.mxu0
        %v5051 = vadd.f32 %v4983, %v5050
        %5052 = vmatmul.bf16.gmra.mxu0 %v5032
        %v5053 = vpop.f32.mrf.mxu0
        %v5054 = vadd.f32 %v4988, %v5053
        %v5055 = vpop.f32.mrf.mxu0
        %v5056 = vadd.f32 %v4993, %v5055
        %5057 = vmatmul.bf16.gmra.mxu0 %v5033
        %v5058 = vpop.f32.mrf.mxu0
        %v5059 = vadd.f32 %v4998, %v5058
        %v5060 = vpop.f32.mrf.mxu0
        %v5061 = vadd.f32 %v5003, %v5060
        %5062 = vmatmul.bf16.gmra.mxu0 %v5034
        %v5063 = vpop.f32.mrf.mxu0
        %v5064 = vadd.f32 %v5008, %v5063
        %v5065 = vpop.f32.mrf.mxu0
        %v5066 = vadd.f32 %v5013, %v5065
        %5067 = vdwg.mxu0
        %v5068 = vadd.f32 %v4698, %v5049
        %v5069 = vadd.f32 %v4699, %v5051
        %v5070 = vadd.f32 %v4700, %v5054
        %v5071 = vadd.f32 %v4701, %v5056
        %v5072 = vadd.f32 %v4702, %v5059
        %v5073 = vadd.f32 %v4703, %v5061
        %v5074 = vadd.f32 %v4704, %v5064
        %v5075 = vadd.f32 %v4705, %v5066
        %v5076 = vsel %vm4523, %v5068, 0.0
        %v5077 = vsel %vm4523, %v5069, 0.0
        %v5078 = vadd.f32 %v5076, %v5077
        %v5079 = vsel %vm4523, %v5070, 0.0
        %v5080 = vadd.f32 %v5078, %v5079
        %v5081 = vsel %vm4523, %v5071, 0.0
        %v5082 = vadd.f32 %v5080, %v5081
        %v5083 = vsel %vm4523, %v5072, 0.0
        %v5084 = vadd.f32 %v5082, %v5083
        %v5085 = vsel %vm4523, %v5073, 0.0
        %v5086 = vadd.f32 %v5084, %v5085
        %v5087 = vsel %vm4523, %v5074, 0.0
        %v5088 = vadd.f32 %v5086, %v5087
        %v5089 = vsel %vm4523, %v5075, 0.0
        %v5090 = vadd.f32 %v5088, %v5089
        %v5091 = vrot.slane %v5090, 4
        %v5092 = vadd.f32 %v5090, %v5091
        %v5093 = vrot.slane %v5092, 2
        %v5094 = vadd.f32 %v5092, %v5093
        %v5095 = vrot.slane %v5094, 1
        %v5096 = vadd.f32 %v5094, %v5095
        %v5097 = vmul.f32 %v5096, %v4551
        %v5098 = vsub.f32 %v5068, %v5097
        %v5099 = vsub.f32 %v5069, %v5097
        %v5100 = vsub.f32 %v5070, %v5097
        %v5101 = vsub.f32 %v5071, %v5097
        %v5102 = vsub.f32 %v5072, %v5097
        %v5103 = vsub.f32 %v5073, %v5097
        %v5104 = vsub.f32 %v5074, %v5097
        %v5105 = vsub.f32 %v5075, %v5097
        %v5106 = vmul.f32 %v5098, %v5098
        %v5107 = vmul.f32 %v5099, %v5099
        %v5108 = vmul.f32 %v5100, %v5100
        %v5109 = vmul.f32 %v5101, %v5101
        %v5110 = vmul.f32 %v5102, %v5102
        %v5111 = vmul.f32 %v5103, %v5103
        %v5112 = vmul.f32 %v5104, %v5104
        %v5113 = vmul.f32 %v5105, %v5105
        %v5114 = vsel %vm4523, %v5106, 0.0
        %v5115 = vsel %vm4523, %v5107, 0.0
        %v5116 = vadd.f32 %v5114, %v5115
        %v5117 = vsel %vm4523, %v5108, 0.0
        %v5118 = vadd.f32 %v5116, %v5117
        %v5119 = vsel %vm4523, %v5109, 0.0
        %v5120 = vadd.f32 %v5118, %v5119
        %v5121 = vsel %vm4523, %v5110, 0.0
        %v5122 = vadd.f32 %v5120, %v5121
        %v5123 = vsel %vm4523, %v5111, 0.0
        %v5124 = vadd.f32 %v5122, %v5123
        %v5125 = vsel %vm4523, %v5112, 0.0
        %v5126 = vadd.f32 %v5124, %v5125
        %v5127 = vsel %vm4523, %v5113, 0.0
        %v5128 = vadd.f32 %v5126, %v5127
        %v5129 = vrot.slane %v5128, 4
        %v5130 = vadd.f32 %v5128, %v5129
        %v5131 = vrot.slane %v5130, 2
        %v5132 = vadd.f32 %v5130, %v5131
        %v5133 = vrot.slane %v5132, 1
        %v5134 = vadd.f32 %v5132, %v5133
        %v5135 = vmul.f32 %v5134, %v4551
        %v5136 = vadd.f32 %v5135, 1e-05
        %v5137 = vrsqrt.pop %v5136
        %v5138 = vmul.f32 %v5137, %v5136
        %v5139 = vmul.f32 %v5138, %v5137
        %v5140 = vmul.f32 0.5, %v5139
        %v5141 = vsub.f32 1.5, %v5140
        %v5142 = vmul.f32 %v5137, %v5141
        %vm5143 = vweird.f32 %v5136
        %vm5144 = vweird.f32 %v5137
        %vm5145 = vmor %vm5143, %vm5144
        %v5146 = vsel %vm5145, %v5137, %v5142
        %v5147 = vmul.f32 %v5098, %v5146
        %v5148 = vmul.f32 %v5099, %v5146
        %v5149 = vmul.f32 %v5100, %v5146
        %v5150 = vmul.f32 %v5101, %v5146
        %v5151 = vmul.f32 %v5102, %v5146
        %v5152 = vmul.f32 %v5103, %v5146
        %v5153 = vmul.f32 %v5104, %v5146
        %v5154 = vmul.f32 %v5105, %v5146
        %5155 = vset.pattern.permute.xlu0 2
        %5156 = vperm.xlu0 %5155, %v4507
        %v5157 = vpop.permute.xlu0 %5156
        %5159 = vset.pattern.permute.xlu0 2
        %5160 = vperm.xlu0 %5159, %v4508
        %v5161 = vpop.permute.xlu0 %5160
        %5163 = vset.pattern.permute.xlu0 2
        %5164 = vperm.xlu0 %5163, %v4509
        %v5165 = vpop.permute.xlu0 %5164
        %5167 = vset.pattern.permute.xlu0 2
        %5168 = vperm.xlu0 %5167, %v4510
        %v5169 = vpop.permute.xlu0 %5168
        %5171 = vset.pattern.permute.xlu0 2
        %5172 = vperm.xlu0 %5171, %v4511
        %v5173 = vpop.permute.xlu0 %5172
        %5175 = vset.pattern.permute.xlu0 2
        %5176 = vperm.xlu0 %5175, %v4512
        %v5177 = vpop.permute.xlu0 %5176
        %5179 = vset.pattern.permute.xlu0 2
        %5180 = vperm.xlu0 %5179, %v4513
        %v5181 = vpop.permute.xlu0 %5180
        %5183 = vset.pattern.permute.xlu0 2
        %5184 = vperm.xlu0 %5183, %v4514
        %v5185 = vpop.permute.xlu0 %5184
        %v5187 = vmul.f32 %v5147, %v5157
        %v5188 = vmul.f32 %v5148, %v5161
        %v5189 = vmul.f32 %v5149, %v5165
        %v5190 = vmul.f32 %v5150, %v5169
        %v5191 = vmul.f32 %v5151, %v5173
        %v5192 = vmul.f32 %v5152, %v5177
        %v5193 = vmul.f32 %v5153, %v5181
        %v5194 = vmul.f32 %v5154, %v5185
        %5195 = vset.pattern.permute.xlu0 2
        %5196 = vperm.xlu0 %5195, %v4515
        %v5197 = vpop.permute.xlu0 %5196
        %5199 = vset.pattern.permute.xlu0 2
        %5200 = vperm.xlu0 %5199, %v4516
        %v5201 = vpop.permute.xlu0 %5200
        %5203 = vset.pattern.permute.xlu0 2
        %5204 = vperm.xlu0 %5203, %v4517
        %v5205 = vpop.permute.xlu0 %5204
        %5207 = vset.pattern.permute.xlu0 2
        %5208 = vperm.xlu0 %5207, %v4518
        %v5209 = vpop.permute.xlu0 %5208
        %5211 = vset.pattern.permute.xlu0 2
        %5212 = vperm.xlu0 %5211, %v4519
        %v5213 = vpop.permute.xlu0 %5212
        %5215 = vset.pattern.permute.xlu0 2
        %5216 = vperm.xlu0 %5215, %v4520
        %v5217 = vpop.permute.xlu0 %5216
        %5219 = vset.pattern.permute.xlu0 2
        %5220 = vperm.xlu0 %5219, %v4521
        %v5221 = vpop.permute.xlu0 %5220
        %5223 = vset.pattern.permute.xlu0 2
        %5224 = vperm.xlu0 %5223, %v4522
        %v5225 = vpop.permute.xlu0 %5224
        %v5227 = vadd.f32 %v5187, %v5197
        %v5228 = vadd.f32 %v5188, %v5201
        %v5229 = vadd.f32 %v5189, %v5205
        %v5230 = vadd.f32 %v5190, %v5209
        %v5231 = vadd.f32 %v5191, %v5213
        %v5232 = vadd.f32 %v5192, %v5217
        %v5233 = vadd.f32 %v5193, %v5221
        %v5234 = vadd.f32 %v5194, %v5225
        %5235 = vst.msk [vmem:[%s679] sm:$0xff] %vm4523, %v5227
        %5236 = vst.msk [vmem:[%s679 + $0x8] sm:$0xff] %vm4523, %v5228
        %5237 = vst.msk [vmem:[%s679 + $0x10] sm:$0xff] %vm4523, %v5229
        %5238 = vst.msk [vmem:[%s679 + $0x18] sm:$0xff] %vm4523, %v5230
        %5239 = vst.msk [vmem:[%s679 + $0x20] sm:$0xff] %vm4523, %v5231
        %5240 = vst.msk [vmem:[%s679 + $0x28] sm:$0xff] %vm4523, %v5232
        %5241 = vst.msk [vmem:[%s679 + $0x30] sm:$0xff] %vm4523, %v5233
        %5242 = vst.msk [vmem:[%s679 + $0x38] sm:$0xff] %vm4523, %v5234
      $region100: #{tpu_custom_call.1} parent=91 // pred_fallthru
        _
      %p5243 = scmp.lt.s32.totalorder %s33, 1
      %s5244 = scalar_select %p5243, %s33, 1
      %s5245 = smul.addr %s5244, 8
      %s5246 = smul.addr %s5245, 8
      %s5247 = scalar_lea.vmem %s18, %s5246
      // Predicated region
      $region101: #{tpu_custom_call.1} parent=91 // pred_check
        %p5248 = pneg %p461
      $region102: #{tpu_custom_call.1} parent=91 // pred_check_branch
        %5250 = sbr.rel (%p5248) target = $region104
      $region103: #{tpu_custom_call.1} parent=91 // pred_region
        _
      $region104: #{tpu_custom_call.1} parent=91 // pred_fallthru
        _
    $region92: #{tpu_custom_call.1} parent=5 // pred_fallthru
      _
    %p5251 = scmp.le.s32.totalorder 2, %s24
    // Predicated region
    $region105: #{tpu_custom_call.1} parent=5 // pred_check
      %p5252 = pneg %p5251
    $region106: #{tpu_custom_call.1} parent=5 // pred_check_branch
      %5254 = sbr.rel (%p5252) target = $region108
    $region107: #{tpu_custom_call.1} parent=5 // pred_region
      %s5255 = ssub.s32 %s24, 2
      // Predicated region
      $region109: #{tpu_custom_call.1} parent=107 // pred_check
        %p5256 = pneg %p467
      $region110: #{tpu_custom_call.1} parent=107 // pred_check_branch
        %5258 = sbr.rel (%p5256) target = $region112
      $region111: #{tpu_custom_call.1} parent=107 // pred_region
        %p5259 = scmp.lt.s32.totalorder %s35, 1
        %s5260 = scalar_select %p5259, %s35, 1
        %s5261 = smul.addr %s5260, 8
        %s5262 = smul.addr %s5261, 8
        %s5263 = scalar_lea.vmem %s18, %s5262
      $region112: #{tpu_custom_call.1} parent=107 // pred_fallthru
        _
    $region108: #{tpu_custom_call.1} parent=5 // pred_fallthru
      _
  $region6: #{tpu_custom_call.1} parent=0 // loop_footer
    %s28 = sadd.s32 1, %s24
  $region7: #{tpu_custom_call.1} parent=0 // loop_footer_branch
    %23 = sbr.rel target = $region3
  $region8: #{tpu_custom_call.1} parent=0 // loop_exit
    _

</llo_original>
